<compile_context>
chip_gen: v7x
topology: tpu7x:2x2x1
jax: 0.10.0
libtpu: 0.0.40
codegen_flags: <defaults>
</compile_context>

<pallas_src>
import numpy as np
import jax
import jax.numpy as jnp
from jax import lax
from jax.experimental import pallas as pl
from jax.experimental.pallas import tpu as pltpu

IN_SIZE = 512
OUT_SIZE = 1024
ROW_TILE = 256          # output-row tile (4 tiles / image)
SAMPLE_NUM = 3
BLOCK_SIZE = 8


# ----------------------------------------------------------------------------
# Parameter setup (glue): dense 1-D bicubic interpolation matrix, identical to
# torch.nn.functional.interpolate(mode='bicubic', align_corners=False).
# ----------------------------------------------------------------------------
def bicubic_matrix(in_size, out_size, a=-0.75):
    scale = in_size / out_size
    j = np.arange(out_size)
    x = (j + 0.5) * scale - 0.5
    x0 = np.floor(x).astype(np.int64)

    def cubic(d):
        d = np.abs(d)
        return np.where(
            d <= 1.0,
            (a + 2.0) * d ** 3 - (a + 3.0) * d ** 2 + 1.0,
            np.where(d < 2.0,
                     a * d ** 3 - 5.0 * a * d ** 2 + 8.0 * a * d - 4.0 * a,
                     0.0),
        )

    A = np.zeros((out_size, in_size), dtype=np.float32)
    for k in range(-1, 3):
        idx = np.clip(x0 + k, 0, in_size - 1)       # border replication (clamp)
        w = cubic(x - (x0 + k)).astype(np.float32)
        np.add.at(A, (j, idx), w)                   # clamped taps accumulate
    return A


# Built once at import time; baked as constants under jit.
_A_F32_NP = bicubic_matrix(IN_SIZE, OUT_SIZE)                 # (1024, 512) f32
_A_BF16 = jnp.asarray(_A_F32_NP, dtype=jnp.bfloat16)          # (1024, 512)
_AT_BF16 = jnp.asarray(_A_F32_NP.T, dtype=jnp.bfloat16)       # (512, 1024)


# ----------------------------------------------------------------------------
# Pallas kernel: separable bicubic 2x upsample as two MXU matmuls per
# (image, output-row-tile). bf16 operands, f32 accumulation, explicit A^T so
# both dots are plain K-minor contractions (no XLU transpose).
# ----------------------------------------------------------------------------
def _bicubic_kernel(a_ref, at_ref, x_ref, o_ref, tmp_ref):
    # rows: A_tile (TR,512) @ X (512,512) -> (TR,512); f32 acc, bf16 store
    x_bf16 = x_ref[...].astype(jnp.bfloat16)     # in-kernel cast, hidden under MXU
    tmp_ref[...] = jnp.dot(
        a_ref[...], x_bf16,
        preferred_element_type=jnp.float32).astype(jnp.bfloat16)
    # cols: tmp (TR,512) @ A^T (512,1024) -> (TR,1024)
    o_ref[...] = jnp.dot(
        tmp_ref[...], at_ref[...],
        preferred_element_type=jnp.float32).astype(o_ref.dtype)


def bicubic_upsample(x, out_dtype=jnp.float32):
    # x: (N, 512, 512) f32  ->  (N, 1024, 1024) out_dtype
    n = x.shape[0]
    row_tiles = OUT_SIZE // ROW_TILE
    return pl.pallas_call(
        _bicubic_kernel,
        out_shape=jax.ShapeDtypeStruct((n, OUT_SIZE, OUT_SIZE), out_dtype),
        grid_spec=pltpu.PrefetchScalarGridSpec(
            num_scalar_prefetch=0,
            grid=(n, row_tiles),
            in_specs=[
                # A row tile: changes with the row-tile axis only.
                pl.BlockSpec((ROW_TILE, IN_SIZE), lambda i, r: (r, 0)),
                # A^T: constant index_map -> resident, DMA'd once (~1 MiB bf16).
                pl.BlockSpec((IN_SIZE, OUT_SIZE), lambda i, r: (0, 0)),
                # X: constant along the row axis -> stays resident per image.
                pl.BlockSpec((None, IN_SIZE, IN_SIZE), lambda i, r: (i, 0, 0)),
            ],
            out_specs=pl.BlockSpec((None, ROW_TILE, OUT_SIZE),
                                   lambda i, r: (i, r, 0)),
            scratch_shapes=[pltpu.VMEM((ROW_TILE, IN_SIZE), jnp.bfloat16)],
        ),
        compiler_params=pltpu.CompilerParams(
            dimension_semantics=("parallel", "parallel"),
        ),
    )(_A_BF16, _AT_BF16, x)


# ----------------------------------------------------------------------------
# Standardization: tensor is tiny (sample_num * 8 * 8 floats), so a Pallas
# kernel is pure launch/DMA overhead -> plain XLA, two-pass variance.
# ----------------------------------------------------------------------------
def standardize(f):
    # TODO(synk): standardize_numpy is not defined in the reference source;
    # per-sample (x - mean) / std with population variance is assumed.
    m = jnp.mean(f, axis=(-2, -1), keepdims=True)
    c = f - m
    v = jnp.mean(c * c, axis=(-2, -1), keepdims=True)
    return c * lax.rsqrt(v + 1e-8)


# ----------------------------------------------------------------------------
# Glue stand-ins for helpers that the reference source does not define.
# ----------------------------------------------------------------------------
def samples_multi(inputs, sample_num, block_size, pos_noise=True):
    # TODO(synk): samples_multi is not defined in the reference source;
    # deterministic, grid-aligned block extraction is used (pos_noise ignored).
    n, h, w = inputs.shape
    patches = []
    for s in range(sample_num):
        r = (h // (sample_num + 1)) * (s + 1)
        c = (w // (sample_num + 1)) * (s + 1)
        patches.append(inputs[:, r:r + block_size, c:c + block_size])
    return jnp.concatenate(patches, axis=0)  # (n*sample_num, block, block)


def fft_filter(samples):
    # TODO(synk): fft_filter is not defined in the reference source; a
    # log-magnitude FFT spectrum stand-in is used (FFT has no Pallas primitive).
    spec = jnp.fft.fftshift(jnp.fft.fft2(samples), axes=(-2, -1))
    return jnp.log1p(jnp.abs(spec)).astype(jnp.float32)


# ----------------------------------------------------------------------------
# Module-equivalent forward
# ----------------------------------------------------------------------------
@jax.jit
def preprocess_forward(x):
    # mirrors: inputs.reshape(-1, 1, 512, 512) -> bicubic to 1024 ->
    #          reshape(-1, 1024, 1024) -> samples_multi -> fft_filter -> std.
    imgs = x.reshape(-1, IN_SIZE, IN_SIZE).astype(jnp.float32)
    up = bicubic_upsample(imgs)                                  # (-1,1024,1024) f32
    samples = samples_multi(up, SAMPLE_NUM, BLOCK_SIZE, pos_noise=True)
    f = fft_filter(samples)
    f_s = standardize(f)
    return up, samples, f_s


if __name__ == "__main__":
    key = jax.random.PRNGKey(0)
    # The module hard-codes the 512x512 reshape, so the spatial size cannot be
    # shrunk; batch is kept small (2 images).
    x = jax.random.normal(key, (2, 512, 512), dtype=jnp.float32)
    up, samples, f_s = preprocess_forward(x)
    jax.block_until_ready((up, samples, f_s))

    assert up.shape == (2, OUT_SIZE, OUT_SIZE)
    assert samples.shape == (2 * SAMPLE_NUM, BLOCK_SIZE, BLOCK_SIZE)
    assert f_s.shape == samples.shape
    assert bool(jnp.all(jnp.isfinite(up)))

    # Numerics vs an f32 XLA reference of the same separable bicubic
    # (bf16 operands + bf16 intermediate -> not bit-parity; explicit tolerance).
    A_f32 = jnp.asarray(_A_F32_NP)
    ref = jnp.matmul(jnp.matmul(A_f32, x.reshape(-1, IN_SIZE, IN_SIZE)), A_f32.T)
    max_err = float(jnp.max(jnp.abs(up - ref)))
    mean_err = float(jnp.mean(jnp.abs(up - ref)))
    assert max_err < 0.3 and mean_err < 0.02, (max_err, mean_err)

    print("KERNEL_OK")
</pallas_src>

<mosaic_0001>
module attributes {stable_mosaic.version = 11 : i64} {
  func.func @_bicubic_kernel(%arg0: i32, %arg1: i32, %arg2: memref<256x512xbf16, #tpu.memory_space<vmem>>, %arg3: memref<512x1024xbf16, #tpu.memory_space<vmem>>, %arg4: memref<1x512x512xf32, #tpu.memory_space<vmem>>, %arg5: memref<1x256x1024xf32, #tpu.memory_space<vmem>>, %arg6: memref<256x512xbf16, #tpu.memory_space<vmem>>) attributes {dimension_semantics = [#tpu.dimension_semantics<parallel>, #tpu.dimension_semantics<parallel>], iteration_bounds = array<i64: 2, 4>, scalar_prefetch = 0 : i64, scratch_operands = 1 : i64, tpu.core_type = #tpu.core_type<tc>, window_params = [{transform_indices = @transform_0, window_bounds = array<i64: 256, 512>}, {pipeline_mode = #tpu.pipeline_mode<synchronous>, transform_indices = @transform_1, window_bounds = array<i64: 512, 1024>}, {transform_indices = @transform_2, window_bounds = array<i64: 1, 512, 512>}, {transform_indices = @transform_3, window_bounds = array<i64: 1, 256, 1024>}]} {
    %c0 = arith.constant 0 : index
    %c0_0 = arith.constant 0 : index
    %c0_1 = arith.constant 0 : index
    %0 = vector.load %arg4[%c0, %c0_0, %c0_1] : memref<1x512x512xf32, #tpu.memory_space<vmem>>, vector<1x512x512xf32>
    %1 = vector.shape_cast %0 : vector<1x512x512xf32> to vector<512x512xf32>
    %2 = arith.truncf %1 : vector<512x512xf32> to vector<512x512xbf16>
    %c0_2 = arith.constant 0 : index
    %c0_3 = arith.constant 0 : index
    %3 = vector.load %arg2[%c0_2, %c0_3] : memref<256x512xbf16, #tpu.memory_space<vmem>>, vector<256x512xbf16>
    %cst = arith.constant dense<0.000000e+00> : vector<256x512xf32>
    %4 = tpu.matmul %3, %2, %cst {dimension_numbers = #tpu.dot_dimension_numbers<[1], [0], [0], [1], [0, 0, 1, 1], [], []>} : vector<256x512xbf16>, vector<512x512xbf16>, vector<256x512xf32> -> vector<256x512xf32>
    %5 = arith.truncf %4 : vector<256x512xf32> to vector<256x512xbf16>
    %c0_4 = arith.constant 0 : index
    %c0_5 = arith.constant 0 : index
    %6 = vector.load %arg6[%c0_4, %c0_5] : memref<256x512xbf16, #tpu.memory_space<vmem>>, vector<256x512xbf16>
    tpu.vector_store %arg6[%c0_4, %c0_5], %5 {strides = array<i32>} : memref<256x512xbf16, #tpu.memory_space<vmem>>, vector<256x512xbf16>,
    %c0_6 = arith.constant 0 : index
    %c0_7 = arith.constant 0 : index
    %7 = vector.load %arg6[%c0_6, %c0_7] : memref<256x512xbf16, #tpu.memory_space<vmem>>, vector<256x512xbf16>
    %c0_8 = arith.constant 0 : index
    %c0_9 = arith.constant 0 : index
    %8 = vector.load %arg3[%c0_8, %c0_9] : memref<512x1024xbf16, #tpu.memory_space<vmem>>, vector<512x1024xbf16>
    %cst_10 = arith.constant dense<0.000000e+00> : vector<256x1024xf32>
    %9 = tpu.matmul %7, %8, %cst_10 {dimension_numbers = #tpu.dot_dimension_numbers<[1], [0], [0], [1], [0, 0, 1, 1], [], []>} : vector<256x512xbf16>, vector<512x1024xbf16>, vector<256x1024xf32> -> vector<256x1024xf32>
    %c0_11 = arith.constant 0 : index
    %c0_12 = arith.constant 0 : index
    %c0_13 = arith.constant 0 : index
    %10 = vector.load %arg5[%c0_11, %c0_12, %c0_13] : memref<1x256x1024xf32, #tpu.memory_space<vmem>>, vector<1x256x1024xf32>
    %11 = vector.shape_cast %10 : vector<1x256x1024xf32> to vector<256x1024xf32>
    %12 = vector.shape_cast %9 : vector<256x1024xf32> to vector<1x256x1024xf32>
    tpu.vector_store %arg5[%c0_11, %c0_12, %c0_13], %12 {strides = array<i32>} : memref<1x256x1024xf32, #tpu.memory_space<vmem>>, vector<1x256x1024xf32>,
    return
  }
  func.func @transform_0(%arg0: i32, %arg1: i32) -> (i32, i32) {
    %c0_i32 = arith.constant 0 : i32
    %c0_i32_0 = arith.constant 0 : i32
    return %arg1, %c0_i32 : i32, i32
  }
  func.func @transform_1(%arg0: i32, %arg1: i32) -> (i32, i32) {
    %c0_i32 = arith.constant 0 : i32
    %c0_i32_0 = arith.constant 0 : i32
    %c0_i32_1 = arith.constant 0 : i32
    return %c0_i32, %c0_i32_0 : i32, i32
  }
  func.func @transform_2(%arg0: i32, %arg1: i32) -> (i32, i32, i32) {
    %c0_i32 = arith.constant 0 : i32
    %c0_i32_0 = arith.constant 0 : i32
    %c0_i32_1 = arith.constant 0 : i32
    return %arg0, %c0_i32, %c0_i32_0 : i32, i32, i32
  }
  func.func @transform_3(%arg0: i32, %arg1: i32) -> (i32, i32, i32) {
    %c0_i32 = arith.constant 0 : i32
    %c0_i32_0 = arith.constant 0 : i32
    return %arg0, %arg1, %c0_i32 : i32, i32, i32
  }
}

</mosaic_0001>

<llo_original>
// kernel: preprocess_forward.1
$region0: #{preprocess_forward.1}
  #allocation0 [shape = 'u32[]', space=smem, size = 0x4, offset = 0x4, fixed_abs, tag = 'smem constant byte address 0x4 - core index']
  #allocation1 [shape = 'u32[144,128]{1,0:T(1,128)}', space=vmem, size = 0x12000, scoped, tag = 'internal scratch']
  #allocation2 [shape = 'bf16[256,512]{1,0:T(16,128)(2,1)}', space=vmem, size = 0x40000, scoped, tag = 'scratch operand']
  %s0 = inlined_call_operand.vmem [shape: bf16[1024,512], index: 0, kind: input, shape index: {}]
  %s1 = inlined_call_operand.vmem [shape: bf16[512,1024], index: 1, kind: input, shape index: {}]
  %s2 = inlined_call_operand.hbm [shape: f32[2,512,512], index: 2, kind: input, shape index: {}]
  %s3 = inlined_call_operand.vmem [shape: f32[2,1024,1024], index: 3, kind: output, shape index: {}]
  %s4 = sld [smem:[#allocation0]]
  $region49: #{preprocess_forward.1} parent=0
    _
  %s6 = ssub.s32 1, %s4
  %s7 = scalar_select 0, %s6, %s4
  $region1: #{preprocess_forward.1} parent=0
    #allocation3 [shape = 'u8[2097152]{0}', space=vmem, size = 0x200000, scoped, tag = 'input window, operand 2']
    #allocation4 [shape = 's32[2]{0}', space=sflag, size = 0x8, scoped, tag = 'scoped memory for preprocess_forward.1']
    %8 = vsyncpa [#allocation4], 0
    %s9 = scalar_lea.sflag [#allocation4], 1
    %10 = vsyncpa %s9, 0
    loop: start=0, step=1, limit=10
    $region2: #{preprocess_forward.1} parent=1 // loop_pre_header
      _
    $region3: #{preprocess_forward.1} parent=1 // loop_header
      %s12 = sphi 0, %s16
      %p13 = scmp.ge.s32.totalorder %s12, 10
      %s19 = sphi 0, %s31
      %s20 = sphi 0, %s27
      %s21 = sphi 0, %s19
      %s22 = sphi 0, %s20
      %s23 = sphi 0, %s21
      %s24 = sphi 0, %s22
      %s34 = sphi 0, %s36
      %s37 = sphi 0, %s34
      %s38 = sphi 0, %s37
      %s54 = sphi 0, %s38
      %s58 = sphi 0, %s58
      %s60 = sphi 0, %s58
      %s61 = sphi 0, %s60
      %s75 = sphi 0, %s61
      %s81 = sphi 0, %s83
      %s84 = sphi 0, %s81
      %s85 = sphi 0, %s84
      %s101 = sphi 0, %s85
      %s109 = sphi 0, %s111
      %s112 = sphi 0, %s109
      %s113 = sphi 0, %s112
      %s129 = sphi 0, %s113
    $region4: #{preprocess_forward.1} parent=1 // loop_header_branch
      %15 = sbr.rel (%p13) target = $region8
    $region5: #{preprocess_forward.1} parent=1 // loop_body
      %s17 = ssub.s32 %s12, 1
      %s18 = ssub.s32 %s12, 2
      %s25 = sadd.s32 1, %s20
      %p26 = scmp.ge.s32.totalorder %s25, 4
      %s27 = scalar_select %p26, 0, %s25
      %s28 = sadd.s32 1, %s19
      %s29 = scalar_select %p26, %s28, %s19
      %p30 = scmp.ge.s32.totalorder %s29, 2
      %s31 = scalar_select %p30, 0, %s29
      %s32 = ssub.s32 %s20, %s27
      %p33 = scmp.eq.s32.totalorder %s32, 0
      %s35 = sadd.s32 %s34, 1
      %s36 = scalar_select %p33, %s34, %s35
      %p39 = pneg %p33
      %p40 = scmp.eq.s32.totalorder %s12, 7
      %p41 = por %p39, %p40
      %p42 = scmp.ne.s32.totalorder %s34, %s37
      %p43 = scmp.eq.s32.totalorder %s12, 0
      %p44 = por %p42, %p43
      %p45 = scmp.ne.s32.totalorder %s34, %s37
      %p46 = scmp.eq.s32.totalorder %s17, 7
      %p47 = por %p45, %p46
      %p48 = scmp.ne.s32.totalorder %s37, %s38
      %p49 = scmp.eq.s32.totalorder %s17, 0
      %p50 = por %p48, %p49
      %p51 = scmp.ne.s32.totalorder %s37, %s38
      %p52 = scmp.eq.s32.totalorder %s18, 7
      %p53 = por %p51, %p52
      %p55 = scmp.ne.s32.totalorder %s38, %s54
      %p56 = scmp.eq.s32.totalorder %s18, 0
      %p57 = por %p55, %p56
      %s59 = sadd.s32 %s58, 1
      %p62 = scmp.eq.s32.totalorder %s12, 7
      %p63 = scmp.ne.s32.totalorder %s58, %s60
      %p64 = scmp.eq.s32.totalorder %s12, 0
      %p65 = por %p63, %p64
      %p66 = scmp.ne.s32.totalorder %s58, %s60
      %p67 = scmp.eq.s32.totalorder %s17, 7
      %p68 = por %p66, %p67
      %p69 = scmp.ne.s32.totalorder %s60, %s61
      %p70 = scmp.eq.s32.totalorder %s17, 0
      %p71 = por %p69, %p70
      %p72 = scmp.ne.s32.totalorder %s60, %s61
      %p73 = scmp.eq.s32.totalorder %s18, 7
      %p74 = por %p72, %p73
      %p76 = scmp.ne.s32.totalorder %s61, %s75
      %p77 = scmp.eq.s32.totalorder %s18, 0
      %p78 = por %p76, %p77
      %s79 = ssub.s32 %s19, %s31
      %p80 = scmp.eq.s32.totalorder %s79, 0
      %s82 = sadd.s32 %s81, 1
      %s83 = scalar_select %p80, %s81, %s82
      %p86 = pneg %p80
      %p87 = scmp.eq.s32.totalorder %s12, 7
      %p88 = por %p86, %p87
      %p89 = scmp.ne.s32.totalorder %s81, %s84
      %p90 = scmp.eq.s32.totalorder %s12, 0
      %p91 = por %p89, %p90
      %p92 = scmp.ne.s32.totalorder %s81, %s84
      %p93 = scmp.eq.s32.totalorder %s17, 7
      %p94 = por %p92, %p93
      %p95 = scmp.ne.s32.totalorder %s84, %s85
      %p96 = scmp.eq.s32.totalorder %s17, 0
      %p97 = por %p95, %p96
      %p98 = scmp.ne.s32.totalorder %s84, %s85
      %p99 = scmp.eq.s32.totalorder %s18, 7
      %p100 = por %p98, %p99
      %p102 = scmp.ne.s32.totalorder %s85, %s101
      %p103 = scmp.eq.s32.totalorder %s18, 0
      %p104 = por %p102, %p103
      %s105 = ssub.s32 %s19, %s31
      %s106 = ssub.s32 %s20, %s27
      %s107 = sor.u32 %s105, %s106
      %p108 = scmp.eq.s32.totalorder %s107, 0
      %s110 = sadd.s32 %s109, 1
      %s111 = scalar_select %p108, %s109, %s110
      %p114 = pneg %p108
      %p115 = scmp.eq.s32.totalorder %s12, 7
      %p116 = por %p114, %p115
      %p117 = scmp.ne.s32.totalorder %s109, %s112
      %p118 = scmp.eq.s32.totalorder %s12, 0
      %p119 = por %p117, %p118
      %p120 = scmp.ne.s32.totalorder %s109, %s112
      %p121 = scmp.eq.s32.totalorder %s17, 7
      %p122 = por %p120, %p121
      %p123 = scmp.ne.s32.totalorder %s112, %s113
      %p124 = scmp.eq.s32.totalorder %s17, 0
      %p125 = por %p123, %p124
      %p126 = scmp.ne.s32.totalorder %s112, %s113
      %p127 = scmp.eq.s32.totalorder %s18, 7
      %p128 = por %p126, %p127
      %p130 = scmp.ne.s32.totalorder %s113, %s129
      %p131 = scmp.eq.s32.totalorder %s18, 0
      %p132 = por %p130, %p131
      %p133 = scmp.le.s32.totalorder 1, %s12
      %p134 = scmp.lt.s32.totalorder %s12, 9
      %p135 = pnand %p133, %p134
      %p136 = pneg %p135
      // Predicated region
      $region9: #{preprocess_forward.1} parent=5 // pred_check
        _
      $region10: #{preprocess_forward.1} parent=5 // pred_check_branch
        %138 = sbr.rel (%p135) target = $region12
      $region11: #{preprocess_forward.1} parent=5 // pred_region
        %s139 = ssub.s32 %s12, 1
        // Predicated region
        $region13: #{preprocess_forward.1} parent=11 // pred_check
          %p140 = pneg %p71
        $region14: #{preprocess_forward.1} parent=11 // pred_check_branch
          %142 = sbr.rel (%p140) target = $region16
        $region15: #{preprocess_forward.1} parent=11 // pred_region
          _
        $region16: #{preprocess_forward.1} parent=11 // pred_fallthru
          _
      $region12: #{preprocess_forward.1} parent=5 // pred_fallthru
        _
      %p143 = scmp.lt.s32.totalorder %s12, 8
      // Predicated region
      $region17: #{preprocess_forward.1} parent=5 // pred_check
        %p144 = pneg %p143
      $region18: #{preprocess_forward.1} parent=5 // pred_check_branch
        %146 = sbr.rel (%p144) target = $region20
      $region19: #{preprocess_forward.1} parent=5 // pred_region
        // Predicated region
        $region21: #{preprocess_forward.1} parent=19 // pred_check
          %p147 = pneg %p44
        $region22: #{preprocess_forward.1} parent=19 // pred_check_branch
          %149 = sbr.rel (%p147) target = $region24
        $region23: #{preprocess_forward.1} parent=19 // pred_region
          %s150 = smul.u32 32, %s20
          %p151 = scmp.lt.s32.totalorder %s150, 127
          %s152 = scalar_select %p151, %s150, 127
          %s153 = smul.addr %s152, 4
          %s154 = smul.addr %s153, 4
          %s155 = scalar_lea.vmem %s0, %s154
          %s156 = smul.u32 32, %s20
        $region24: #{preprocess_forward.1} parent=19 // pred_fallthru
          _
        // Predicated region
        $region25: #{preprocess_forward.1} parent=19 // pred_check
          %p157 = pneg %p91
        $region26: #{preprocess_forward.1} parent=19 // pred_check_branch
          %159 = sbr.rel (%p157) target = $region28
        $region27: #{preprocess_forward.1} parent=19 // pred_region
          %s160 = sand.u32 %s81, 1
          %s161 = scalar_lea.sflag [#allocation4], %s160
          %s162 = sand.u32 %s81, 1
          %s163 = smul.addr %s162, 2048
          %s164 = scalar_lea.vmem [#allocation3], %s163
          %s166 = ssub.s32 32768, 32768
          %167 = vsyncadd %s161, %s166
          %s168 = smul.addr %s19, 256
          %s169 = smul.addr %s168, 128
          %s170 = scalar_lea.hbm %s2, %s169
          %s171 = sshll.u32 %s164, 4
          %s172 = int_to_ptr.vmem [resolvable:$true] %s171
          %177 = dma.hbm_to_vmem [thread:$0]  %s170, 32768, %s172, %s161, 512, 512, 32
        $region28: #{preprocess_forward.1} parent=19 // pred_fallthru
          _
      $region20: #{preprocess_forward.1} parent=5 // pred_fallthru
        _
      %p178 = scmp.le.s32.totalorder 1, %s12
      %p179 = scmp.lt.s32.totalorder %s12, 9
      %p180 = pnand %p178, %p179
      %p181 = pneg %p180
      // Predicated region
      $region29: #{preprocess_forward.1} parent=5 // pred_check
        _
      $region30: #{preprocess_forward.1} parent=5 // pred_check_branch
        %183 = sbr.rel (%p180) target = $region32
      $region31: #{preprocess_forward.1} parent=5 // pred_region
        %s184 = ssub.s32 %s12, 1
        %s185 = sand.u32 %s84, 1
        %s186 = scalar_lea.sflag [#allocation4], %s185
        %s187 = sand.u32 %s84, 1
        %s188 = smul.addr %s187, 2048
        %s189 = scalar_lea.vmem [#allocation3], %s188
        // Predicated region
        $region33: #{preprocess_forward.1} parent=31 // pred_check
          %p190 = pneg %p97
        $region34: #{preprocess_forward.1} parent=31 // pred_check_branch
          %192 = sbr.rel (%p190) target = $region36
        $region35: #{preprocess_forward.1} parent=31 // pred_region
          %193 = dma.done %s186, 32768
        $region36: #{preprocess_forward.1} parent=31 // pred_fallthru
          _
        %s194 = smul.u32 32, %s22
        %p195 = scmp.lt.s32.totalorder %s194, 127
        %s196 = scalar_select %p195, %s194, 127
        %s197 = smul.addr %s196, 4
        %s198 = smul.addr %s197, 4
        %s199 = scalar_lea.vmem %s0, %s198
        %p200 = pneg %p50
        %p201 = pneg %p47
        %p202 = pneg %p71
        %p203 = pneg %p68
        %s204 = sand.u32 %s84, 1
        %s205 = scalar_lea.sflag [#allocation4], %s204
        %s206 = sand.u32 %s84, 1
        %s207 = smul.addr %s206, 2048
        %s208 = scalar_lea.vmem [#allocation3], %s207
        %p209 = pneg %p97
        %p210 = pneg %p94
        %p211 = pneg %p125
        %p212 = pneg %p122
        %s213 = smul.u32 32, %s22
        %p214 = scmp.lt.s32.totalorder %s21, 1
        %s215 = scalar_select %p214, %s21, 1
        %p216 = scmp.lt.s32.totalorder %s213, 127
        %s217 = scalar_select %p216, %s213, 127
        %s218 = smul.addr %s217, 8
        %s219 = smul.addr %s215, 1024
        %s220 = sadd.s32 %s218, %s219
        %s221 = smul.addr %s220, 8
        %s222 = scalar_lea.vmem %s3, %s221
        %s223 = smul.u32 32, %s22
        %p224 = scmp.lt.s32.totalorder %s223, 127
        %s225 = scalar_select %p224, %s223, 127
        %s226 = smul.addr %s225, 4
        %s227 = smul.addr %s226, 4
        %s228 = scalar_lea.vmem %s0, %s227
        %s229 = smul.u32 32, %s22
        %s230 = smul.u32 32, %s22
        %p231 = scmp.lt.s32.totalorder %s21, 1
        %s232 = scalar_select %p231, %s21, 1
        %p233 = scmp.lt.s32.totalorder %s230, 127
        %s234 = scalar_select %p233, %s230, 127
        %s235 = smul.addr %s234, 8
        %s236 = smul.addr %s232, 1024
        %s237 = sadd.s32 %s235, %s236
        %s238 = smul.addr %s237, 8
        %s239 = scalar_lea.vmem %s3, %s238
        %s240 = smul.u32 32, %s22
        %v241 = vld [vmem:[%s189] sm:$0xff]
        %v242 = vld [vmem:[%s189 + $0x8] sm:$0xff]
        %v243 = vld [vmem:[%s189 + $0x10] sm:$0xff]
        %v244 = vld [vmem:[%s189 + $0x18] sm:$0xff]
        %v245 = vld [vmem:[%s189 + $0x20] sm:$0xff]
        %v246 = vld [vmem:[%s189 + $0x28] sm:$0xff]
        %v247 = vld [vmem:[%s189 + $0x30] sm:$0xff]
        %v248 = vld [vmem:[%s189 + $0x38] sm:$0xff]
        %v249 = vld [vmem:[%s189 + $0x40] sm:$0xff]
        %v250 = vld [vmem:[%s189 + $0x48] sm:$0xff]
        %v251 = vld [vmem:[%s189 + $0x50] sm:$0xff]
        %v252 = vld [vmem:[%s189 + $0x58] sm:$0xff]
        %v253 = vld [vmem:[%s189 + $0x60] sm:$0xff]
        %v254 = vld [vmem:[%s189 + $0x68] sm:$0xff]
        %v255 = vld [vmem:[%s189 + $0x70] sm:$0xff]
        %v256 = vld [vmem:[%s189 + $0x78] sm:$0xff]
        %v257 = vld [vmem:[%s189 + $0x80] sm:$0xff]
        %v258 = vld [vmem:[%s189 + $0x88] sm:$0xff]
        %v259 = vld [vmem:[%s189 + $0x90] sm:$0xff]
        %v260 = vld [vmem:[%s189 + $0x98] sm:$0xff]
        %v261 = vld [vmem:[%s189 + $0xa0] sm:$0xff]
        %v262 = vld [vmem:[%s189 + $0xa8] sm:$0xff]
        %v263 = vld [vmem:[%s189 + $0xb0] sm:$0xff]
        %v264 = vld [vmem:[%s189 + $0xb8] sm:$0xff]
        %v265 = vld [vmem:[%s189 + $0xc0] sm:$0xff]
        %v266 = vld [vmem:[%s189 + $0xc8] sm:$0xff]
        %v267 = vld [vmem:[%s189 + $0xd0] sm:$0xff]
        %v268 = vld [vmem:[%s189 + $0xd8] sm:$0xff]
        %v269 = vld [vmem:[%s189 + $0xe0] sm:$0xff]
        %v270 = vld [vmem:[%s189 + $0xe8] sm:$0xff]
        %v271 = vld [vmem:[%s189 + $0xf0] sm:$0xff]
        %v272 = vld [vmem:[%s189 + $0xf8] sm:$0xff]
        %v273 = vld [vmem:[%s189 + $0x100] sm:$0xff]
        %v274 = vld [vmem:[%s189 + $0x108] sm:$0xff]
        %v275 = vld [vmem:[%s189 + $0x110] sm:$0xff]
        %v276 = vld [vmem:[%s189 + $0x118] sm:$0xff]
        %v277 = vld [vmem:[%s189 + $0x120] sm:$0xff]
        %v278 = vld [vmem:[%s189 + $0x128] sm:$0xff]
        %v279 = vld [vmem:[%s189 + $0x130] sm:$0xff]
        %v280 = vld [vmem:[%s189 + $0x138] sm:$0xff]
        %v281 = vld [vmem:[%s189 + $0x140] sm:$0xff]
        %v282 = vld [vmem:[%s189 + $0x148] sm:$0xff]
        %v283 = vld [vmem:[%s189 + $0x150] sm:$0xff]
        %v284 = vld [vmem:[%s189 + $0x158] sm:$0xff]
        %v285 = vld [vmem:[%s189 + $0x160] sm:$0xff]
        %v286 = vld [vmem:[%s189 + $0x168] sm:$0xff]
        %v287 = vld [vmem:[%s189 + $0x170] sm:$0xff]
        %v288 = vld [vmem:[%s189 + $0x178] sm:$0xff]
        %v289 = vld [vmem:[%s189 + $0x180] sm:$0xff]
        %v290 = vld [vmem:[%s189 + $0x188] sm:$0xff]
        %v291 = vld [vmem:[%s189 + $0x190] sm:$0xff]
        %v292 = vld [vmem:[%s189 + $0x198] sm:$0xff]
        %v293 = vld [vmem:[%s189 + $0x1a0] sm:$0xff]
        %v294 = vld [vmem:[%s189 + $0x1a8] sm:$0xff]
        %v295 = vld [vmem:[%s189 + $0x1b0] sm:$0xff]
        %v296 = vld [vmem:[%s189 + $0x1b8] sm:$0xff]
        %v297 = vld [vmem:[%s189 + $0x1c0] sm:$0xff]
        %v298 = vld [vmem:[%s189 + $0x1c8] sm:$0xff]
        %v299 = vld [vmem:[%s189 + $0x1d0] sm:$0xff]
        %v300 = vld [vmem:[%s189 + $0x1d8] sm:$0xff]
        %v301 = vld [vmem:[%s189 + $0x1e0] sm:$0xff]
        %v302 = vld [vmem:[%s189 + $0x1e8] sm:$0xff]
        %v303 = vld [vmem:[%s189 + $0x1f0] sm:$0xff]
        %v304 = vld [vmem:[%s189 + $0x1f8] sm:$0xff]
        %v305 = vld [vmem:[%s189 + $0x200] sm:$0xff]
        %v306 = vld [vmem:[%s189 + $0x208] sm:$0xff]
        %v307 = vld [vmem:[%s189 + $0x210] sm:$0xff]
        %v308 = vld [vmem:[%s189 + $0x218] sm:$0xff]
        %v309 = vld [vmem:[%s189 + $0x220] sm:$0xff]
        %v310 = vld [vmem:[%s189 + $0x228] sm:$0xff]
        %v311 = vld [vmem:[%s189 + $0x230] sm:$0xff]
        %v312 = vld [vmem:[%s189 + $0x238] sm:$0xff]
        %v313 = vld [vmem:[%s189 + $0x240] sm:$0xff]
        %v314 = vld [vmem:[%s189 + $0x248] sm:$0xff]
        %v315 = vld [vmem:[%s189 + $0x250] sm:$0xff]
        %v316 = vld [vmem:[%s189 + $0x258] sm:$0xff]
        %v317 = vld [vmem:[%s189 + $0x260] sm:$0xff]
        %v318 = vld [vmem:[%s189 + $0x268] sm:$0xff]
        %v319 = vld [vmem:[%s189 + $0x270] sm:$0xff]
        %v320 = vld [vmem:[%s189 + $0x278] sm:$0xff]
        %v321 = vld [vmem:[%s189 + $0x280] sm:$0xff]
        %v322 = vld [vmem:[%s189 + $0x288] sm:$0xff]
        %v323 = vld [vmem:[%s189 + $0x290] sm:$0xff]
        %v324 = vld [vmem:[%s189 + $0x298] sm:$0xff]
        %v325 = vld [vmem:[%s189 + $0x2a0] sm:$0xff]
        %v326 = vld [vmem:[%s189 + $0x2a8] sm:$0xff]
        %v327 = vld [vmem:[%s189 + $0x2b0] sm:$0xff]
        %v328 = vld [vmem:[%s189 + $0x2b8] sm:$0xff]
        %v329 = vld [vmem:[%s189 + $0x2c0] sm:$0xff]
        %v330 = vld [vmem:[%s189 + $0x2c8] sm:$0xff]
        %v331 = vld [vmem:[%s189 + $0x2d0] sm:$0xff]
        %v332 = vld [vmem:[%s189 + $0x2d8] sm:$0xff]
        %v333 = vld [vmem:[%s189 + $0x2e0] sm:$0xff]
        %v334 = vld [vmem:[%s189 + $0x2e8] sm:$0xff]
        %v335 = vld [vmem:[%s189 + $0x2f0] sm:$0xff]
        %v336 = vld [vmem:[%s189 + $0x2f8] sm:$0xff]
        %v337 = vld [vmem:[%s189 + $0x300] sm:$0xff]
        %v338 = vld [vmem:[%s189 + $0x308] sm:$0xff]
        %v339 = vld [vmem:[%s189 + $0x310] sm:$0xff]
        %v340 = vld [vmem:[%s189 + $0x318] sm:$0xff]
        %v341 = vld [vmem:[%s189 + $0x320] sm:$0xff]
        %v342 = vld [vmem:[%s189 + $0x328] sm:$0xff]
        %v343 = vld [vmem:[%s189 + $0x330] sm:$0xff]
        %v344 = vld [vmem:[%s189 + $0x338] sm:$0xff]
        %v345 = vld [vmem:[%s189 + $0x340] sm:$0xff]
        %v346 = vld [vmem:[%s189 + $0x348] sm:$0xff]
        %v347 = vld [vmem:[%s189 + $0x350] sm:$0xff]
        %v348 = vld [vmem:[%s189 + $0x358] sm:$0xff]
        %v349 = vld [vmem:[%s189 + $0x360] sm:$0xff]
        %v350 = vld [vmem:[%s189 + $0x368] sm:$0xff]
        %v351 = vld [vmem:[%s189 + $0x370] sm:$0xff]
        %v352 = vld [vmem:[%s189 + $0x378] sm:$0xff]
        %v353 = vld [vmem:[%s189 + $0x380] sm:$0xff]
        %v354 = vld [vmem:[%s189 + $0x388] sm:$0xff]
        %v355 = vld [vmem:[%s189 + $0x390] sm:$0xff]
        %v356 = vld [vmem:[%s189 + $0x398] sm:$0xff]
        %v357 = vld [vmem:[%s189 + $0x3a0] sm:$0xff]
        %v358 = vld [vmem:[%s189 + $0x3a8] sm:$0xff]
        %v359 = vld [vmem:[%s189 + $0x3b0] sm:$0xff]
        %v360 = vld [vmem:[%s189 + $0x3b8] sm:$0xff]
        %v361 = vld [vmem:[%s189 + $0x3c0] sm:$0xff]
        %v362 = vld [vmem:[%s189 + $0x3c8] sm:$0xff]
        %v363 = vld [vmem:[%s189 + $0x3d0] sm:$0xff]
        %v364 = vld [vmem:[%s189 + $0x3d8] sm:$0xff]
        %v365 = vld [vmem:[%s189 + $0x3e0] sm:$0xff]
        %v366 = vld [vmem:[%s189 + $0x3e8] sm:$0xff]
        %v367 = vld [vmem:[%s189 + $0x3f0] sm:$0xff]
        %v368 = vld [vmem:[%s189 + $0x3f8] sm:$0xff]
        %v369 = vld [vmem:[%s189 + $0x400] sm:$0xff]
        %v370 = vld [vmem:[%s189 + $0x408] sm:$0xff]
        %v371 = vld [vmem:[%s189 + $0x410] sm:$0xff]
        %v372 = vld [vmem:[%s189 + $0x418] sm:$0xff]
        %v373 = vld [vmem:[%s189 + $0x420] sm:$0xff]
        %v374 = vld [vmem:[%s189 + $0x428] sm:$0xff]
        %v375 = vld [vmem:[%s189 + $0x430] sm:$0xff]
        %v376 = vld [vmem:[%s189 + $0x438] sm:$0xff]
        %v377 = vld [vmem:[%s189 + $0x440] sm:$0xff]
        %v378 = vld [vmem:[%s189 + $0x448] sm:$0xff]
        %v379 = vld [vmem:[%s189 + $0x450] sm:$0xff]
        %v380 = vld [vmem:[%s189 + $0x458] sm:$0xff]
        %v381 = vld [vmem:[%s189 + $0x460] sm:$0xff]
        %v382 = vld [vmem:[%s189 + $0x468] sm:$0xff]
        %v383 = vld [vmem:[%s189 + $0x470] sm:$0xff]
        %v384 = vld [vmem:[%s189 + $0x478] sm:$0xff]
        %v385 = vld [vmem:[%s189 + $0x480] sm:$0xff]
        %v386 = vld [vmem:[%s189 + $0x488] sm:$0xff]
        %v387 = vld [vmem:[%s189 + $0x490] sm:$0xff]
        %v388 = vld [vmem:[%s189 + $0x498] sm:$0xff]
        %v389 = vld [vmem:[%s189 + $0x4a0] sm:$0xff]
        %v390 = vld [vmem:[%s189 + $0x4a8] sm:$0xff]
        %v391 = vld [vmem:[%s189 + $0x4b0] sm:$0xff]
        %v392 = vld [vmem:[%s189 + $0x4b8] sm:$0xff]
        %v393 = vld [vmem:[%s189 + $0x4c0] sm:$0xff]
        %v394 = vld [vmem:[%s189 + $0x4c8] sm:$0xff]
        %v395 = vld [vmem:[%s189 + $0x4d0] sm:$0xff]
        %v396 = vld [vmem:[%s189 + $0x4d8] sm:$0xff]
        %v397 = vld [vmem:[%s189 + $0x4e0] sm:$0xff]
        %v398 = vld [vmem:[%s189 + $0x4e8] sm:$0xff]
        %v399 = vld [vmem:[%s189 + $0x4f0] sm:$0xff]
        %v400 = vld [vmem:[%s189 + $0x4f8] sm:$0xff]
        %v401 = vld [vmem:[%s189 + $0x500] sm:$0xff]
        %v402 = vld [vmem:[%s189 + $0x508] sm:$0xff]
        %v403 = vld [vmem:[%s189 + $0x510] sm:$0xff]
        %v404 = vld [vmem:[%s189 + $0x518] sm:$0xff]
        %v405 = vld [vmem:[%s189 + $0x520] sm:$0xff]
        %v406 = vld [vmem:[%s189 + $0x528] sm:$0xff]
        %v407 = vld [vmem:[%s189 + $0x530] sm:$0xff]
        %v408 = vld [vmem:[%s189 + $0x538] sm:$0xff]
        %v409 = vld [vmem:[%s189 + $0x540] sm:$0xff]
        %v410 = vld [vmem:[%s189 + $0x548] sm:$0xff]
        %v411 = vld [vmem:[%s189 + $0x550] sm:$0xff]
        %v412 = vld [vmem:[%s189 + $0x558] sm:$0xff]
        %v413 = vld [vmem:[%s189 + $0x560] sm:$0xff]
        %v414 = vld [vmem:[%s189 + $0x568] sm:$0xff]
        %v415 = vld [vmem:[%s189 + $0x570] sm:$0xff]
        %v416 = vld [vmem:[%s189 + $0x578] sm:$0xff]
        %v417 = vld [vmem:[%s189 + $0x580] sm:$0xff]
        %v418 = vld [vmem:[%s189 + $0x588] sm:$0xff]
        %v419 = vld [vmem:[%s189 + $0x590] sm:$0xff]
        %v420 = vld [vmem:[%s189 + $0x598] sm:$0xff]
        %v421 = vld [vmem:[%s189 + $0x5a0] sm:$0xff]
        %v422 = vld [vmem:[%s189 + $0x5a8] sm:$0xff]
        %v423 = vld [vmem:[%s189 + $0x5b0] sm:$0xff]
        %v424 = vld [vmem:[%s189 + $0x5b8] sm:$0xff]
        %v425 = vld [vmem:[%s189 + $0x5c0] sm:$0xff]
        %v426 = vld [vmem:[%s189 + $0x5c8] sm:$0xff]
        %v427 = vld [vmem:[%s189 + $0x5d0] sm:$0xff]
        %v428 = vld [vmem:[%s189 + $0x5d8] sm:$0xff]
        %v429 = vld [vmem:[%s189 + $0x5e0] sm:$0xff]
        %v430 = vld [vmem:[%s189 + $0x5e8] sm:$0xff]
        %v431 = vld [vmem:[%s189 + $0x5f0] sm:$0xff]
        %v432 = vld [vmem:[%s189 + $0x5f8] sm:$0xff]
        %v433 = vld [vmem:[%s189 + $0x600] sm:$0xff]
        %v434 = vld [vmem:[%s189 + $0x608] sm:$0xff]
        %v435 = vld [vmem:[%s189 + $0x610] sm:$0xff]
        %v436 = vld [vmem:[%s189 + $0x618] sm:$0xff]
        %v437 = vld [vmem:[%s189 + $0x620] sm:$0xff]
        %v438 = vld [vmem:[%s189 + $0x628] sm:$0xff]
        %v439 = vld [vmem:[%s189 + $0x630] sm:$0xff]
        %v440 = vld [vmem:[%s189 + $0x638] sm:$0xff]
        %v441 = vld [vmem:[%s189 + $0x640] sm:$0xff]
        %v442 = vld [vmem:[%s189 + $0x648] sm:$0xff]
        %v443 = vld [vmem:[%s189 + $0x650] sm:$0xff]
        %v444 = vld [vmem:[%s189 + $0x658] sm:$0xff]
        %v445 = vld [vmem:[%s189 + $0x660] sm:$0xff]
        %v446 = vld [vmem:[%s189 + $0x668] sm:$0xff]
        %v447 = vld [vmem:[%s189 + $0x670] sm:$0xff]
        %v448 = vld [vmem:[%s189 + $0x678] sm:$0xff]
        %v449 = vld [vmem:[%s189 + $0x680] sm:$0xff]
        %v450 = vld [vmem:[%s189 + $0x688] sm:$0xff]
        %v451 = vld [vmem:[%s189 + $0x690] sm:$0xff]
        %v452 = vld [vmem:[%s189 + $0x698] sm:$0xff]
        %v453 = vld [vmem:[%s189 + $0x6a0] sm:$0xff]
        %v454 = vld [vmem:[%s189 + $0x6a8] sm:$0xff]
        %v455 = vld [vmem:[%s189 + $0x6b0] sm:$0xff]
        %v456 = vld [vmem:[%s189 + $0x6b8] sm:$0xff]
        %v457 = vld [vmem:[%s189 + $0x6c0] sm:$0xff]
        %v458 = vld [vmem:[%s189 + $0x6c8] sm:$0xff]
        %v459 = vld [vmem:[%s189 + $0x6d0] sm:$0xff]
        %v460 = vld [vmem:[%s189 + $0x6d8] sm:$0xff]
        %v461 = vld [vmem:[%s189 + $0x6e0] sm:$0xff]
        %v462 = vld [vmem:[%s189 + $0x6e8] sm:$0xff]
        %v463 = vld [vmem:[%s189 + $0x6f0] sm:$0xff]
        %v464 = vld [vmem:[%s189 + $0x6f8] sm:$0xff]
        %v465 = vld [vmem:[%s189 + $0x700] sm:$0xff]
        %v466 = vld [vmem:[%s189 + $0x708] sm:$0xff]
        %v467 = vld [vmem:[%s189 + $0x710] sm:$0xff]
        %v468 = vld [vmem:[%s189 + $0x718] sm:$0xff]
        %v469 = vld [vmem:[%s189 + $0x720] sm:$0xff]
        %v470 = vld [vmem:[%s189 + $0x728] sm:$0xff]
        %v471 = vld [vmem:[%s189 + $0x730] sm:$0xff]
        %v472 = vld [vmem:[%s189 + $0x738] sm:$0xff]
        %v473 = vld [vmem:[%s189 + $0x740] sm:$0xff]
        %v474 = vld [vmem:[%s189 + $0x748] sm:$0xff]
        %v475 = vld [vmem:[%s189 + $0x750] sm:$0xff]
        %v476 = vld [vmem:[%s189 + $0x758] sm:$0xff]
        %v477 = vld [vmem:[%s189 + $0x760] sm:$0xff]
        %v478 = vld [vmem:[%s189 + $0x768] sm:$0xff]
        %v479 = vld [vmem:[%s189 + $0x770] sm:$0xff]
        %v480 = vld [vmem:[%s189 + $0x778] sm:$0xff]
        %v481 = vld [vmem:[%s189 + $0x780] sm:$0xff]
        %v482 = vld [vmem:[%s189 + $0x788] sm:$0xff]
        %v483 = vld [vmem:[%s189 + $0x790] sm:$0xff]
        %v484 = vld [vmem:[%s189 + $0x798] sm:$0xff]
        %v485 = vld [vmem:[%s189 + $0x7a0] sm:$0xff]
        %v486 = vld [vmem:[%s189 + $0x7a8] sm:$0xff]
        %v487 = vld [vmem:[%s189 + $0x7b0] sm:$0xff]
        %v488 = vld [vmem:[%s189 + $0x7b8] sm:$0xff]
        %v489 = vld [vmem:[%s189 + $0x7c0] sm:$0xff]
        %v490 = vld [vmem:[%s189 + $0x7c8] sm:$0xff]
        %v491 = vld [vmem:[%s189 + $0x7d0] sm:$0xff]
        %v492 = vld [vmem:[%s189 + $0x7d8] sm:$0xff]
        %v493 = vld [vmem:[%s189 + $0x7e0] sm:$0xff]
        %v494 = vld [vmem:[%s189 + $0x7e8] sm:$0xff]
        %v495 = vld [vmem:[%s189 + $0x7f0] sm:$0xff]
        %v496 = vld [vmem:[%s189 + $0x7f8] sm:$0xff]
        %v497 = vpack.c.bf16 %v245, %v241
        %v498 = vpack.c.bf16 %v246, %v242
        %v499 = vpack.c.bf16 %v247, %v243
        %v500 = vpack.c.bf16 %v248, %v244
        %v501 = vpack.c.bf16 %v253, %v249
        %v502 = vpack.c.bf16 %v254, %v250
        %v503 = vpack.c.bf16 %v255, %v251
        %v504 = vpack.c.bf16 %v256, %v252
        %v505 = vpack.c.bf16 %v261, %v257
        %v506 = vpack.c.bf16 %v262, %v258
        %v507 = vpack.c.bf16 %v263, %v259
        %v508 = vpack.c.bf16 %v264, %v260
        %v509 = vpack.c.bf16 %v269, %v265
        %v510 = vpack.c.bf16 %v270, %v266
        %v511 = vpack.c.bf16 %v271, %v267
        %v512 = vpack.c.bf16 %v272, %v268
        %v513 = vpack.c.bf16 %v277, %v273
        %v514 = vpack.c.bf16 %v278, %v274
        %v515 = vpack.c.bf16 %v279, %v275
        %v516 = vpack.c.bf16 %v280, %v276
        %v517 = vpack.c.bf16 %v285, %v281
        %v518 = vpack.c.bf16 %v286, %v282
        %v519 = vpack.c.bf16 %v287, %v283
        %v520 = vpack.c.bf16 %v288, %v284
        %v521 = vpack.c.bf16 %v293, %v289
        %v522 = vpack.c.bf16 %v294, %v290
        %v523 = vpack.c.bf16 %v295, %v291
        %v524 = vpack.c.bf16 %v296, %v292
        %v525 = vpack.c.bf16 %v301, %v297
        %v526 = vpack.c.bf16 %v302, %v298
        %v527 = vpack.c.bf16 %v303, %v299
        %v528 = vpack.c.bf16 %v304, %v300
        %v529 = vpack.c.bf16 %v309, %v305
        %v530 = vpack.c.bf16 %v310, %v306
        %v531 = vpack.c.bf16 %v311, %v307
        %v532 = vpack.c.bf16 %v312, %v308
        %v533 = vpack.c.bf16 %v317, %v313
        %v534 = vpack.c.bf16 %v318, %v314
        %v535 = vpack.c.bf16 %v319, %v315
        %v536 = vpack.c.bf16 %v320, %v316
        %v537 = vpack.c.bf16 %v325, %v321
        %v538 = vpack.c.bf16 %v326, %v322
        %v539 = vpack.c.bf16 %v327, %v323
        %v540 = vpack.c.bf16 %v328, %v324
        %v541 = vpack.c.bf16 %v333, %v329
        %v542 = vpack.c.bf16 %v334, %v330
        %v543 = vpack.c.bf16 %v335, %v331
        %v544 = vpack.c.bf16 %v336, %v332
        %v545 = vpack.c.bf16 %v341, %v337
        %v546 = vpack.c.bf16 %v342, %v338
        %v547 = vpack.c.bf16 %v343, %v339
        %v548 = vpack.c.bf16 %v344, %v340
        %v549 = vpack.c.bf16 %v349, %v345
        %v550 = vpack.c.bf16 %v350, %v346
        %v551 = vpack.c.bf16 %v351, %v347
        %v552 = vpack.c.bf16 %v352, %v348
        %v553 = vpack.c.bf16 %v357, %v353
        %v554 = vpack.c.bf16 %v358, %v354
        %v555 = vpack.c.bf16 %v359, %v355
        %v556 = vpack.c.bf16 %v360, %v356
        %v557 = vpack.c.bf16 %v365, %v361
        %v558 = vpack.c.bf16 %v366, %v362
        %v559 = vpack.c.bf16 %v367, %v363
        %v560 = vpack.c.bf16 %v368, %v364
        %v561 = vpack.c.bf16 %v373, %v369
        %v562 = vpack.c.bf16 %v374, %v370
        %v563 = vpack.c.bf16 %v375, %v371
        %v564 = vpack.c.bf16 %v376, %v372
        %v565 = vpack.c.bf16 %v381, %v377
        %v566 = vpack.c.bf16 %v382, %v378
        %v567 = vpack.c.bf16 %v383, %v379
        %v568 = vpack.c.bf16 %v384, %v380
        %v569 = vpack.c.bf16 %v389, %v385
        %v570 = vpack.c.bf16 %v390, %v386
        %v571 = vpack.c.bf16 %v391, %v387
        %v572 = vpack.c.bf16 %v392, %v388
        %v573 = vpack.c.bf16 %v397, %v393
        %v574 = vpack.c.bf16 %v398, %v394
        %v575 = vpack.c.bf16 %v399, %v395
        %v576 = vpack.c.bf16 %v400, %v396
        %v577 = vpack.c.bf16 %v405, %v401
        %v578 = vpack.c.bf16 %v406, %v402
        %v579 = vpack.c.bf16 %v407, %v403
        %v580 = vpack.c.bf16 %v408, %v404
        %v581 = vpack.c.bf16 %v413, %v409
        %v582 = vpack.c.bf16 %v414, %v410
        %v583 = vpack.c.bf16 %v415, %v411
        %v584 = vpack.c.bf16 %v416, %v412
        %v585 = vpack.c.bf16 %v421, %v417
        %v586 = vpack.c.bf16 %v422, %v418
        %v587 = vpack.c.bf16 %v423, %v419
        %v588 = vpack.c.bf16 %v424, %v420
        %v589 = vpack.c.bf16 %v429, %v425
        %v590 = vpack.c.bf16 %v430, %v426
        %v591 = vpack.c.bf16 %v431, %v427
        %v592 = vpack.c.bf16 %v432, %v428
        %v593 = vpack.c.bf16 %v437, %v433
        %v594 = vpack.c.bf16 %v438, %v434
        %v595 = vpack.c.bf16 %v439, %v435
        %v596 = vpack.c.bf16 %v440, %v436
        %v597 = vpack.c.bf16 %v445, %v441
        %v598 = vpack.c.bf16 %v446, %v442
        %v599 = vpack.c.bf16 %v447, %v443
        %v600 = vpack.c.bf16 %v448, %v444
        %v601 = vpack.c.bf16 %v453, %v449
        %v602 = vpack.c.bf16 %v454, %v450
        %v603 = vpack.c.bf16 %v455, %v451
        %v604 = vpack.c.bf16 %v456, %v452
        %v605 = vpack.c.bf16 %v461, %v457
        %v606 = vpack.c.bf16 %v462, %v458
        %v607 = vpack.c.bf16 %v463, %v459
        %v608 = vpack.c.bf16 %v464, %v460
        %v609 = vpack.c.bf16 %v469, %v465
        %v610 = vpack.c.bf16 %v470, %v466
        %v611 = vpack.c.bf16 %v471, %v467
        %v612 = vpack.c.bf16 %v472, %v468
        %v613 = vpack.c.bf16 %v477, %v473
        %v614 = vpack.c.bf16 %v478, %v474
        %v615 = vpack.c.bf16 %v479, %v475
        %v616 = vpack.c.bf16 %v480, %v476
        %v617 = vpack.c.bf16 %v485, %v481
        %v618 = vpack.c.bf16 %v486, %v482
        %v619 = vpack.c.bf16 %v487, %v483
        %v620 = vpack.c.bf16 %v488, %v484
        %v621 = vpack.c.bf16 %v493, %v489
        %v622 = vpack.c.bf16 %v494, %v490
        %v623 = vpack.c.bf16 %v495, %v491
        %v624 = vpack.c.bf16 %v496, %v492
        %v625 = vld [vmem:[%s228] sm:$0xff]
        %v626 = vld [vmem:[%s228 + $0x8] sm:$0xff]
        %v627 = vld [vmem:[%s228 + $0x10] sm:$0xff]
        %v628 = vld [vmem:[%s228 + $0x18] sm:$0xff]
        %v629 = vld [vmem:[%s228 + $0x20] sm:$0xff]
        %v630 = vld [vmem:[%s228 + $0x28] sm:$0xff]
        %v631 = vld [vmem:[%s228 + $0x30] sm:$0xff]
        %v632 = vld [vmem:[%s228 + $0x38] sm:$0xff]
        %v633 = vld [vmem:[%s228 + $0x40] sm:$0xff]
        %v634 = vld [vmem:[%s228 + $0x48] sm:$0xff]
        %v635 = vld [vmem:[%s228 + $0x50] sm:$0xff]
        %v636 = vld [vmem:[%s228 + $0x58] sm:$0xff]
        %v637 = vld [vmem:[%s228 + $0x60] sm:$0xff]
        %v638 = vld [vmem:[%s228 + $0x68] sm:$0xff]
        %v639 = vld [vmem:[%s228 + $0x70] sm:$0xff]
        %v640 = vld [vmem:[%s228 + $0x78] sm:$0xff]
        %v641 = vld [vmem:[%s228 + $0x80] sm:$0xff]
        %v642 = vld [vmem:[%s228 + $0x88] sm:$0xff]
        %v643 = vld [vmem:[%s228 + $0x90] sm:$0xff]
        %v644 = vld [vmem:[%s228 + $0x98] sm:$0xff]
        %v645 = vld [vmem:[%s228 + $0xa0] sm:$0xff]
        %v646 = vld [vmem:[%s228 + $0xa8] sm:$0xff]
        %v647 = vld [vmem:[%s228 + $0xb0] sm:$0xff]
        %v648 = vld [vmem:[%s228 + $0xb8] sm:$0xff]
        %v649 = vld [vmem:[%s228 + $0xc0] sm:$0xff]
        %v650 = vld [vmem:[%s228 + $0xc8] sm:$0xff]
        %v651 = vld [vmem:[%s228 + $0xd0] sm:$0xff]
        %v652 = vld [vmem:[%s228 + $0xd8] sm:$0xff]
        %v653 = vld [vmem:[%s228 + $0xe0] sm:$0xff]
        %v654 = vld [vmem:[%s228 + $0xe8] sm:$0xff]
        %v655 = vld [vmem:[%s228 + $0xf0] sm:$0xff]
        %v656 = vld [vmem:[%s228 + $0xf8] sm:$0xff]
        %v657 = vld [vmem:[%s228 + $0x100] sm:$0xff]
        %v658 = vld [vmem:[%s228 + $0x108] sm:$0xff]
        %v659 = vld [vmem:[%s228 + $0x110] sm:$0xff]
        %v660 = vld [vmem:[%s228 + $0x118] sm:$0xff]
        %v661 = vld [vmem:[%s228 + $0x120] sm:$0xff]
        %v662 = vld [vmem:[%s228 + $0x128] sm:$0xff]
        %v663 = vld [vmem:[%s228 + $0x130] sm:$0xff]
        %v664 = vld [vmem:[%s228 + $0x138] sm:$0xff]
        %v665 = vld [vmem:[%s228 + $0x140] sm:$0xff]
        %v666 = vld [vmem:[%s228 + $0x148] sm:$0xff]
        %v667 = vld [vmem:[%s228 + $0x150] sm:$0xff]
        %v668 = vld [vmem:[%s228 + $0x158] sm:$0xff]
        %v669 = vld [vmem:[%s228 + $0x160] sm:$0xff]
        %v670 = vld [vmem:[%s228 + $0x168] sm:$0xff]
        %v671 = vld [vmem:[%s228 + $0x170] sm:$0xff]
        %v672 = vld [vmem:[%s228 + $0x178] sm:$0xff]
        %v673 = vld [vmem:[%s228 + $0x180] sm:$0xff]
        %v674 = vld [vmem:[%s228 + $0x188] sm:$0xff]
        %v675 = vld [vmem:[%s228 + $0x190] sm:$0xff]
        %v676 = vld [vmem:[%s228 + $0x198] sm:$0xff]
        %v677 = vld [vmem:[%s228 + $0x1a0] sm:$0xff]
        %v678 = vld [vmem:[%s228 + $0x1a8] sm:$0xff]
        %v679 = vld [vmem:[%s228 + $0x1b0] sm:$0xff]
        %v680 = vld [vmem:[%s228 + $0x1b8] sm:$0xff]
        %v681 = vld [vmem:[%s228 + $0x1c0] sm:$0xff]
        %v682 = vld [vmem:[%s228 + $0x1c8] sm:$0xff]
        %v683 = vld [vmem:[%s228 + $0x1d0] sm:$0xff]
        %v684 = vld [vmem:[%s228 + $0x1d8] sm:$0xff]
        %v685 = vld [vmem:[%s228 + $0x1e0] sm:$0xff]
        %v686 = vld [vmem:[%s228 + $0x1e8] sm:$0xff]
        %v687 = vld [vmem:[%s228 + $0x1f0] sm:$0xff]
        %v688 = vld [vmem:[%s228 + $0x1f8] sm:$0xff]
        %v753 = vunpack.c.l.b16 %v625
        %v754 = vunpack.c.h.b16 %v625
        %v755 = vunpack.c.l.b16 %v626
        %v756 = vunpack.c.h.b16 %v626
        %v757 = vunpack.c.l.b16 %v627
        %v758 = vunpack.c.h.b16 %v627
        %v759 = vunpack.c.l.b16 %v628
        %v760 = vunpack.c.h.b16 %v628
        %v761 = vunpack.c.l.b16 %v629
        %v762 = vunpack.c.h.b16 %v629
        %v763 = vunpack.c.l.b16 %v630
        %v764 = vunpack.c.h.b16 %v630
        %v765 = vunpack.c.l.b16 %v631
        %v766 = vunpack.c.h.b16 %v631
        %v767 = vunpack.c.l.b16 %v632
        %v768 = vunpack.c.h.b16 %v632
        %v769 = vunpack.c.l.b16 %v633
        %v770 = vunpack.c.h.b16 %v633
        %v771 = vunpack.c.l.b16 %v634
        %v772 = vunpack.c.h.b16 %v634
        %v773 = vunpack.c.l.b16 %v635
        %v774 = vunpack.c.h.b16 %v635
        %v775 = vunpack.c.l.b16 %v636
        %v776 = vunpack.c.h.b16 %v636
        %v777 = vunpack.c.l.b16 %v637
        %v778 = vunpack.c.h.b16 %v637
        %v779 = vunpack.c.l.b16 %v638
        %v780 = vunpack.c.h.b16 %v638
        %v781 = vunpack.c.l.b16 %v639
        %v782 = vunpack.c.h.b16 %v639
        %v783 = vunpack.c.l.b16 %v640
        %v784 = vunpack.c.h.b16 %v640
        %v785 = vunpack.c.l.b16 %v641
        %v786 = vunpack.c.h.b16 %v641
        %v787 = vunpack.c.l.b16 %v642
        %v788 = vunpack.c.h.b16 %v642
        %v789 = vunpack.c.l.b16 %v643
        %v790 = vunpack.c.h.b16 %v643
        %v791 = vunpack.c.l.b16 %v644
        %v792 = vunpack.c.h.b16 %v644
        %v793 = vunpack.c.l.b16 %v645
        %v794 = vunpack.c.h.b16 %v645
        %v795 = vunpack.c.l.b16 %v646
        %v796 = vunpack.c.h.b16 %v646
        %v797 = vunpack.c.l.b16 %v647
        %v798 = vunpack.c.h.b16 %v647
        %v799 = vunpack.c.l.b16 %v648
        %v800 = vunpack.c.h.b16 %v648
        %v801 = vunpack.c.l.b16 %v649
        %v802 = vunpack.c.h.b16 %v649
        %v803 = vunpack.c.l.b16 %v650
        %v804 = vunpack.c.h.b16 %v650
        %v805 = vunpack.c.l.b16 %v651
        %v806 = vunpack.c.h.b16 %v651
        %v807 = vunpack.c.l.b16 %v652
        %v808 = vunpack.c.h.b16 %v652
        %v809 = vunpack.c.l.b16 %v653
        %v810 = vunpack.c.h.b16 %v653
        %v811 = vunpack.c.l.b16 %v654
        %v812 = vunpack.c.h.b16 %v654
        %v813 = vunpack.c.l.b16 %v655
        %v814 = vunpack.c.h.b16 %v655
        %v815 = vunpack.c.l.b16 %v656
        %v816 = vunpack.c.h.b16 %v656
        %v817 = vunpack.c.l.b16 %v657
        %v818 = vunpack.c.h.b16 %v657
        %v819 = vunpack.c.l.b16 %v658
        %v820 = vunpack.c.h.b16 %v658
        %v821 = vunpack.c.l.b16 %v659
        %v822 = vunpack.c.h.b16 %v659
        %v823 = vunpack.c.l.b16 %v660
        %v824 = vunpack.c.h.b16 %v660
        %v825 = vunpack.c.l.b16 %v661
        %v826 = vunpack.c.h.b16 %v661
        %v827 = vunpack.c.l.b16 %v662
        %v828 = vunpack.c.h.b16 %v662
        %v829 = vunpack.c.l.b16 %v663
        %v830 = vunpack.c.h.b16 %v663
        %v831 = vunpack.c.l.b16 %v664
        %v832 = vunpack.c.h.b16 %v664
        %v833 = vunpack.c.l.b16 %v665
        %v834 = vunpack.c.h.b16 %v665
        %v835 = vunpack.c.l.b16 %v666
        %v836 = vunpack.c.h.b16 %v666
        %v837 = vunpack.c.l.b16 %v667
        %v838 = vunpack.c.h.b16 %v667
        %v839 = vunpack.c.l.b16 %v668
        %v840 = vunpack.c.h.b16 %v668
        %v841 = vunpack.c.l.b16 %v669
        %v842 = vunpack.c.h.b16 %v669
        %v843 = vunpack.c.l.b16 %v670
        %v844 = vunpack.c.h.b16 %v670
        %v845 = vunpack.c.l.b16 %v671
        %v846 = vunpack.c.h.b16 %v671
        %v847 = vunpack.c.l.b16 %v672
        %v848 = vunpack.c.h.b16 %v672
        %v849 = vunpack.c.l.b16 %v673
        %v850 = vunpack.c.h.b16 %v673
        %v851 = vunpack.c.l.b16 %v674
        %v852 = vunpack.c.h.b16 %v674
        %v853 = vunpack.c.l.b16 %v675
        %v854 = vunpack.c.h.b16 %v675
        %v855 = vunpack.c.l.b16 %v676
        %v856 = vunpack.c.h.b16 %v676
        %v857 = vunpack.c.l.b16 %v677
        %v858 = vunpack.c.h.b16 %v677
        %v859 = vunpack.c.l.b16 %v678
        %v860 = vunpack.c.h.b16 %v678
        %v861 = vunpack.c.l.b16 %v679
        %v862 = vunpack.c.h.b16 %v679
        %v863 = vunpack.c.l.b16 %v680
        %v864 = vunpack.c.h.b16 %v680
        %v865 = vunpack.c.l.b16 %v681
        %v866 = vunpack.c.h.b16 %v681
        %v867 = vunpack.c.l.b16 %v682
        %v868 = vunpack.c.h.b16 %v682
        %v869 = vunpack.c.l.b16 %v683
        %v870 = vunpack.c.h.b16 %v683
        %v871 = vunpack.c.l.b16 %v684
        %v872 = vunpack.c.h.b16 %v684
        %v873 = vunpack.c.l.b16 %v685
        %v874 = vunpack.c.h.b16 %v685
        %v875 = vunpack.c.l.b16 %v686
        %v876 = vunpack.c.h.b16 %v686
        %v877 = vunpack.c.l.b16 %v687
        %v878 = vunpack.c.h.b16 %v687
        %v879 = vunpack.c.l.b16 %v688
        %v880 = vunpack.c.h.b16 %v688
        %v881 = vpack.c.b16 %v757, %v753
        %v882 = vpack.c.b16 %v758, %v754
        %v883 = vpack.c.b16 %v759, %v755
        %v884 = vpack.c.b16 %v760, %v756
        %v885 = vpack.c.b16 %v765, %v761
        %v886 = vpack.c.b16 %v766, %v762
        %v887 = vpack.c.b16 %v767, %v763
        %v888 = vpack.c.b16 %v768, %v764
        %v889 = vpack.c.b16 %v773, %v769
        %v890 = vpack.c.b16 %v774, %v770
        %v891 = vpack.c.b16 %v775, %v771
        %v892 = vpack.c.b16 %v776, %v772
        %v893 = vpack.c.b16 %v781, %v777
        %v894 = vpack.c.b16 %v782, %v778
        %v895 = vpack.c.b16 %v783, %v779
        %v896 = vpack.c.b16 %v784, %v780
        %v897 = vpack.c.b16 %v789, %v785
        %v898 = vpack.c.b16 %v790, %v786
        %v899 = vpack.c.b16 %v791, %v787
        %v900 = vpack.c.b16 %v792, %v788
        %v901 = vpack.c.b16 %v797, %v793
        %v902 = vpack.c.b16 %v798, %v794
        %v903 = vpack.c.b16 %v799, %v795
        %v904 = vpack.c.b16 %v800, %v796
        %v905 = vpack.c.b16 %v805, %v801
        %v906 = vpack.c.b16 %v806, %v802
        %v907 = vpack.c.b16 %v807, %v803
        %v908 = vpack.c.b16 %v808, %v804
        %v909 = vpack.c.b16 %v813, %v809
        %v910 = vpack.c.b16 %v814, %v810
        %v911 = vpack.c.b16 %v815, %v811
        %v912 = vpack.c.b16 %v816, %v812
        %v913 = vpack.c.b16 %v821, %v817
        %v914 = vpack.c.b16 %v822, %v818
        %v915 = vpack.c.b16 %v823, %v819
        %v916 = vpack.c.b16 %v824, %v820
        %v917 = vpack.c.b16 %v829, %v825
        %v918 = vpack.c.b16 %v830, %v826
        %v919 = vpack.c.b16 %v831, %v827
        %v920 = vpack.c.b16 %v832, %v828
        %v921 = vpack.c.b16 %v837, %v833
        %v922 = vpack.c.b16 %v838, %v834
        %v923 = vpack.c.b16 %v839, %v835
        %v924 = vpack.c.b16 %v840, %v836
        %v925 = vpack.c.b16 %v845, %v841
        %v926 = vpack.c.b16 %v846, %v842
        %v927 = vpack.c.b16 %v847, %v843
        %v928 = vpack.c.b16 %v848, %v844
        %v929 = vpack.c.b16 %v853, %v849
        %v930 = vpack.c.b16 %v854, %v850
        %v931 = vpack.c.b16 %v855, %v851
        %v932 = vpack.c.b16 %v856, %v852
        %v933 = vpack.c.b16 %v861, %v857
        %v934 = vpack.c.b16 %v862, %v858
        %v935 = vpack.c.b16 %v863, %v859
        %v936 = vpack.c.b16 %v864, %v860
        %v937 = vpack.c.b16 %v869, %v865
        %v938 = vpack.c.b16 %v870, %v866
        %v939 = vpack.c.b16 %v871, %v867
        %v940 = vpack.c.b16 %v872, %v868
        %v941 = vpack.c.b16 %v877, %v873
        %v942 = vpack.c.b16 %v878, %v874
        %v943 = vpack.c.b16 %v879, %v875
        %v944 = vpack.c.b16 %v880, %v876
        %1009 = vmatprep.subr.bf16.mxu0 %v498
        %1010 = vmatpush1.bf16.msra.mxu0 %v497
        %1011 = vmatprep.subr.bf16.mxu0 %v502
        %1012 = vmatpush1.bf16.msra.mxu0 %v501
        %1013 = vmatprep.subr.bf16.mxu0 %v506
        %1014 = vmatpush1.bf16.msra.mxu0 %v505
        %1015 = vmatprep.subr.bf16.mxu0 %v510
        %1016 = vmatpush1.bf16.msra.mxu0 %v509
        %1017 = vmatprep.subr.bf16.mxu0 %v514
        %1018 = vmatpush1.bf16.msra.mxu0 %v513
        %1019 = vmatprep.subr.bf16.mxu0 %v518
        %1020 = vmatpush1.bf16.msra.mxu0 %v517
        %1021 = vmatprep.subr.bf16.mxu0 %v522
        %1022 = vmatpush1.bf16.msra.mxu0 %v521
        %1023 = vmatprep.subr.bf16.mxu0 %v526
        %1024 = vmatpush1.bf16.msra.mxu0 %v525
        %1025 = vmatprep.subr.bf16.mxu0 %v530
        %1026 = vmatpush1.bf16.msra.mxu0 %v529
        %1027 = vmatprep.subr.bf16.mxu0 %v534
        %1028 = vmatpush1.bf16.msra.mxu0 %v533
        %1029 = vmatprep.subr.bf16.mxu0 %v538
        %1030 = vmatpush1.bf16.msra.mxu0 %v537
        %1031 = vmatprep.subr.bf16.mxu0 %v542
        %1032 = vmatpush1.bf16.msra.mxu0 %v541
        %1033 = vmatprep.subr.bf16.mxu0 %v546
        %1034 = vmatpush1.bf16.msra.mxu0 %v545
        %1035 = vmatprep.subr.bf16.mxu0 %v550
        %1036 = vmatpush1.bf16.msra.mxu0 %v549
        %1037 = vmatprep.subr.bf16.mxu0 %v554
        %1038 = vmatpush1.bf16.msra.mxu0 %v553
        %1039 = vmatprep.subr.bf16.mxu0 %v558
        %1040 = vmatpush1.bf16.msra.mxu0 %v557
        %1041 = vmatprep.mubr.bf16.mxu0 %v882
        %1042 = vmatmul.mubr.bf16.gmra.mrb[0].mxu0 %v881
        %v1043 = vpop.f32.mrb[0].mxu0
        %v1044 = vadd.f32 0.0, %v1043
        %v1045 = vpop.f32.mrb[0].mxu0
        %v1046 = vadd.f32 0.0, %v1045
        %v1047 = vpop.f32.mrb[0].mxu0
        %v1048 = vadd.f32 0.0, %v1047
        %v1049 = vpop.f32.mrb[0].mxu0
        %v1050 = vadd.f32 0.0, %v1049
        %1051 = vmatprep.mubr.bf16.mxu0 %v886
        %1052 = vmatmul.mubr.bf16.gmra.mrb[0].mxu0 %v885
        %v1053 = vpop.f32.mrb[0].mxu0
        %v1054 = vadd.f32 0.0, %v1053
        %v1055 = vpop.f32.mrb[0].mxu0
        %v1056 = vadd.f32 0.0, %v1055
        %v1057 = vpop.f32.mrb[0].mxu0
        %v1058 = vadd.f32 0.0, %v1057
        %v1059 = vpop.f32.mrb[0].mxu0
        %v1060 = vadd.f32 0.0, %v1059
        %1061 = vmatprep.mubr.bf16.mxu0 %v890
        %1062 = vmatmul.mubr.bf16.gmra.mrb[0].mxu0 %v889
        %v1063 = vpop.f32.mrb[0].mxu0
        %v1064 = vadd.f32 0.0, %v1063
        %v1065 = vpop.f32.mrb[0].mxu0
        %v1066 = vadd.f32 0.0, %v1065
        %v1067 = vpop.f32.mrb[0].mxu0
        %v1068 = vadd.f32 0.0, %v1067
        %v1069 = vpop.f32.mrb[0].mxu0
        %v1070 = vadd.f32 0.0, %v1069
        %1071 = vmatprep.mubr.bf16.mxu0 %v894
        %1072 = vmatmul.mubr.bf16.gmra.mrb[0].mxu0 %v893
        %v1073 = vpop.f32.mrb[0].mxu0
        %v1074 = vadd.f32 0.0, %v1073
        %v1075 = vpop.f32.mrb[0].mxu0
        %v1076 = vadd.f32 0.0, %v1075
        %v1077 = vpop.f32.mrb[0].mxu0
        %v1078 = vadd.f32 0.0, %v1077
        %v1079 = vpop.f32.mrb[0].mxu0
        %v1080 = vadd.f32 0.0, %v1079
        %1081 = vmatprep.mubr.bf16.mxu0 %v898
        %1082 = vmatmul.mubr.bf16.gmra.mrb[0].mxu0 %v897
        %v1083 = vpop.f32.mrb[0].mxu0
        %v1084 = vadd.f32 0.0, %v1083
        %v1085 = vpop.f32.mrb[0].mxu0
        %v1086 = vadd.f32 0.0, %v1085
        %v1087 = vpop.f32.mrb[0].mxu0
        %v1088 = vadd.f32 0.0, %v1087
        %v1089 = vpop.f32.mrb[0].mxu0
        %v1090 = vadd.f32 0.0, %v1089
        %1091 = vmatprep.mubr.bf16.mxu0 %v902
        %1092 = vmatmul.mubr.bf16.gmra.mrb[0].mxu0 %v901
        %v1093 = vpop.f32.mrb[0].mxu0
        %v1094 = vadd.f32 0.0, %v1093
        %v1095 = vpop.f32.mrb[0].mxu0
        %v1096 = vadd.f32 0.0, %v1095
        %v1097 = vpop.f32.mrb[0].mxu0
        %v1098 = vadd.f32 0.0, %v1097
        %v1099 = vpop.f32.mrb[0].mxu0
        %v1100 = vadd.f32 0.0, %v1099
        %1101 = vmatprep.mubr.bf16.mxu0 %v906
        %1102 = vmatmul.mubr.bf16.gmra.mrb[0].mxu0 %v905
        %v1103 = vpop.f32.mrb[0].mxu0
        %v1104 = vadd.f32 0.0, %v1103
        %v1105 = vpop.f32.mrb[0].mxu0
        %v1106 = vadd.f32 0.0, %v1105
        %v1107 = vpop.f32.mrb[0].mxu0
        %v1108 = vadd.f32 0.0, %v1107
        %v1109 = vpop.f32.mrb[0].mxu0
        %v1110 = vadd.f32 0.0, %v1109
        %1111 = vmatprep.mubr.bf16.mxu0 %v910
        %1112 = vmatmul.mubr.bf16.gmra.mrb[0].mxu0 %v909
        %v1113 = vpop.f32.mrb[0].mxu0
        %v1114 = vadd.f32 0.0, %v1113
        %v1115 = vpop.f32.mrb[0].mxu0
        %v1116 = vadd.f32 0.0, %v1115
        %v1117 = vpop.f32.mrb[0].mxu0
        %v1118 = vadd.f32 0.0, %v1117
        %v1119 = vpop.f32.mrb[0].mxu0
        %v1120 = vadd.f32 0.0, %v1119
        %1121 = vmatprep.mubr.bf16.mxu0 %v914
        %1122 = vmatmul.mubr.bf16.gmra.mrb[0].mxu0 %v913
        %v1123 = vpop.f32.mrb[0].mxu0
        %v1124 = vadd.f32 0.0, %v1123
        %v1125 = vpop.f32.mrb[0].mxu0
        %v1126 = vadd.f32 0.0, %v1125
        %v1127 = vpop.f32.mrb[0].mxu0
        %v1128 = vadd.f32 0.0, %v1127
        %v1129 = vpop.f32.mrb[0].mxu0
        %v1130 = vadd.f32 0.0, %v1129
        %1131 = vmatprep.mubr.bf16.mxu0 %v918
        %1132 = vmatmul.mubr.bf16.gmra.mrb[0].mxu0 %v917
        %v1133 = vpop.f32.mrb[0].mxu0
        %v1134 = vadd.f32 0.0, %v1133
        %v1135 = vpop.f32.mrb[0].mxu0
        %v1136 = vadd.f32 0.0, %v1135
        %v1137 = vpop.f32.mrb[0].mxu0
        %v1138 = vadd.f32 0.0, %v1137
        %v1139 = vpop.f32.mrb[0].mxu0
        %v1140 = vadd.f32 0.0, %v1139
        %1141 = vmatprep.mubr.bf16.mxu0 %v922
        %1142 = vmatmul.mubr.bf16.gmra.mrb[0].mxu0 %v921
        %v1143 = vpop.f32.mrb[0].mxu0
        %v1144 = vadd.f32 0.0, %v1143
        %v1145 = vpop.f32.mrb[0].mxu0
        %v1146 = vadd.f32 0.0, %v1145
        %v1147 = vpop.f32.mrb[0].mxu0
        %v1148 = vadd.f32 0.0, %v1147
        %v1149 = vpop.f32.mrb[0].mxu0
        %v1150 = vadd.f32 0.0, %v1149
        %1151 = vmatprep.mubr.bf16.mxu0 %v926
        %1152 = vmatmul.mubr.bf16.gmra.mrb[0].mxu0 %v925
        %v1153 = vpop.f32.mrb[0].mxu0
        %v1154 = vadd.f32 0.0, %v1153
        %v1155 = vpop.f32.mrb[0].mxu0
        %v1156 = vadd.f32 0.0, %v1155
        %v1157 = vpop.f32.mrb[0].mxu0
        %v1158 = vadd.f32 0.0, %v1157
        %v1159 = vpop.f32.mrb[0].mxu0
        %v1160 = vadd.f32 0.0, %v1159
        %1161 = vmatprep.mubr.bf16.mxu0 %v930
        %1162 = vmatmul.mubr.bf16.gmra.mrb[0].mxu0 %v929
        %v1163 = vpop.f32.mrb[0].mxu0
        %v1164 = vadd.f32 0.0, %v1163
        %v1165 = vpop.f32.mrb[0].mxu0
        %v1166 = vadd.f32 0.0, %v1165
        %v1167 = vpop.f32.mrb[0].mxu0
        %v1168 = vadd.f32 0.0, %v1167
        %v1169 = vpop.f32.mrb[0].mxu0
        %v1170 = vadd.f32 0.0, %v1169
        %1171 = vmatprep.mubr.bf16.mxu0 %v934
        %1172 = vmatmul.mubr.bf16.gmra.mrb[0].mxu0 %v933
        %v1173 = vpop.f32.mrb[0].mxu0
        %v1174 = vadd.f32 0.0, %v1173
        %v1175 = vpop.f32.mrb[0].mxu0
        %v1176 = vadd.f32 0.0, %v1175
        %v1177 = vpop.f32.mrb[0].mxu0
        %v1178 = vadd.f32 0.0, %v1177
        %v1179 = vpop.f32.mrb[0].mxu0
        %v1180 = vadd.f32 0.0, %v1179
        %1181 = vmatprep.mubr.bf16.mxu0 %v938
        %1182 = vmatmul.mubr.bf16.gmra.mrb[0].mxu0 %v937
        %v1183 = vpop.f32.mrb[0].mxu0
        %v1184 = vadd.f32 0.0, %v1183
        %v1185 = vpop.f32.mrb[0].mxu0
        %v1186 = vadd.f32 0.0, %v1185
        %v1187 = vpop.f32.mrb[0].mxu0
        %v1188 = vadd.f32 0.0, %v1187
        %v1189 = vpop.f32.mrb[0].mxu0
        %v1190 = vadd.f32 0.0, %v1189
        %1191 = vmatprep.mubr.bf16.mxu0 %v942
        %1192 = vmatmul.mubr.bf16.gmra.mrb[0].mxu0 %v941
        %v1193 = vpop.f32.mrb[0].mxu0
        %v1194 = vadd.f32 0.0, %v1193
        %v1195 = vpop.f32.mrb[0].mxu0
        %v1196 = vadd.f32 0.0, %v1195
        %v1197 = vpop.f32.mrb[0].mxu0
        %v1198 = vadd.f32 0.0, %v1197
        %v1199 = vpop.f32.mrb[0].mxu0
        %v1200 = vadd.f32 0.0, %v1199
        %1201 = vdwg.mxu0
        %1202 = vmatprep.subr.bf16.mxu0 %v562
        %1203 = vmatpush1.bf16.msra.mxu0 %v561
        %1204 = vmatprep.subr.bf16.mxu0 %v566
        %1205 = vmatpush1.bf16.msra.mxu0 %v565
        %1206 = vmatprep.subr.bf16.mxu0 %v570
        %1207 = vmatpush1.bf16.msra.mxu0 %v569
        %1208 = vmatprep.subr.bf16.mxu0 %v574
        %1209 = vmatpush1.bf16.msra.mxu0 %v573
        %1210 = vmatprep.subr.bf16.mxu0 %v578
        %1211 = vmatpush1.bf16.msra.mxu0 %v577
        %1212 = vmatprep.subr.bf16.mxu0 %v582
        %1213 = vmatpush1.bf16.msra.mxu0 %v581
        %1214 = vmatprep.subr.bf16.mxu0 %v586
        %1215 = vmatpush1.bf16.msra.mxu0 %v585
        %1216 = vmatprep.subr.bf16.mxu0 %v590
        %1217 = vmatpush1.bf16.msra.mxu0 %v589
        %1218 = vmatprep.subr.bf16.mxu0 %v594
        %1219 = vmatpush1.bf16.msra.mxu0 %v593
        %1220 = vmatprep.subr.bf16.mxu0 %v598
        %1221 = vmatpush1.bf16.msra.mxu0 %v597
        %1222 = vmatprep.subr.bf16.mxu0 %v602
        %1223 = vmatpush1.bf16.msra.mxu0 %v601
        %1224 = vmatprep.subr.bf16.mxu0 %v606
        %1225 = vmatpush1.bf16.msra.mxu0 %v605
        %1226 = vmatprep.subr.bf16.mxu0 %v610
        %1227 = vmatpush1.bf16.msra.mxu0 %v609
        %1228 = vmatprep.subr.bf16.mxu0 %v614
        %1229 = vmatpush1.bf16.msra.mxu0 %v613
        %1230 = vmatprep.subr.bf16.mxu0 %v618
        %1231 = vmatpush1.bf16.msra.mxu0 %v617
        %1232 = vmatprep.subr.bf16.mxu0 %v622
        %1233 = vmatpush1.bf16.msra.mxu0 %v621
        %1234 = vmatprep.mubr.bf16.mxu0 %v884
        %1235 = vmatmul.mubr.bf16.gmra.mrb[0].mxu0 %v883
        %v1236 = vpop.f32.mrb[0].mxu0
        %v1237 = vadd.f32 %v1044, %v1236
        %v1238 = vpop.f32.mrb[0].mxu0
        %v1239 = vadd.f32 %v1046, %v1238
        %v1240 = vpop.f32.mrb[0].mxu0
        %v1241 = vadd.f32 %v1048, %v1240
        %v1242 = vpop.f32.mrb[0].mxu0
        %v1243 = vadd.f32 %v1050, %v1242
        %1244 = vmatprep.mubr.bf16.mxu0 %v888
        %1245 = vmatmul.mubr.bf16.gmra.mrb[0].mxu0 %v887
        %v1246 = vpop.f32.mrb[0].mxu0
        %v1247 = vadd.f32 %v1054, %v1246
        %v1248 = vpop.f32.mrb[0].mxu0
        %v1249 = vadd.f32 %v1056, %v1248
        %v1250 = vpop.f32.mrb[0].mxu0
        %v1251 = vadd.f32 %v1058, %v1250
        %v1252 = vpop.f32.mrb[0].mxu0
        %v1253 = vadd.f32 %v1060, %v1252
        %1254 = vmatprep.mubr.bf16.mxu0 %v892
        %1255 = vmatmul.mubr.bf16.gmra.mrb[0].mxu0 %v891
        %v1256 = vpop.f32.mrb[0].mxu0
        %v1257 = vadd.f32 %v1064, %v1256
        %v1258 = vpop.f32.mrb[0].mxu0
        %v1259 = vadd.f32 %v1066, %v1258
        %v1260 = vpop.f32.mrb[0].mxu0
        %v1261 = vadd.f32 %v1068, %v1260
        %v1262 = vpop.f32.mrb[0].mxu0
        %v1263 = vadd.f32 %v1070, %v1262
        %1264 = vmatprep.mubr.bf16.mxu0 %v896
        %1265 = vmatmul.mubr.bf16.gmra.mrb[0].mxu0 %v895
        %v1266 = vpop.f32.mrb[0].mxu0
        %v1267 = vadd.f32 %v1074, %v1266
        %v1268 = vpop.f32.mrb[0].mxu0
        %v1269 = vadd.f32 %v1076, %v1268
        %v1270 = vpop.f32.mrb[0].mxu0
        %v1271 = vadd.f32 %v1078, %v1270
        %v1272 = vpop.f32.mrb[0].mxu0
        %v1273 = vadd.f32 %v1080, %v1272
        %1274 = vmatprep.mubr.bf16.mxu0 %v900
        %1275 = vmatmul.mubr.bf16.gmra.mrb[0].mxu0 %v899
        %v1276 = vpop.f32.mrb[0].mxu0
        %v1277 = vadd.f32 %v1084, %v1276
        %v1278 = vpop.f32.mrb[0].mxu0
        %v1279 = vadd.f32 %v1086, %v1278
        %v1280 = vpop.f32.mrb[0].mxu0
        %v1281 = vadd.f32 %v1088, %v1280
        %v1282 = vpop.f32.mrb[0].mxu0
        %v1283 = vadd.f32 %v1090, %v1282
        %1284 = vmatprep.mubr.bf16.mxu0 %v904
        %1285 = vmatmul.mubr.bf16.gmra.mrb[0].mxu0 %v903
        %v1286 = vpop.f32.mrb[0].mxu0
        %v1287 = vadd.f32 %v1094, %v1286
        %v1288 = vpop.f32.mrb[0].mxu0
        %v1289 = vadd.f32 %v1096, %v1288
        %v1290 = vpop.f32.mrb[0].mxu0
        %v1291 = vadd.f32 %v1098, %v1290
        %v1292 = vpop.f32.mrb[0].mxu0
        %v1293 = vadd.f32 %v1100, %v1292
        %1294 = vmatprep.mubr.bf16.mxu0 %v908
        %1295 = vmatmul.mubr.bf16.gmra.mrb[0].mxu0 %v907
        %v1296 = vpop.f32.mrb[0].mxu0
        %v1297 = vadd.f32 %v1104, %v1296
        %v1298 = vpop.f32.mrb[0].mxu0
        %v1299 = vadd.f32 %v1106, %v1298
        %v1300 = vpop.f32.mrb[0].mxu0
        %v1301 = vadd.f32 %v1108, %v1300
        %v1302 = vpop.f32.mrb[0].mxu0
        %v1303 = vadd.f32 %v1110, %v1302
        %1304 = vmatprep.mubr.bf16.mxu0 %v912
        %1305 = vmatmul.mubr.bf16.gmra.mrb[0].mxu0 %v911
        %v1306 = vpop.f32.mrb[0].mxu0
        %v1307 = vadd.f32 %v1114, %v1306
        %v1308 = vpop.f32.mrb[0].mxu0
        %v1309 = vadd.f32 %v1116, %v1308
        %v1310 = vpop.f32.mrb[0].mxu0
        %v1311 = vadd.f32 %v1118, %v1310
        %v1312 = vpop.f32.mrb[0].mxu0
        %v1313 = vadd.f32 %v1120, %v1312
        %1314 = vmatprep.mubr.bf16.mxu0 %v916
        %1315 = vmatmul.mubr.bf16.gmra.mrb[0].mxu0 %v915
        %v1316 = vpop.f32.mrb[0].mxu0
        %v1317 = vadd.f32 %v1124, %v1316
        %v1318 = vpop.f32.mrb[0].mxu0
        %v1319 = vadd.f32 %v1126, %v1318
        %v1320 = vpop.f32.mrb[0].mxu0
        %v1321 = vadd.f32 %v1128, %v1320
        %v1322 = vpop.f32.mrb[0].mxu0
        %v1323 = vadd.f32 %v1130, %v1322
        %1324 = vmatprep.mubr.bf16.mxu0 %v920
        %1325 = vmatmul.mubr.bf16.gmra.mrb[0].mxu0 %v919
        %v1326 = vpop.f32.mrb[0].mxu0
        %v1327 = vadd.f32 %v1134, %v1326
        %v1328 = vpop.f32.mrb[0].mxu0
        %v1329 = vadd.f32 %v1136, %v1328
        %v1330 = vpop.f32.mrb[0].mxu0
        %v1331 = vadd.f32 %v1138, %v1330
        %v1332 = vpop.f32.mrb[0].mxu0
        %v1333 = vadd.f32 %v1140, %v1332
        %1334 = vmatprep.mubr.bf16.mxu0 %v924
        %1335 = vmatmul.mubr.bf16.gmra.mrb[0].mxu0 %v923
        %v1336 = vpop.f32.mrb[0].mxu0
        %v1337 = vadd.f32 %v1144, %v1336
        %v1338 = vpop.f32.mrb[0].mxu0
        %v1339 = vadd.f32 %v1146, %v1338
        %v1340 = vpop.f32.mrb[0].mxu0
        %v1341 = vadd.f32 %v1148, %v1340
        %v1342 = vpop.f32.mrb[0].mxu0
        %v1343 = vadd.f32 %v1150, %v1342
        %1344 = vmatprep.mubr.bf16.mxu0 %v928
        %1345 = vmatmul.mubr.bf16.gmra.mrb[0].mxu0 %v927
        %v1346 = vpop.f32.mrb[0].mxu0
        %v1347 = vadd.f32 %v1154, %v1346
        %v1348 = vpop.f32.mrb[0].mxu0
        %v1349 = vadd.f32 %v1156, %v1348
        %v1350 = vpop.f32.mrb[0].mxu0
        %v1351 = vadd.f32 %v1158, %v1350
        %v1352 = vpop.f32.mrb[0].mxu0
        %v1353 = vadd.f32 %v1160, %v1352
        %1354 = vmatprep.mubr.bf16.mxu0 %v932
        %1355 = vmatmul.mubr.bf16.gmra.mrb[0].mxu0 %v931
        %v1356 = vpop.f32.mrb[0].mxu0
        %v1357 = vadd.f32 %v1164, %v1356
        %v1358 = vpop.f32.mrb[0].mxu0
        %v1359 = vadd.f32 %v1166, %v1358
        %v1360 = vpop.f32.mrb[0].mxu0
        %v1361 = vadd.f32 %v1168, %v1360
        %v1362 = vpop.f32.mrb[0].mxu0
        %v1363 = vadd.f32 %v1170, %v1362
        %1364 = vmatprep.mubr.bf16.mxu0 %v936
        %1365 = vmatmul.mubr.bf16.gmra.mrb[0].mxu0 %v935
        %v1366 = vpop.f32.mrb[0].mxu0
        %v1367 = vadd.f32 %v1174, %v1366
        %v1368 = vpop.f32.mrb[0].mxu0
        %v1369 = vadd.f32 %v1176, %v1368
        %v1370 = vpop.f32.mrb[0].mxu0
        %v1371 = vadd.f32 %v1178, %v1370
        %v1372 = vpop.f32.mrb[0].mxu0
        %v1373 = vadd.f32 %v1180, %v1372
        %1374 = vmatprep.mubr.bf16.mxu0 %v940
        %1375 = vmatmul.mubr.bf16.gmra.mrb[0].mxu0 %v939
        %v1376 = vpop.f32.mrb[0].mxu0
        %v1377 = vadd.f32 %v1184, %v1376
        %v1378 = vpop.f32.mrb[0].mxu0
        %v1379 = vadd.f32 %v1186, %v1378
        %v1380 = vpop.f32.mrb[0].mxu0
        %v1381 = vadd.f32 %v1188, %v1380
        %v1382 = vpop.f32.mrb[0].mxu0
        %v1383 = vadd.f32 %v1190, %v1382
        %1384 = vmatprep.mubr.bf16.mxu0 %v944
        %1385 = vmatmul.mubr.bf16.gmra.mrb[0].mxu0 %v943
        %v1386 = vpop.f32.mrb[0].mxu0
        %v1387 = vadd.f32 %v1194, %v1386
        %v1388 = vpop.f32.mrb[0].mxu0
        %v1389 = vadd.f32 %v1196, %v1388
        %v1390 = vpop.f32.mrb[0].mxu0
        %v1391 = vadd.f32 %v1198, %v1390
        %v1392 = vpop.f32.mrb[0].mxu0
        %v1393 = vadd.f32 %v1200, %v1392
        %1394 = vdwg.mxu0
        %1395 = vmatprep.subr.bf16.mxu0 %v500
        %1396 = vmatpush1.bf16.msra.mxu0 %v499
        %1397 = vmatprep.subr.bf16.mxu0 %v504
        %1398 = vmatpush1.bf16.msra.mxu0 %v503
        %1399 = vmatprep.subr.bf16.mxu0 %v508
        %1400 = vmatpush1.bf16.msra.mxu0 %v507
        %1401 = vmatprep.subr.bf16.mxu0 %v512
        %1402 = vmatpush1.bf16.msra.mxu0 %v511
        %1403 = vmatprep.subr.bf16.mxu0 %v516
        %1404 = vmatpush1.bf16.msra.mxu0 %v515
        %1405 = vmatprep.subr.bf16.mxu0 %v520
        %1406 = vmatpush1.bf16.msra.mxu0 %v519
        %1407 = vmatprep.subr.bf16.mxu0 %v524
        %1408 = vmatpush1.bf16.msra.mxu0 %v523
        %1409 = vmatprep.subr.bf16.mxu0 %v528
        %1410 = vmatpush1.bf16.msra.mxu0 %v527
        %1411 = vmatprep.subr.bf16.mxu0 %v532
        %1412 = vmatpush1.bf16.msra.mxu0 %v531
        %1413 = vmatprep.subr.bf16.mxu0 %v536
        %1414 = vmatpush1.bf16.msra.mxu0 %v535
        %1415 = vmatprep.subr.bf16.mxu0 %v540
        %1416 = vmatpush1.bf16.msra.mxu0 %v539
        %1417 = vmatprep.subr.bf16.mxu0 %v544
        %1418 = vmatpush1.bf16.msra.mxu0 %v543
        %1419 = vmatprep.subr.bf16.mxu0 %v548
        %1420 = vmatpush1.bf16.msra.mxu0 %v547
        %1421 = vmatprep.subr.bf16.mxu0 %v552
        %1422 = vmatpush1.bf16.msra.mxu0 %v551
        %1423 = vmatprep.subr.bf16.mxu0 %v556
        %1424 = vmatpush1.bf16.msra.mxu0 %v555
        %1425 = vmatprep.subr.bf16.mxu0 %v560
        %1426 = vmatpush1.bf16.msra.mxu0 %v559
        %1427 = vmatprep.mubr.bf16.mxu0 %v882
        %1428 = vmatmul.mubr.bf16.gmra.mrb[0].mxu0 %v881
        %v1429 = vpop.f32.mrb[0].mxu0
        %v1430 = vadd.f32 0.0, %v1429
        %v1431 = vpop.f32.mrb[0].mxu0
        %v1432 = vadd.f32 0.0, %v1431
        %v1433 = vpop.f32.mrb[0].mxu0
        %v1434 = vadd.f32 0.0, %v1433
        %v1435 = vpop.f32.mrb[0].mxu0
        %v1436 = vadd.f32 0.0, %v1435
        %1437 = vmatprep.mubr.bf16.mxu0 %v886
        %1438 = vmatmul.mubr.bf16.gmra.mrb[0].mxu0 %v885
        %v1439 = vpop.f32.mrb[0].mxu0
        %v1440 = vadd.f32 0.0, %v1439
        %v1441 = vpop.f32.mrb[0].mxu0
        %v1442 = vadd.f32 0.0, %v1441
        %v1443 = vpop.f32.mrb[0].mxu0
        %v1444 = vadd.f32 0.0, %v1443
        %v1445 = vpop.f32.mrb[0].mxu0
        %v1446 = vadd.f32 0.0, %v1445
        %1447 = vmatprep.mubr.bf16.mxu0 %v890
        %1448 = vmatmul.mubr.bf16.gmra.mrb[0].mxu0 %v889
        %v1449 = vpop.f32.mrb[0].mxu0
        %v1450 = vadd.f32 0.0, %v1449
        %v1451 = vpop.f32.mrb[0].mxu0
        %v1452 = vadd.f32 0.0, %v1451
        %v1453 = vpop.f32.mrb[0].mxu0
        %v1454 = vadd.f32 0.0, %v1453
        %v1455 = vpop.f32.mrb[0].mxu0
        %v1456 = vadd.f32 0.0, %v1455
        %1457 = vmatprep.mubr.bf16.mxu0 %v894
        %1458 = vmatmul.mubr.bf16.gmra.mrb[0].mxu0 %v893
        %v1459 = vpop.f32.mrb[0].mxu0
        %v1460 = vadd.f32 0.0, %v1459
        %v1461 = vpop.f32.mrb[0].mxu0
        %v1462 = vadd.f32 0.0, %v1461
        %v1463 = vpop.f32.mrb[0].mxu0
        %v1464 = vadd.f32 0.0, %v1463
        %v1465 = vpop.f32.mrb[0].mxu0
        %v1466 = vadd.f32 0.0, %v1465
        %1467 = vmatprep.mubr.bf16.mxu0 %v898
        %1468 = vmatmul.mubr.bf16.gmra.mrb[0].mxu0 %v897
        %v1469 = vpop.f32.mrb[0].mxu0
        %v1470 = vadd.f32 0.0, %v1469
        %v1471 = vpop.f32.mrb[0].mxu0
        %v1472 = vadd.f32 0.0, %v1471
        %v1473 = vpop.f32.mrb[0].mxu0
        %v1474 = vadd.f32 0.0, %v1473
        %v1475 = vpop.f32.mrb[0].mxu0
        %v1476 = vadd.f32 0.0, %v1475
        %1477 = vmatprep.mubr.bf16.mxu0 %v902
        %1478 = vmatmul.mubr.bf16.gmra.mrb[0].mxu0 %v901
        %v1479 = vpop.f32.mrb[0].mxu0
        %v1480 = vadd.f32 0.0, %v1479
        %v1481 = vpop.f32.mrb[0].mxu0
        %v1482 = vadd.f32 0.0, %v1481
        %v1483 = vpop.f32.mrb[0].mxu0
        %v1484 = vadd.f32 0.0, %v1483
        %v1485 = vpop.f32.mrb[0].mxu0
        %v1486 = vadd.f32 0.0, %v1485
        %1487 = vmatprep.mubr.bf16.mxu0 %v906
        %1488 = vmatmul.mubr.bf16.gmra.mrb[0].mxu0 %v905
        %v1489 = vpop.f32.mrb[0].mxu0
        %v1490 = vadd.f32 0.0, %v1489
        %v1491 = vpop.f32.mrb[0].mxu0
        %v1492 = vadd.f32 0.0, %v1491
        %v1493 = vpop.f32.mrb[0].mxu0
        %v1494 = vadd.f32 0.0, %v1493
        %v1495 = vpop.f32.mrb[0].mxu0
        %v1496 = vadd.f32 0.0, %v1495
        %1497 = vmatprep.mubr.bf16.mxu0 %v910
        %1498 = vmatmul.mubr.bf16.gmra.mrb[0].mxu0 %v909
        %v1499 = vpop.f32.mrb[0].mxu0
        %v1500 = vadd.f32 0.0, %v1499
        %v1501 = vpop.f32.mrb[0].mxu0
        %v1502 = vadd.f32 0.0, %v1501
        %v1503 = vpop.f32.mrb[0].mxu0
        %v1504 = vadd.f32 0.0, %v1503
        %v1505 = vpop.f32.mrb[0].mxu0
        %v1506 = vadd.f32 0.0, %v1505
        %1507 = vmatprep.mubr.bf16.mxu0 %v914
        %1508 = vmatmul.mubr.bf16.gmra.mrb[0].mxu0 %v913
        %v1509 = vpop.f32.mrb[0].mxu0
        %v1510 = vadd.f32 0.0, %v1509
        %v1511 = vpop.f32.mrb[0].mxu0
        %v1512 = vadd.f32 0.0, %v1511
        %v1513 = vpop.f32.mrb[0].mxu0
        %v1514 = vadd.f32 0.0, %v1513
        %v1515 = vpop.f32.mrb[0].mxu0
        %v1516 = vadd.f32 0.0, %v1515
        %1517 = vmatprep.mubr.bf16.mxu0 %v918
        %1518 = vmatmul.mubr.bf16.gmra.mrb[0].mxu0 %v917
        %v1519 = vpop.f32.mrb[0].mxu0
        %v1520 = vadd.f32 0.0, %v1519
        %v1521 = vpop.f32.mrb[0].mxu0
        %v1522 = vadd.f32 0.0, %v1521
        %v1523 = vpop.f32.mrb[0].mxu0
        %v1524 = vadd.f32 0.0, %v1523
        %v1525 = vpop.f32.mrb[0].mxu0
        %v1526 = vadd.f32 0.0, %v1525
        %1527 = vmatprep.mubr.bf16.mxu0 %v922
        %1528 = vmatmul.mubr.bf16.gmra.mrb[0].mxu0 %v921
        %v1529 = vpop.f32.mrb[0].mxu0
        %v1530 = vadd.f32 0.0, %v1529
        %v1531 = vpop.f32.mrb[0].mxu0
        %v1532 = vadd.f32 0.0, %v1531
        %v1533 = vpop.f32.mrb[0].mxu0
        %v1534 = vadd.f32 0.0, %v1533
        %v1535 = vpop.f32.mrb[0].mxu0
        %v1536 = vadd.f32 0.0, %v1535
        %1537 = vmatprep.mubr.bf16.mxu0 %v926
        %1538 = vmatmul.mubr.bf16.gmra.mrb[0].mxu0 %v925
        %v1539 = vpop.f32.mrb[0].mxu0
        %v1540 = vadd.f32 0.0, %v1539
        %v1541 = vpop.f32.mrb[0].mxu0
        %v1542 = vadd.f32 0.0, %v1541
        %v1543 = vpop.f32.mrb[0].mxu0
        %v1544 = vadd.f32 0.0, %v1543
        %v1545 = vpop.f32.mrb[0].mxu0
        %v1546 = vadd.f32 0.0, %v1545
        %1547 = vmatprep.mubr.bf16.mxu0 %v930
        %1548 = vmatmul.mubr.bf16.gmra.mrb[0].mxu0 %v929
        %v1549 = vpop.f32.mrb[0].mxu0
        %v1550 = vadd.f32 0.0, %v1549
        %v1551 = vpop.f32.mrb[0].mxu0
        %v1552 = vadd.f32 0.0, %v1551
        %v1553 = vpop.f32.mrb[0].mxu0
        %v1554 = vadd.f32 0.0, %v1553
        %v1555 = vpop.f32.mrb[0].mxu0
        %v1556 = vadd.f32 0.0, %v1555
        %1557 = vmatprep.mubr.bf16.mxu0 %v934
        %1558 = vmatmul.mubr.bf16.gmra.mrb[0].mxu0 %v933
        %v1559 = vpop.f32.mrb[0].mxu0
        %v1560 = vadd.f32 0.0, %v1559
        %v1561 = vpop.f32.mrb[0].mxu0
        %v1562 = vadd.f32 0.0, %v1561
        %v1563 = vpop.f32.mrb[0].mxu0
        %v1564 = vadd.f32 0.0, %v1563
        %v1565 = vpop.f32.mrb[0].mxu0
        %v1566 = vadd.f32 0.0, %v1565
        %1567 = vmatprep.mubr.bf16.mxu0 %v938
        %1568 = vmatmul.mubr.bf16.gmra.mrb[0].mxu0 %v937
        %v1569 = vpop.f32.mrb[0].mxu0
        %v1570 = vadd.f32 0.0, %v1569
        %v1571 = vpop.f32.mrb[0].mxu0
        %v1572 = vadd.f32 0.0, %v1571
        %v1573 = vpop.f32.mrb[0].mxu0
        %v1574 = vadd.f32 0.0, %v1573
        %v1575 = vpop.f32.mrb[0].mxu0
        %v1576 = vadd.f32 0.0, %v1575
        %1577 = vmatprep.mubr.bf16.mxu0 %v942
        %1578 = vmatmul.mubr.bf16.gmra.mrb[0].mxu0 %v941
        %v1579 = vpop.f32.mrb[0].mxu0
        %v1580 = vadd.f32 0.0, %v1579
        %v1581 = vpop.f32.mrb[0].mxu0
        %v1582 = vadd.f32 0.0, %v1581
        %v1583 = vpop.f32.mrb[0].mxu0
        %v1584 = vadd.f32 0.0, %v1583
        %v1585 = vpop.f32.mrb[0].mxu0
        %v1586 = vadd.f32 0.0, %v1585
        %1587 = vdwg.mxu0
        %1588 = vmatprep.subr.bf16.mxu0 %v564
        %1589 = vmatpush1.bf16.msra.mxu0 %v563
        %1590 = vmatprep.subr.bf16.mxu0 %v568
        %1591 = vmatpush1.bf16.msra.mxu0 %v567
        %1592 = vmatprep.subr.bf16.mxu0 %v572
        %1593 = vmatpush1.bf16.msra.mxu0 %v571
        %1594 = vmatprep.subr.bf16.mxu0 %v576
        %1595 = vmatpush1.bf16.msra.mxu0 %v575
        %1596 = vmatprep.subr.bf16.mxu0 %v580
        %1597 = vmatpush1.bf16.msra.mxu0 %v579
        %1598 = vmatprep.subr.bf16.mxu0 %v584
        %1599 = vmatpush1.bf16.msra.mxu0 %v583
        %1600 = vmatprep.subr.bf16.mxu0 %v588
        %1601 = vmatpush1.bf16.msra.mxu0 %v587
        %1602 = vmatprep.subr.bf16.mxu0 %v592
        %1603 = vmatpush1.bf16.msra.mxu0 %v591
        %1604 = vmatprep.subr.bf16.mxu0 %v596
        %1605 = vmatpush1.bf16.msra.mxu0 %v595
        %1606 = vmatprep.subr.bf16.mxu0 %v600
        %1607 = vmatpush1.bf16.msra.mxu0 %v599
        %1608 = vmatprep.subr.bf16.mxu0 %v604
        %1609 = vmatpush1.bf16.msra.mxu0 %v603
        %1610 = vmatprep.subr.bf16.mxu0 %v608
        %1611 = vmatpush1.bf16.msra.mxu0 %v607
        %1612 = vmatprep.subr.bf16.mxu0 %v612
        %1613 = vmatpush1.bf16.msra.mxu0 %v611
        %1614 = vmatprep.subr.bf16.mxu0 %v616
        %1615 = vmatpush1.bf16.msra.mxu0 %v615
        %1616 = vmatprep.subr.bf16.mxu0 %v620
        %1617 = vmatpush1.bf16.msra.mxu0 %v619
        %1618 = vmatprep.subr.bf16.mxu0 %v624
        %1619 = vmatpush1.bf16.msra.mxu0 %v623
        %1620 = vmatprep.mubr.bf16.mxu0 %v884
        %1621 = vmatmul.mubr.bf16.gmra.mrb[0].mxu0 %v883
        %v1622 = vpop.f32.mrb[0].mxu0
        %v1623 = vadd.f32 %v1430, %v1622
        %v1624 = vpop.f32.mrb[0].mxu0
        %v1625 = vadd.f32 %v1432, %v1624
        %v1626 = vpop.f32.mrb[0].mxu0
        %v1627 = vadd.f32 %v1434, %v1626
        %v1628 = vpop.f32.mrb[0].mxu0
        %v1629 = vadd.f32 %v1436, %v1628
        %1630 = vmatprep.mubr.bf16.mxu0 %v888
        %1631 = vmatmul.mubr.bf16.gmra.mrb[0].mxu0 %v887
        %v1632 = vpop.f32.mrb[0].mxu0
        %v1633 = vadd.f32 %v1440, %v1632
        %v1634 = vpop.f32.mrb[0].mxu0
        %v1635 = vadd.f32 %v1442, %v1634
        %v1636 = vpop.f32.mrb[0].mxu0
        %v1637 = vadd.f32 %v1444, %v1636
        %v1638 = vpop.f32.mrb[0].mxu0
        %v1639 = vadd.f32 %v1446, %v1638
        %1640 = vmatprep.mubr.bf16.mxu0 %v892
        %1641 = vmatmul.mubr.bf16.gmra.mrb[0].mxu0 %v891
        %v1642 = vpop.f32.mrb[0].mxu0
        %v1643 = vadd.f32 %v1450, %v1642
        %v1644 = vpop.f32.mrb[0].mxu0
        %v1645 = vadd.f32 %v1452, %v1644
        %v1646 = vpop.f32.mrb[0].mxu0
        %v1647 = vadd.f32 %v1454, %v1646
        %v1648 = vpop.f32.mrb[0].mxu0
        %v1649 = vadd.f32 %v1456, %v1648
        %1650 = vmatprep.mubr.bf16.mxu0 %v896
        %1651 = vmatmul.mubr.bf16.gmra.mrb[0].mxu0 %v895
        %v1652 = vpop.f32.mrb[0].mxu0
        %v1653 = vadd.f32 %v1460, %v1652
        %v1654 = vpop.f32.mrb[0].mxu0
        %v1655 = vadd.f32 %v1462, %v1654
        %v1656 = vpop.f32.mrb[0].mxu0
        %v1657 = vadd.f32 %v1464, %v1656
        %v1658 = vpop.f32.mrb[0].mxu0
        %v1659 = vadd.f32 %v1466, %v1658
        %1660 = vmatprep.mubr.bf16.mxu0 %v900
        %1661 = vmatmul.mubr.bf16.gmra.mrb[0].mxu0 %v899
        %v1662 = vpop.f32.mrb[0].mxu0
        %v1663 = vadd.f32 %v1470, %v1662
        %v1664 = vpop.f32.mrb[0].mxu0
        %v1665 = vadd.f32 %v1472, %v1664
        %v1666 = vpop.f32.mrb[0].mxu0
        %v1667 = vadd.f32 %v1474, %v1666
        %v1668 = vpop.f32.mrb[0].mxu0
        %v1669 = vadd.f32 %v1476, %v1668
        %1670 = vmatprep.mubr.bf16.mxu0 %v904
        %1671 = vmatmul.mubr.bf16.gmra.mrb[0].mxu0 %v903
        %v1672 = vpop.f32.mrb[0].mxu0
        %v1673 = vadd.f32 %v1480, %v1672
        %v1674 = vpop.f32.mrb[0].mxu0
        %v1675 = vadd.f32 %v1482, %v1674
        %v1676 = vpop.f32.mrb[0].mxu0
        %v1677 = vadd.f32 %v1484, %v1676
        %v1678 = vpop.f32.mrb[0].mxu0
        %v1679 = vadd.f32 %v1486, %v1678
        %1680 = vmatprep.mubr.bf16.mxu0 %v908
        %1681 = vmatmul.mubr.bf16.gmra.mrb[0].mxu0 %v907
        %v1682 = vpop.f32.mrb[0].mxu0
        %v1683 = vadd.f32 %v1490, %v1682
        %v1684 = vpop.f32.mrb[0].mxu0
        %v1685 = vadd.f32 %v1492, %v1684
        %v1686 = vpop.f32.mrb[0].mxu0
        %v1687 = vadd.f32 %v1494, %v1686
        %v1688 = vpop.f32.mrb[0].mxu0
        %v1689 = vadd.f32 %v1496, %v1688
        %1690 = vmatprep.mubr.bf16.mxu0 %v912
        %1691 = vmatmul.mubr.bf16.gmra.mrb[0].mxu0 %v911
        %v1692 = vpop.f32.mrb[0].mxu0
        %v1693 = vadd.f32 %v1500, %v1692
        %v1694 = vpop.f32.mrb[0].mxu0
        %v1695 = vadd.f32 %v1502, %v1694
        %v1696 = vpop.f32.mrb[0].mxu0
        %v1697 = vadd.f32 %v1504, %v1696
        %v1698 = vpop.f32.mrb[0].mxu0
        %v1699 = vadd.f32 %v1506, %v1698
        %1700 = vmatprep.mubr.bf16.mxu0 %v916
        %1701 = vmatmul.mubr.bf16.gmra.mrb[0].mxu0 %v915
        %v1702 = vpop.f32.mrb[0].mxu0
        %v1703 = vadd.f32 %v1510, %v1702
        %v1704 = vpop.f32.mrb[0].mxu0
        %v1705 = vadd.f32 %v1512, %v1704
        %v1706 = vpop.f32.mrb[0].mxu0
        %v1707 = vadd.f32 %v1514, %v1706
        %v1708 = vpop.f32.mrb[0].mxu0
        %v1709 = vadd.f32 %v1516, %v1708
        %1710 = vmatprep.mubr.bf16.mxu0 %v920
        %1711 = vmatmul.mubr.bf16.gmra.mrb[0].mxu0 %v919
        %v1712 = vpop.f32.mrb[0].mxu0
        %v1713 = vadd.f32 %v1520, %v1712
        %v1714 = vpop.f32.mrb[0].mxu0
        %v1715 = vadd.f32 %v1522, %v1714
        %v1716 = vpop.f32.mrb[0].mxu0
        %v1717 = vadd.f32 %v1524, %v1716
        %v1718 = vpop.f32.mrb[0].mxu0
        %v1719 = vadd.f32 %v1526, %v1718
        %1720 = vmatprep.mubr.bf16.mxu0 %v924
        %1721 = vmatmul.mubr.bf16.gmra.mrb[0].mxu0 %v923
        %v1722 = vpop.f32.mrb[0].mxu0
        %v1723 = vadd.f32 %v1530, %v1722
        %v1724 = vpop.f32.mrb[0].mxu0
        %v1725 = vadd.f32 %v1532, %v1724
        %v1726 = vpop.f32.mrb[0].mxu0
        %v1727 = vadd.f32 %v1534, %v1726
        %v1728 = vpop.f32.mrb[0].mxu0
        %v1729 = vadd.f32 %v1536, %v1728
        %1730 = vmatprep.mubr.bf16.mxu0 %v928
        %1731 = vmatmul.mubr.bf16.gmra.mrb[0].mxu0 %v927
        %v1732 = vpop.f32.mrb[0].mxu0
        %v1733 = vadd.f32 %v1540, %v1732
        %v1734 = vpop.f32.mrb[0].mxu0
        %v1735 = vadd.f32 %v1542, %v1734
        %v1736 = vpop.f32.mrb[0].mxu0
        %v1737 = vadd.f32 %v1544, %v1736
        %v1738 = vpop.f32.mrb[0].mxu0
        %v1739 = vadd.f32 %v1546, %v1738
        %1740 = vmatprep.mubr.bf16.mxu0 %v932
        %1741 = vmatmul.mubr.bf16.gmra.mrb[0].mxu0 %v931
        %v1742 = vpop.f32.mrb[0].mxu0
        %v1743 = vadd.f32 %v1550, %v1742
        %v1744 = vpop.f32.mrb[0].mxu0
        %v1745 = vadd.f32 %v1552, %v1744
        %v1746 = vpop.f32.mrb[0].mxu0
        %v1747 = vadd.f32 %v1554, %v1746
        %v1748 = vpop.f32.mrb[0].mxu0
        %v1749 = vadd.f32 %v1556, %v1748
        %1750 = vmatprep.mubr.bf16.mxu0 %v936
        %1751 = vmatmul.mubr.bf16.gmra.mrb[0].mxu0 %v935
        %v1752 = vpop.f32.mrb[0].mxu0
        %v1753 = vadd.f32 %v1560, %v1752
        %v1754 = vpop.f32.mrb[0].mxu0
        %v1755 = vadd.f32 %v1562, %v1754
        %v1756 = vpop.f32.mrb[0].mxu0
        %v1757 = vadd.f32 %v1564, %v1756
        %v1758 = vpop.f32.mrb[0].mxu0
        %v1759 = vadd.f32 %v1566, %v1758
        %1760 = vmatprep.mubr.bf16.mxu0 %v940
        %1761 = vmatmul.mubr.bf16.gmra.mrb[0].mxu0 %v939
        %v1762 = vpop.f32.mrb[0].mxu0
        %v1763 = vadd.f32 %v1570, %v1762
        %v1764 = vpop.f32.mrb[0].mxu0
        %v1765 = vadd.f32 %v1572, %v1764
        %v1766 = vpop.f32.mrb[0].mxu0
        %v1767 = vadd.f32 %v1574, %v1766
        %v1768 = vpop.f32.mrb[0].mxu0
        %v1769 = vadd.f32 %v1576, %v1768
        %1770 = vmatprep.mubr.bf16.mxu0 %v944
        %1771 = vmatmul.mubr.bf16.gmra.mrb[0].mxu0 %v943
        %v1772 = vpop.f32.mrb[0].mxu0
        %v1773 = vadd.f32 %v1580, %v1772
        %v1774 = vpop.f32.mrb[0].mxu0
        %v1775 = vadd.f32 %v1582, %v1774
        %v1776 = vpop.f32.mrb[0].mxu0
        %v1777 = vadd.f32 %v1584, %v1776
        %v1778 = vpop.f32.mrb[0].mxu0
        %v1779 = vadd.f32 %v1586, %v1778
        %1780 = vdwg.mxu0
        %v1781 = vpack.c.bf16 %v1241, %v1237
        %v1782 = vpack.c.bf16 %v1243, %v1239
        %v1783 = vpack.c.bf16 %v1627, %v1623
        %v1784 = vpack.c.bf16 %v1629, %v1625
        %v1785 = vpack.c.bf16 %v1251, %v1247
        %v1786 = vpack.c.bf16 %v1253, %v1249
        %v1787 = vpack.c.bf16 %v1637, %v1633
        %v1788 = vpack.c.bf16 %v1639, %v1635
        %v1789 = vpack.c.bf16 %v1261, %v1257
        %v1790 = vpack.c.bf16 %v1263, %v1259
        %v1791 = vpack.c.bf16 %v1647, %v1643
        %v1792 = vpack.c.bf16 %v1649, %v1645
        %v1793 = vpack.c.bf16 %v1271, %v1267
        %v1794 = vpack.c.bf16 %v1273, %v1269
        %v1795 = vpack.c.bf16 %v1657, %v1653
        %v1796 = vpack.c.bf16 %v1659, %v1655
        %v1797 = vpack.c.bf16 %v1281, %v1277
        %v1798 = vpack.c.bf16 %v1283, %v1279
        %v1799 = vpack.c.bf16 %v1667, %v1663
        %v1800 = vpack.c.bf16 %v1669, %v1665
        %v1801 = vpack.c.bf16 %v1291, %v1287
        %v1802 = vpack.c.bf16 %v1293, %v1289
        %v1803 = vpack.c.bf16 %v1677, %v1673
        %v1804 = vpack.c.bf16 %v1679, %v1675
        %v1805 = vpack.c.bf16 %v1301, %v1297
        %v1806 = vpack.c.bf16 %v1303, %v1299
        %v1807 = vpack.c.bf16 %v1687, %v1683
        %v1808 = vpack.c.bf16 %v1689, %v1685
        %v1809 = vpack.c.bf16 %v1311, %v1307
        %v1810 = vpack.c.bf16 %v1313, %v1309
        %v1811 = vpack.c.bf16 %v1697, %v1693
        %v1812 = vpack.c.bf16 %v1699, %v1695
        %v1813 = vpack.c.bf16 %v1321, %v1317
        %v1814 = vpack.c.bf16 %v1323, %v1319
        %v1815 = vpack.c.bf16 %v1707, %v1703
        %v1816 = vpack.c.bf16 %v1709, %v1705
        %v1817 = vpack.c.bf16 %v1331, %v1327
        %v1818 = vpack.c.bf16 %v1333, %v1329
        %v1819 = vpack.c.bf16 %v1717, %v1713
        %v1820 = vpack.c.bf16 %v1719, %v1715
        %v1821 = vpack.c.bf16 %v1341, %v1337
        %v1822 = vpack.c.bf16 %v1343, %v1339
        %v1823 = vpack.c.bf16 %v1727, %v1723
        %v1824 = vpack.c.bf16 %v1729, %v1725
        %v1825 = vpack.c.bf16 %v1351, %v1347
        %v1826 = vpack.c.bf16 %v1353, %v1349
        %v1827 = vpack.c.bf16 %v1737, %v1733
        %v1828 = vpack.c.bf16 %v1739, %v1735
        %v1829 = vpack.c.bf16 %v1361, %v1357
        %v1830 = vpack.c.bf16 %v1363, %v1359
        %v1831 = vpack.c.bf16 %v1747, %v1743
        %v1832 = vpack.c.bf16 %v1749, %v1745
        %v1833 = vpack.c.bf16 %v1371, %v1367
        %v1834 = vpack.c.bf16 %v1373, %v1369
        %v1835 = vpack.c.bf16 %v1757, %v1753
        %v1836 = vpack.c.bf16 %v1759, %v1755
        %v1837 = vpack.c.bf16 %v1381, %v1377
        %v1838 = vpack.c.bf16 %v1383, %v1379
        %v1839 = vpack.c.bf16 %v1767, %v1763
        %v1840 = vpack.c.bf16 %v1769, %v1765
        %v1841 = vpack.c.bf16 %v1391, %v1387
        %v1842 = vpack.c.bf16 %v1393, %v1389
        %v1843 = vpack.c.bf16 %v1777, %v1773
        %v1844 = vpack.c.bf16 %v1779, %v1775
        %1845 = vst [vmem:[#allocation2] sm:$0xff] %v1781
        %1846 = vst [vmem:[#allocation2 + $0x8] sm:$0xff] %v1782
        %1847 = vst [vmem:[#allocation2 + $0x10] sm:$0xff] %v1783
        %1848 = vst [vmem:[#allocation2 + $0x18] sm:$0xff] %v1784
        %1849 = vst [vmem:[#allocation2 + $0x20] sm:$0xff] %v1785
        %1850 = vst [vmem:[#allocation2 + $0x28] sm:$0xff] %v1786
        %1851 = vst [vmem:[#allocation2 + $0x30] sm:$0xff] %v1787
        %1852 = vst [vmem:[#allocation2 + $0x38] sm:$0xff] %v1788
        %1853 = vst [vmem:[#allocation2 + $0x40] sm:$0xff] %v1789
        %1854 = vst [vmem:[#allocation2 + $0x48] sm:$0xff] %v1790
        %1855 = vst [vmem:[#allocation2 + $0x50] sm:$0xff] %v1791
        %1856 = vst [vmem:[#allocation2 + $0x58] sm:$0xff] %v1792
        %1857 = vst [vmem:[#allocation2 + $0x60] sm:$0xff] %v1793
        %1858 = vst [vmem:[#allocation2 + $0x68] sm:$0xff] %v1794
        %1859 = vst [vmem:[#allocation2 + $0x70] sm:$0xff] %v1795
        %1860 = vst [vmem:[#allocation2 + $0x78] sm:$0xff] %v1796
        %1861 = vst [vmem:[#allocation2 + $0x80] sm:$0xff] %v1797
        %1862 = vst [vmem:[#allocation2 + $0x88] sm:$0xff] %v1798
        %1863 = vst [vmem:[#allocation2 + $0x90] sm:$0xff] %v1799
        %1864 = vst [vmem:[#allocation2 + $0x98] sm:$0xff] %v1800
        %1865 = vst [vmem:[#allocation2 + $0xa0] sm:$0xff] %v1801
        %1866 = vst [vmem:[#allocation2 + $0xa8] sm:$0xff] %v1802
        %1867 = vst [vmem:[#allocation2 + $0xb0] sm:$0xff] %v1803
        %1868 = vst [vmem:[#allocation2 + $0xb8] sm:$0xff] %v1804
        %1869 = vst [vmem:[#allocation2 + $0xc0] sm:$0xff] %v1805
        %1870 = vst [vmem:[#allocation2 + $0xc8] sm:$0xff] %v1806
        %1871 = vst [vmem:[#allocation2 + $0xd0] sm:$0xff] %v1807
        %1872 = vst [vmem:[#allocation2 + $0xd8] sm:$0xff] %v1808
        %1873 = vst [vmem:[#allocation2 + $0xe0] sm:$0xff] %v1809
        %1874 = vst [vmem:[#allocation2 + $0xe8] sm:$0xff] %v1810
        %1875 = vst [vmem:[#allocation2 + $0xf0] sm:$0xff] %v1811
        %1876 = vst [vmem:[#allocation2 + $0xf8] sm:$0xff] %v1812
        %1877 = vst [vmem:[#allocation2 + $0x100] sm:$0xff] %v1813
        %1878 = vst [vmem:[#allocation2 + $0x108] sm:$0xff] %v1814
        %1879 = vst [vmem:[#allocation2 + $0x110] sm:$0xff] %v1815
        %1880 = vst [vmem:[#allocation2 + $0x118] sm:$0xff] %v1816
        %1881 = vst [vmem:[#allocation2 + $0x120] sm:$0xff] %v1817
        %1882 = vst [vmem:[#allocation2 + $0x128] sm:$0xff] %v1818
        %1883 = vst [vmem:[#allocation2 + $0x130] sm:$0xff] %v1819
        %1884 = vst [vmem:[#allocation2 + $0x138] sm:$0xff] %v1820
        %1885 = vst [vmem:[#allocation2 + $0x140] sm:$0xff] %v1821
        %1886 = vst [vmem:[#allocation2 + $0x148] sm:$0xff] %v1822
        %1887 = vst [vmem:[#allocation2 + $0x150] sm:$0xff] %v1823
        %1888 = vst [vmem:[#allocation2 + $0x158] sm:$0xff] %v1824
        %1889 = vst [vmem:[#allocation2 + $0x160] sm:$0xff] %v1825
        %1890 = vst [vmem:[#allocation2 + $0x168] sm:$0xff] %v1826
        %1891 = vst [vmem:[#allocation2 + $0x170] sm:$0xff] %v1827
        %1892 = vst [vmem:[#allocation2 + $0x178] sm:$0xff] %v1828
        %1893 = vst [vmem:[#allocation2 + $0x180] sm:$0xff] %v1829
        %1894 = vst [vmem:[#allocation2 + $0x188] sm:$0xff] %v1830
        %1895 = vst [vmem:[#allocation2 + $0x190] sm:$0xff] %v1831
        %1896 = vst [vmem:[#allocation2 + $0x198] sm:$0xff] %v1832
        %1897 = vst [vmem:[#allocation2 + $0x1a0] sm:$0xff] %v1833
        %1898 = vst [vmem:[#allocation2 + $0x1a8] sm:$0xff] %v1834
        %1899 = vst [vmem:[#allocation2 + $0x1b0] sm:$0xff] %v1835
        %1900 = vst [vmem:[#allocation2 + $0x1b8] sm:$0xff] %v1836
        %1901 = vst [vmem:[#allocation2 + $0x1c0] sm:$0xff] %v1837
        %1902 = vst [vmem:[#allocation2 + $0x1c8] sm:$0xff] %v1838
        %1903 = vst [vmem:[#allocation2 + $0x1d0] sm:$0xff] %v1839
        %1904 = vst [vmem:[#allocation2 + $0x1d8] sm:$0xff] %v1840
        %1905 = vst [vmem:[#allocation2 + $0x1e0] sm:$0xff] %v1841
        %1906 = vst [vmem:[#allocation2 + $0x1e8] sm:$0xff] %v1842
        %1907 = vst [vmem:[#allocation2 + $0x1f0] sm:$0xff] %v1843
        %1908 = vst [vmem:[#allocation2 + $0x1f8] sm:$0xff] %v1844
        %v1909 = vld [vmem:[#allocation2] sm:$0xff]
        %v1910 = vld [vmem:[#allocation2 + $0x8] sm:$0xff]
        %v1911 = vld [vmem:[#allocation2 + $0x10] sm:$0xff]
        %v1912 = vld [vmem:[#allocation2 + $0x18] sm:$0xff]
        %v1913 = vld [vmem:[#allocation2 + $0x20] sm:$0xff]
        %v1914 = vld [vmem:[#allocation2 + $0x28] sm:$0xff]
        %v1915 = vld [vmem:[#allocation2 + $0x30] sm:$0xff]
        %v1916 = vld [vmem:[#allocation2 + $0x38] sm:$0xff]
        %v1917 = vld [vmem:[#allocation2 + $0x40] sm:$0xff]
        %v1918 = vld [vmem:[#allocation2 + $0x48] sm:$0xff]
        %v1919 = vld [vmem:[#allocation2 + $0x50] sm:$0xff]
        %v1920 = vld [vmem:[#allocation2 + $0x58] sm:$0xff]
        %v1921 = vld [vmem:[#allocation2 + $0x60] sm:$0xff]
        %v1922 = vld [vmem:[#allocation2 + $0x68] sm:$0xff]
        %v1923 = vld [vmem:[#allocation2 + $0x70] sm:$0xff]
        %v1924 = vld [vmem:[#allocation2 + $0x78] sm:$0xff]
        %v1925 = vld [vmem:[#allocation2 + $0x80] sm:$0xff]
        %v1926 = vld [vmem:[#allocation2 + $0x88] sm:$0xff]
        %v1927 = vld [vmem:[#allocation2 + $0x90] sm:$0xff]
        %v1928 = vld [vmem:[#allocation2 + $0x98] sm:$0xff]
        %v1929 = vld [vmem:[#allocation2 + $0xa0] sm:$0xff]
        %v1930 = vld [vmem:[#allocation2 + $0xa8] sm:$0xff]
        %v1931 = vld [vmem:[#allocation2 + $0xb0] sm:$0xff]
        %v1932 = vld [vmem:[#allocation2 + $0xb8] sm:$0xff]
        %v1933 = vld [vmem:[#allocation2 + $0xc0] sm:$0xff]
        %v1934 = vld [vmem:[#allocation2 + $0xc8] sm:$0xff]
        %v1935 = vld [vmem:[#allocation2 + $0xd0] sm:$0xff]
        %v1936 = vld [vmem:[#allocation2 + $0xd8] sm:$0xff]
        %v1937 = vld [vmem:[#allocation2 + $0xe0] sm:$0xff]
        %v1938 = vld [vmem:[#allocation2 + $0xe8] sm:$0xff]
        %v1939 = vld [vmem:[#allocation2 + $0xf0] sm:$0xff]
        %v1940 = vld [vmem:[#allocation2 + $0xf8] sm:$0xff]
        %v1941 = vld [vmem:[#allocation2 + $0x100] sm:$0xff]
        %v1942 = vld [vmem:[#allocation2 + $0x108] sm:$0xff]
        %v1943 = vld [vmem:[#allocation2 + $0x110] sm:$0xff]
        %v1944 = vld [vmem:[#allocation2 + $0x118] sm:$0xff]
        %v1945 = vld [vmem:[#allocation2 + $0x120] sm:$0xff]
        %v1946 = vld [vmem:[#allocation2 + $0x128] sm:$0xff]
        %v1947 = vld [vmem:[#allocation2 + $0x130] sm:$0xff]
        %v1948 = vld [vmem:[#allocation2 + $0x138] sm:$0xff]
        %v1949 = vld [vmem:[#allocation2 + $0x140] sm:$0xff]
        %v1950 = vld [vmem:[#allocation2 + $0x148] sm:$0xff]
        %v1951 = vld [vmem:[#allocation2 + $0x150] sm:$0xff]
        %v1952 = vld [vmem:[#allocation2 + $0x158] sm:$0xff]
        %v1953 = vld [vmem:[#allocation2 + $0x160] sm:$0xff]
        %v1954 = vld [vmem:[#allocation2 + $0x168] sm:$0xff]
        %v1955 = vld [vmem:[#allocation2 + $0x170] sm:$0xff]
        %v1956 = vld [vmem:[#allocation2 + $0x178] sm:$0xff]
        %v1957 = vld [vmem:[#allocation2 + $0x180] sm:$0xff]
        %v1958 = vld [vmem:[#allocation2 + $0x188] sm:$0xff]
        %v1959 = vld [vmem:[#allocation2 + $0x190] sm:$0xff]
        %v1960 = vld [vmem:[#allocation2 + $0x198] sm:$0xff]
        %v1961 = vld [vmem:[#allocation2 + $0x1a0] sm:$0xff]
        %v1962 = vld [vmem:[#allocation2 + $0x1a8] sm:$0xff]
        %v1963 = vld [vmem:[#allocation2 + $0x1b0] sm:$0xff]
        %v1964 = vld [vmem:[#allocation2 + $0x1b8] sm:$0xff]
        %v1965 = vld [vmem:[#allocation2 + $0x1c0] sm:$0xff]
        %v1966 = vld [vmem:[#allocation2 + $0x1c8] sm:$0xff]
        %v1967 = vld [vmem:[#allocation2 + $0x1d0] sm:$0xff]
        %v1968 = vld [vmem:[#allocation2 + $0x1d8] sm:$0xff]
        %v1969 = vld [vmem:[#allocation2 + $0x1e0] sm:$0xff]
        %v1970 = vld [vmem:[#allocation2 + $0x1e8] sm:$0xff]
        %v1971 = vld [vmem:[#allocation2 + $0x1f0] sm:$0xff]
        %v1972 = vld [vmem:[#allocation2 + $0x1f8] sm:$0xff]
        %v1973 = vld [vmem:[%s1] sm:$0xff]
        %v1974 = vld [vmem:[%s1 + $0x8] sm:$0xff]
        %v1975 = vld [vmem:[%s1 + $0x10] sm:$0xff]
        %v1976 = vld [vmem:[%s1 + $0x18] sm:$0xff]
        %v1977 = vld [vmem:[%s1 + $0x20] sm:$0xff]
        %v1978 = vld [vmem:[%s1 + $0x28] sm:$0xff]
        %v1979 = vld [vmem:[%s1 + $0x30] sm:$0xff]
        %v1980 = vld [vmem:[%s1 + $0x38] sm:$0xff]
        %v1981 = vld [vmem:[%s1 + $0x40] sm:$0xff]
        %v1982 = vld [vmem:[%s1 + $0x48] sm:$0xff]
        %v1983 = vld [vmem:[%s1 + $0x50] sm:$0xff]
        %v1984 = vld [vmem:[%s1 + $0x58] sm:$0xff]
        %v1985 = vld [vmem:[%s1 + $0x60] sm:$0xff]
        %v1986 = vld [vmem:[%s1 + $0x68] sm:$0xff]
        %v1987 = vld [vmem:[%s1 + $0x70] sm:$0xff]
        %v1988 = vld [vmem:[%s1 + $0x78] sm:$0xff]
        %v1989 = vld [vmem:[%s1 + $0x80] sm:$0xff]
        %v1990 = vld [vmem:[%s1 + $0x88] sm:$0xff]
        %v1991 = vld [vmem:[%s1 + $0x90] sm:$0xff]
        %v1992 = vld [vmem:[%s1 + $0x98] sm:$0xff]
        %v1993 = vld [vmem:[%s1 + $0xa0] sm:$0xff]
        %v1994 = vld [vmem:[%s1 + $0xa8] sm:$0xff]
        %v1995 = vld [vmem:[%s1 + $0xb0] sm:$0xff]
        %v1996 = vld [vmem:[%s1 + $0xb8] sm:$0xff]
        %v1997 = vld [vmem:[%s1 + $0xc0] sm:$0xff]
        %v1998 = vld [vmem:[%s1 + $0xc8] sm:$0xff]
        %v1999 = vld [vmem:[%s1 + $0xd0] sm:$0xff]
        %v2000 = vld [vmem:[%s1 + $0xd8] sm:$0xff]
        %v2001 = vld [vmem:[%s1 + $0xe0] sm:$0xff]
        %v2002 = vld [vmem:[%s1 + $0xe8] sm:$0xff]
        %v2003 = vld [vmem:[%s1 + $0xf0] sm:$0xff]
        %v2004 = vld [vmem:[%s1 + $0xf8] sm:$0xff]
        %v2005 = vld [vmem:[%s1 + $0x100] sm:$0xff]
        %v2006 = vld [vmem:[%s1 + $0x108] sm:$0xff]
        %v2007 = vld [vmem:[%s1 + $0x110] sm:$0xff]
        %v2008 = vld [vmem:[%s1 + $0x118] sm:$0xff]
        %v2009 = vld [vmem:[%s1 + $0x120] sm:$0xff]
        %v2010 = vld [vmem:[%s1 + $0x128] sm:$0xff]
        %v2011 = vld [vmem:[%s1 + $0x130] sm:$0xff]
        %v2012 = vld [vmem:[%s1 + $0x138] sm:$0xff]
        %v2013 = vld [vmem:[%s1 + $0x140] sm:$0xff]
        %v2014 = vld [vmem:[%s1 + $0x148] sm:$0xff]
        %v2015 = vld [vmem:[%s1 + $0x150] sm:$0xff]
        %v2016 = vld [vmem:[%s1 + $0x158] sm:$0xff]
        %v2017 = vld [vmem:[%s1 + $0x160] sm:$0xff]
        %v2018 = vld [vmem:[%s1 + $0x168] sm:$0xff]
        %v2019 = vld [vmem:[%s1 + $0x170] sm:$0xff]
        %v2020 = vld [vmem:[%s1 + $0x178] sm:$0xff]
        %v2021 = vld [vmem:[%s1 + $0x180] sm:$0xff]
        %v2022 = vld [vmem:[%s1 + $0x188] sm:$0xff]
        %v2023 = vld [vmem:[%s1 + $0x190] sm:$0xff]
        %v2024 = vld [vmem:[%s1 + $0x198] sm:$0xff]
        %v2025 = vld [vmem:[%s1 + $0x1a0] sm:$0xff]
        %v2026 = vld [vmem:[%s1 + $0x1a8] sm:$0xff]
        %v2027 = vld [vmem:[%s1 + $0x1b0] sm:$0xff]
        %v2028 = vld [vmem:[%s1 + $0x1b8] sm:$0xff]
        %v2029 = vld [vmem:[%s1 + $0x1c0] sm:$0xff]
        %v2030 = vld [vmem:[%s1 + $0x1c8] sm:$0xff]
        %v2031 = vld [vmem:[%s1 + $0x1d0] sm:$0xff]
        %v2032 = vld [vmem:[%s1 + $0x1d8] sm:$0xff]
        %v2033 = vld [vmem:[%s1 + $0x1e0] sm:$0xff]
        %v2034 = vld [vmem:[%s1 + $0x1e8] sm:$0xff]
        %v2035 = vld [vmem:[%s1 + $0x1f0] sm:$0xff]
        %v2036 = vld [vmem:[%s1 + $0x1f8] sm:$0xff]
        %v2037 = vld [vmem:[%s1 + $0x200] sm:$0xff]
        %v2038 = vld [vmem:[%s1 + $0x208] sm:$0xff]
        %v2039 = vld [vmem:[%s1 + $0x210] sm:$0xff]
        %v2040 = vld [vmem:[%s1 + $0x218] sm:$0xff]
        %v2041 = vld [vmem:[%s1 + $0x220] sm:$0xff]
        %v2042 = vld [vmem:[%s1 + $0x228] sm:$0xff]
        %v2043 = vld [vmem:[%s1 + $0x230] sm:$0xff]
        %v2044 = vld [vmem:[%s1 + $0x238] sm:$0xff]
        %v2045 = vld [vmem:[%s1 + $0x240] sm:$0xff]
        %v2046 = vld [vmem:[%s1 + $0x248] sm:$0xff]
        %v2047 = vld [vmem:[%s1 + $0x250] sm:$0xff]
        %v2048 = vld [vmem:[%s1 + $0x258] sm:$0xff]
        %v2049 = vld [vmem:[%s1 + $0x260] sm:$0xff]
        %v2050 = vld [vmem:[%s1 + $0x268] sm:$0xff]
        %v2051 = vld [vmem:[%s1 + $0x270] sm:$0xff]
        %v2052 = vld [vmem:[%s1 + $0x278] sm:$0xff]
        %v2053 = vld [vmem:[%s1 + $0x280] sm:$0xff]
        %v2054 = vld [vmem:[%s1 + $0x288] sm:$0xff]
        %v2055 = vld [vmem:[%s1 + $0x290] sm:$0xff]
        %v2056 = vld [vmem:[%s1 + $0x298] sm:$0xff]
        %v2057 = vld [vmem:[%s1 + $0x2a0] sm:$0xff]
        %v2058 = vld [vmem:[%s1 + $0x2a8] sm:$0xff]
        %v2059 = vld [vmem:[%s1 + $0x2b0] sm:$0xff]
        %v2060 = vld [vmem:[%s1 + $0x2b8] sm:$0xff]
        %v2061 = vld [vmem:[%s1 + $0x2c0] sm:$0xff]
        %v2062 = vld [vmem:[%s1 + $0x2c8] sm:$0xff]
        %v2063 = vld [vmem:[%s1 + $0x2d0] sm:$0xff]
        %v2064 = vld [vmem:[%s1 + $0x2d8] sm:$0xff]
        %v2065 = vld [vmem:[%s1 + $0x2e0] sm:$0xff]
        %v2066 = vld [vmem:[%s1 + $0x2e8] sm:$0xff]
        %v2067 = vld [vmem:[%s1 + $0x2f0] sm:$0xff]
        %v2068 = vld [vmem:[%s1 + $0x2f8] sm:$0xff]
        %v2069 = vld [vmem:[%s1 + $0x300] sm:$0xff]
        %v2070 = vld [vmem:[%s1 + $0x308] sm:$0xff]
        %v2071 = vld [vmem:[%s1 + $0x310] sm:$0xff]
        %v2072 = vld [vmem:[%s1 + $0x318] sm:$0xff]
        %v2073 = vld [vmem:[%s1 + $0x320] sm:$0xff]
        %v2074 = vld [vmem:[%s1 + $0x328] sm:$0xff]
        %v2075 = vld [vmem:[%s1 + $0x330] sm:$0xff]
        %v2076 = vld [vmem:[%s1 + $0x338] sm:$0xff]
        %v2077 = vld [vmem:[%s1 + $0x340] sm:$0xff]
        %v2078 = vld [vmem:[%s1 + $0x348] sm:$0xff]
        %v2079 = vld [vmem:[%s1 + $0x350] sm:$0xff]
        %v2080 = vld [vmem:[%s1 + $0x358] sm:$0xff]
        %v2081 = vld [vmem:[%s1 + $0x360] sm:$0xff]
        %v2082 = vld [vmem:[%s1 + $0x368] sm:$0xff]
        %v2083 = vld [vmem:[%s1 + $0x370] sm:$0xff]
        %v2084 = vld [vmem:[%s1 + $0x378] sm:$0xff]
        %v2085 = vld [vmem:[%s1 + $0x380] sm:$0xff]
        %v2086 = vld [vmem:[%s1 + $0x388] sm:$0xff]
        %v2087 = vld [vmem:[%s1 + $0x390] sm:$0xff]
        %v2088 = vld [vmem:[%s1 + $0x398] sm:$0xff]
        %v2089 = vld [vmem:[%s1 + $0x3a0] sm:$0xff]
        %v2090 = vld [vmem:[%s1 + $0x3a8] sm:$0xff]
        %v2091 = vld [vmem:[%s1 + $0x3b0] sm:$0xff]
        %v2092 = vld [vmem:[%s1 + $0x3b8] sm:$0xff]
        %v2093 = vld [vmem:[%s1 + $0x3c0] sm:$0xff]
        %v2094 = vld [vmem:[%s1 + $0x3c8] sm:$0xff]
        %v2095 = vld [vmem:[%s1 + $0x3d0] sm:$0xff]
        %v2096 = vld [vmem:[%s1 + $0x3d8] sm:$0xff]
        %v2097 = vld [vmem:[%s1 + $0x3e0] sm:$0xff]
        %v2098 = vld [vmem:[%s1 + $0x3e8] sm:$0xff]
        %v2099 = vld [vmem:[%s1 + $0x3f0] sm:$0xff]
        %v2100 = vld [vmem:[%s1 + $0x3f8] sm:$0xff]
        %v2101 = vld [vmem:[%s1 + $0x400] sm:$0xff]
        %v2102 = vld [vmem:[%s1 + $0x408] sm:$0xff]
        %v2103 = vld [vmem:[%s1 + $0x410] sm:$0xff]
        %v2104 = vld [vmem:[%s1 + $0x418] sm:$0xff]
        %v2105 = vld [vmem:[%s1 + $0x420] sm:$0xff]
        %v2106 = vld [vmem:[%s1 + $0x428] sm:$0xff]
        %v2107 = vld [vmem:[%s1 + $0x430] sm:$0xff]
        %v2108 = vld [vmem:[%s1 + $0x438] sm:$0xff]
        %v2109 = vld [vmem:[%s1 + $0x440] sm:$0xff]
        %v2110 = vld [vmem:[%s1 + $0x448] sm:$0xff]
        %v2111 = vld [vmem:[%s1 + $0x450] sm:$0xff]
        %v2112 = vld [vmem:[%s1 + $0x458] sm:$0xff]
        %v2113 = vld [vmem:[%s1 + $0x460] sm:$0xff]
        %v2114 = vld [vmem:[%s1 + $0x468] sm:$0xff]
        %v2115 = vld [vmem:[%s1 + $0x470] sm:$0xff]
        %v2116 = vld [vmem:[%s1 + $0x478] sm:$0xff]
        %v2117 = vld [vmem:[%s1 + $0x480] sm:$0xff]
        %v2118 = vld [vmem:[%s1 + $0x488] sm:$0xff]
        %v2119 = vld [vmem:[%s1 + $0x490] sm:$0xff]
        %v2120 = vld [vmem:[%s1 + $0x498] sm:$0xff]
        %v2121 = vld [vmem:[%s1 + $0x4a0] sm:$0xff]
        %v2122 = vld [vmem:[%s1 + $0x4a8] sm:$0xff]
        %v2123 = vld [vmem:[%s1 + $0x4b0] sm:$0xff]
        %v2124 = vld [vmem:[%s1 + $0x4b8] sm:$0xff]
        %v2125 = vld [vmem:[%s1 + $0x4c0] sm:$0xff]
        %v2126 = vld [vmem:[%s1 + $0x4c8] sm:$0xff]
        %v2127 = vld [vmem:[%s1 + $0x4d0] sm:$0xff]
        %v2128 = vld [vmem:[%s1 + $0x4d8] sm:$0xff]
        %v2129 = vld [vmem:[%s1 + $0x4e0] sm:$0xff]
        %v2130 = vld [vmem:[%s1 + $0x4e8] sm:$0xff]
        %v2131 = vld [vmem:[%s1 + $0x4f0] sm:$0xff]
        %v2132 = vld [vmem:[%s1 + $0x4f8] sm:$0xff]
        %v2133 = vld [vmem:[%s1 + $0x500] sm:$0xff]
        %v2134 = vld [vmem:[%s1 + $0x508] sm:$0xff]
        %v2135 = vld [vmem:[%s1 + $0x510] sm:$0xff]
        %v2136 = vld [vmem:[%s1 + $0x518] sm:$0xff]
        %v2137 = vld [vmem:[%s1 + $0x520] sm:$0xff]
        %v2138 = vld [vmem:[%s1 + $0x528] sm:$0xff]
        %v2139 = vld [vmem:[%s1 + $0x530] sm:$0xff]
        %v2140 = vld [vmem:[%s1 + $0x538] sm:$0xff]
        %v2141 = vld [vmem:[%s1 + $0x540] sm:$0xff]
        %v2142 = vld [vmem:[%s1 + $0x548] sm:$0xff]
        %v2143 = vld [vmem:[%s1 + $0x550] sm:$0xff]
        %v2144 = vld [vmem:[%s1 + $0x558] sm:$0xff]
        %v2145 = vld [vmem:[%s1 + $0x560] sm:$0xff]
        %v2146 = vld [vmem:[%s1 + $0x568] sm:$0xff]
        %v2147 = vld [vmem:[%s1 + $0x570] sm:$0xff]
        %v2148 = vld [vmem:[%s1 + $0x578] sm:$0xff]
        %v2149 = vld [vmem:[%s1 + $0x580] sm:$0xff]
        %v2150 = vld [vmem:[%s1 + $0x588] sm:$0xff]
        %v2151 = vld [vmem:[%s1 + $0x590] sm:$0xff]
        %v2152 = vld [vmem:[%s1 + $0x598] sm:$0xff]
        %v2153 = vld [vmem:[%s1 + $0x5a0] sm:$0xff]
        %v2154 = vld [vmem:[%s1 + $0x5a8] sm:$0xff]
        %v2155 = vld [vmem:[%s1 + $0x5b0] sm:$0xff]
        %v2156 = vld [vmem:[%s1 + $0x5b8] sm:$0xff]
        %v2157 = vld [vmem:[%s1 + $0x5c0] sm:$0xff]
        %v2158 = vld [vmem:[%s1 + $0x5c8] sm:$0xff]
        %v2159 = vld [vmem:[%s1 + $0x5d0] sm:$0xff]
        %v2160 = vld [vmem:[%s1 + $0x5d8] sm:$0xff]
        %v2161 = vld [vmem:[%s1 + $0x5e0] sm:$0xff]
        %v2162 = vld [vmem:[%s1 + $0x5e8] sm:$0xff]
        %v2163 = vld [vmem:[%s1 + $0x5f0] sm:$0xff]
        %v2164 = vld [vmem:[%s1 + $0x5f8] sm:$0xff]
        %v2165 = vld [vmem:[%s1 + $0x600] sm:$0xff]
        %v2166 = vld [vmem:[%s1 + $0x608] sm:$0xff]
        %v2167 = vld [vmem:[%s1 + $0x610] sm:$0xff]
        %v2168 = vld [vmem:[%s1 + $0x618] sm:$0xff]
        %v2169 = vld [vmem:[%s1 + $0x620] sm:$0xff]
        %v2170 = vld [vmem:[%s1 + $0x628] sm:$0xff]
        %v2171 = vld [vmem:[%s1 + $0x630] sm:$0xff]
        %v2172 = vld [vmem:[%s1 + $0x638] sm:$0xff]
        %v2173 = vld [vmem:[%s1 + $0x640] sm:$0xff]
        %v2174 = vld [vmem:[%s1 + $0x648] sm:$0xff]
        %v2175 = vld [vmem:[%s1 + $0x650] sm:$0xff]
        %v2176 = vld [vmem:[%s1 + $0x658] sm:$0xff]
        %v2177 = vld [vmem:[%s1 + $0x660] sm:$0xff]
        %v2178 = vld [vmem:[%s1 + $0x668] sm:$0xff]
        %v2179 = vld [vmem:[%s1 + $0x670] sm:$0xff]
        %v2180 = vld [vmem:[%s1 + $0x678] sm:$0xff]
        %v2181 = vld [vmem:[%s1 + $0x680] sm:$0xff]
        %v2182 = vld [vmem:[%s1 + $0x688] sm:$0xff]
        %v2183 = vld [vmem:[%s1 + $0x690] sm:$0xff]
        %v2184 = vld [vmem:[%s1 + $0x698] sm:$0xff]
        %v2185 = vld [vmem:[%s1 + $0x6a0] sm:$0xff]
        %v2186 = vld [vmem:[%s1 + $0x6a8] sm:$0xff]
        %v2187 = vld [vmem:[%s1 + $0x6b0] sm:$0xff]
        %v2188 = vld [vmem:[%s1 + $0x6b8] sm:$0xff]
        %v2189 = vld [vmem:[%s1 + $0x6c0] sm:$0xff]
        %v2190 = vld [vmem:[%s1 + $0x6c8] sm:$0xff]
        %v2191 = vld [vmem:[%s1 + $0x6d0] sm:$0xff]
        %v2192 = vld [vmem:[%s1 + $0x6d8] sm:$0xff]
        %v2193 = vld [vmem:[%s1 + $0x6e0] sm:$0xff]
        %v2194 = vld [vmem:[%s1 + $0x6e8] sm:$0xff]
        %v2195 = vld [vmem:[%s1 + $0x6f0] sm:$0xff]
        %v2196 = vld [vmem:[%s1 + $0x6f8] sm:$0xff]
        %v2197 = vld [vmem:[%s1 + $0x700] sm:$0xff]
        %v2198 = vld [vmem:[%s1 + $0x708] sm:$0xff]
        %v2199 = vld [vmem:[%s1 + $0x710] sm:$0xff]
        %v2200 = vld [vmem:[%s1 + $0x718] sm:$0xff]
        %v2201 = vld [vmem:[%s1 + $0x720] sm:$0xff]
        %v2202 = vld [vmem:[%s1 + $0x728] sm:$0xff]
        %v2203 = vld [vmem:[%s1 + $0x730] sm:$0xff]
        %v2204 = vld [vmem:[%s1 + $0x738] sm:$0xff]
        %v2205 = vld [vmem:[%s1 + $0x740] sm:$0xff]
        %v2206 = vld [vmem:[%s1 + $0x748] sm:$0xff]
        %v2207 = vld [vmem:[%s1 + $0x750] sm:$0xff]
        %v2208 = vld [vmem:[%s1 + $0x758] sm:$0xff]
        %v2209 = vld [vmem:[%s1 + $0x760] sm:$0xff]
        %v2210 = vld [vmem:[%s1 + $0x768] sm:$0xff]
        %v2211 = vld [vmem:[%s1 + $0x770] sm:$0xff]
        %v2212 = vld [vmem:[%s1 + $0x778] sm:$0xff]
        %v2213 = vld [vmem:[%s1 + $0x780] sm:$0xff]
        %v2214 = vld [vmem:[%s1 + $0x788] sm:$0xff]
        %v2215 = vld [vmem:[%s1 + $0x790] sm:$0xff]
        %v2216 = vld [vmem:[%s1 + $0x798] sm:$0xff]
        %v2217 = vld [vmem:[%s1 + $0x7a0] sm:$0xff]
        %v2218 = vld [vmem:[%s1 + $0x7a8] sm:$0xff]
        %v2219 = vld [vmem:[%s1 + $0x7b0] sm:$0xff]
        %v2220 = vld [vmem:[%s1 + $0x7b8] sm:$0xff]
        %v2221 = vld [vmem:[%s1 + $0x7c0] sm:$0xff]
        %v2222 = vld [vmem:[%s1 + $0x7c8] sm:$0xff]
        %v2223 = vld [vmem:[%s1 + $0x7d0] sm:$0xff]
        %v2224 = vld [vmem:[%s1 + $0x7d8] sm:$0xff]
        %v2225 = vld [vmem:[%s1 + $0x7e0] sm:$0xff]
        %v2226 = vld [vmem:[%s1 + $0x7e8] sm:$0xff]
        %v2227 = vld [vmem:[%s1 + $0x7f0] sm:$0xff]
        %v2228 = vld [vmem:[%s1 + $0x7f8] sm:$0xff]
        %v2485 = vunpack.c.l.b16 %v1973
        %v2486 = vunpack.c.h.b16 %v1973
        %v2487 = vunpack.c.l.b16 %v1974
        %v2488 = vunpack.c.h.b16 %v1974
        %v2489 = vunpack.c.l.b16 %v1975
        %v2490 = vunpack.c.h.b16 %v1975
        %v2491 = vunpack.c.l.b16 %v1976
        %v2492 = vunpack.c.h.b16 %v1976
        %v2493 = vunpack.c.l.b16 %v1977
        %v2494 = vunpack.c.h.b16 %v1977
        %v2495 = vunpack.c.l.b16 %v1978
        %v2496 = vunpack.c.h.b16 %v1978
        %v2497 = vunpack.c.l.b16 %v1979
        %v2498 = vunpack.c.h.b16 %v1979
        %v2499 = vunpack.c.l.b16 %v1980
        %v2500 = vunpack.c.h.b16 %v1980
        %v2501 = vunpack.c.l.b16 %v1981
        %v2502 = vunpack.c.h.b16 %v1981
        %v2503 = vunpack.c.l.b16 %v1982
        %v2504 = vunpack.c.h.b16 %v1982
        %v2505 = vunpack.c.l.b16 %v1983
        %v2506 = vunpack.c.h.b16 %v1983
        %v2507 = vunpack.c.l.b16 %v1984
        %v2508 = vunpack.c.h.b16 %v1984
        %v2509 = vunpack.c.l.b16 %v1985
        %v2510 = vunpack.c.h.b16 %v1985
        %v2511 = vunpack.c.l.b16 %v1986
        %v2512 = vunpack.c.h.b16 %v1986
        %v2513 = vunpack.c.l.b16 %v1987
        %v2514 = vunpack.c.h.b16 %v1987
        %v2515 = vunpack.c.l.b16 %v1988
        %v2516 = vunpack.c.h.b16 %v1988
        %v2517 = vunpack.c.l.b16 %v1989
        %v2518 = vunpack.c.h.b16 %v1989
        %v2519 = vunpack.c.l.b16 %v1990
        %v2520 = vunpack.c.h.b16 %v1990
        %v2521 = vunpack.c.l.b16 %v1991
        %v2522 = vunpack.c.h.b16 %v1991
        %v2523 = vunpack.c.l.b16 %v1992
        %v2524 = vunpack.c.h.b16 %v1992
        %v2525 = vunpack.c.l.b16 %v1993
        %v2526 = vunpack.c.h.b16 %v1993
        %v2527 = vunpack.c.l.b16 %v1994
        %v2528 = vunpack.c.h.b16 %v1994
        %v2529 = vunpack.c.l.b16 %v1995
        %v2530 = vunpack.c.h.b16 %v1995
        %v2531 = vunpack.c.l.b16 %v1996
        %v2532 = vunpack.c.h.b16 %v1996
        %v2533 = vunpack.c.l.b16 %v1997
        %v2534 = vunpack.c.h.b16 %v1997
        %v2535 = vunpack.c.l.b16 %v1998
        %v2536 = vunpack.c.h.b16 %v1998
        %v2537 = vunpack.c.l.b16 %v1999
        %v2538 = vunpack.c.h.b16 %v1999
        %v2539 = vunpack.c.l.b16 %v2000
        %v2540 = vunpack.c.h.b16 %v2000
        %v2541 = vunpack.c.l.b16 %v2001
        %v2542 = vunpack.c.h.b16 %v2001
        %v2543 = vunpack.c.l.b16 %v2002
        %v2544 = vunpack.c.h.b16 %v2002
        %v2545 = vunpack.c.l.b16 %v2003
        %v2546 = vunpack.c.h.b16 %v2003
        %v2547 = vunpack.c.l.b16 %v2004
        %v2548 = vunpack.c.h.b16 %v2004
        %v2549 = vunpack.c.l.b16 %v2005
        %v2550 = vunpack.c.h.b16 %v2005
        %v2551 = vunpack.c.l.b16 %v2006
        %v2552 = vunpack.c.h.b16 %v2006
        %v2553 = vunpack.c.l.b16 %v2007
        %v2554 = vunpack.c.h.b16 %v2007
        %v2555 = vunpack.c.l.b16 %v2008
        %v2556 = vunpack.c.h.b16 %v2008
        %v2557 = vunpack.c.l.b16 %v2009
        %v2558 = vunpack.c.h.b16 %v2009
        %v2559 = vunpack.c.l.b16 %v2010
        %v2560 = vunpack.c.h.b16 %v2010
        %v2561 = vunpack.c.l.b16 %v2011
        %v2562 = vunpack.c.h.b16 %v2011
        %v2563 = vunpack.c.l.b16 %v2012
        %v2564 = vunpack.c.h.b16 %v2012
        %v2565 = vunpack.c.l.b16 %v2013
        %v2566 = vunpack.c.h.b16 %v2013
        %v2567 = vunpack.c.l.b16 %v2014
        %v2568 = vunpack.c.h.b16 %v2014
        %v2569 = vunpack.c.l.b16 %v2015
        %v2570 = vunpack.c.h.b16 %v2015
        %v2571 = vunpack.c.l.b16 %v2016
        %v2572 = vunpack.c.h.b16 %v2016
        %v2573 = vunpack.c.l.b16 %v2017
        %v2574 = vunpack.c.h.b16 %v2017
        %v2575 = vunpack.c.l.b16 %v2018
        %v2576 = vunpack.c.h.b16 %v2018
        %v2577 = vunpack.c.l.b16 %v2019
        %v2578 = vunpack.c.h.b16 %v2019
        %v2579 = vunpack.c.l.b16 %v2020
        %v2580 = vunpack.c.h.b16 %v2020
        %v2581 = vunpack.c.l.b16 %v2021
        %v2582 = vunpack.c.h.b16 %v2021
        %v2583 = vunpack.c.l.b16 %v2022
        %v2584 = vunpack.c.h.b16 %v2022
        %v2585 = vunpack.c.l.b16 %v2023
        %v2586 = vunpack.c.h.b16 %v2023
        %v2587 = vunpack.c.l.b16 %v2024
        %v2588 = vunpack.c.h.b16 %v2024
        %v2589 = vunpack.c.l.b16 %v2025
        %v2590 = vunpack.c.h.b16 %v2025
        %v2591 = vunpack.c.l.b16 %v2026
        %v2592 = vunpack.c.h.b16 %v2026
        %v2593 = vunpack.c.l.b16 %v2027
        %v2594 = vunpack.c.h.b16 %v2027
        %v2595 = vunpack.c.l.b16 %v2028
        %v2596 = vunpack.c.h.b16 %v2028
        %v2597 = vunpack.c.l.b16 %v2029
        %v2598 = vunpack.c.h.b16 %v2029
        %v2599 = vunpack.c.l.b16 %v2030
        %v2600 = vunpack.c.h.b16 %v2030
        %v2601 = vunpack.c.l.b16 %v2031
        %v2602 = vunpack.c.h.b16 %v2031
        %v2603 = vunpack.c.l.b16 %v2032
        %v2604 = vunpack.c.h.b16 %v2032
        %v2605 = vunpack.c.l.b16 %v2033
        %v2606 = vunpack.c.h.b16 %v2033
        %v2607 = vunpack.c.l.b16 %v2034
        %v2608 = vunpack.c.h.b16 %v2034
        %v2609 = vunpack.c.l.b16 %v2035
        %v2610 = vunpack.c.h.b16 %v2035
        %v2611 = vunpack.c.l.b16 %v2036
        %v2612 = vunpack.c.h.b16 %v2036
        %v2613 = vunpack.c.l.b16 %v2037
        %v2614 = vunpack.c.h.b16 %v2037
        %v2615 = vunpack.c.l.b16 %v2038
        %v2616 = vunpack.c.h.b16 %v2038
        %v2617 = vunpack.c.l.b16 %v2039
        %v2618 = vunpack.c.h.b16 %v2039
        %v2619 = vunpack.c.l.b16 %v2040
        %v2620 = vunpack.c.h.b16 %v2040
        %v2621 = vunpack.c.l.b16 %v2041
        %v2622 = vunpack.c.h.b16 %v2041
        %v2623 = vunpack.c.l.b16 %v2042
        %v2624 = vunpack.c.h.b16 %v2042
        %v2625 = vunpack.c.l.b16 %v2043
        %v2626 = vunpack.c.h.b16 %v2043
        %v2627 = vunpack.c.l.b16 %v2044
        %v2628 = vunpack.c.h.b16 %v2044
        %v2629 = vunpack.c.l.b16 %v2045
        %v2630 = vunpack.c.h.b16 %v2045
        %v2631 = vunpack.c.l.b16 %v2046
        %v2632 = vunpack.c.h.b16 %v2046
        %v2633 = vunpack.c.l.b16 %v2047
        %v2634 = vunpack.c.h.b16 %v2047
        %v2635 = vunpack.c.l.b16 %v2048
        %v2636 = vunpack.c.h.b16 %v2048
        %v2637 = vunpack.c.l.b16 %v2049
        %v2638 = vunpack.c.h.b16 %v2049
        %v2639 = vunpack.c.l.b16 %v2050
        %v2640 = vunpack.c.h.b16 %v2050
        %v2641 = vunpack.c.l.b16 %v2051
        %v2642 = vunpack.c.h.b16 %v2051
        %v2643 = vunpack.c.l.b16 %v2052
        %v2644 = vunpack.c.h.b16 %v2052
        %v2645 = vunpack.c.l.b16 %v2053
        %v2646 = vunpack.c.h.b16 %v2053
        %v2647 = vunpack.c.l.b16 %v2054
        %v2648 = vunpack.c.h.b16 %v2054
        %v2649 = vunpack.c.l.b16 %v2055
        %v2650 = vunpack.c.h.b16 %v2055
        %v2651 = vunpack.c.l.b16 %v2056
        %v2652 = vunpack.c.h.b16 %v2056
        %v2653 = vunpack.c.l.b16 %v2057
        %v2654 = vunpack.c.h.b16 %v2057
        %v2655 = vunpack.c.l.b16 %v2058
        %v2656 = vunpack.c.h.b16 %v2058
        %v2657 = vunpack.c.l.b16 %v2059
        %v2658 = vunpack.c.h.b16 %v2059
        %v2659 = vunpack.c.l.b16 %v2060
        %v2660 = vunpack.c.h.b16 %v2060
        %v2661 = vunpack.c.l.b16 %v2061
        %v2662 = vunpack.c.h.b16 %v2061
        %v2663 = vunpack.c.l.b16 %v2062
        %v2664 = vunpack.c.h.b16 %v2062
        %v2665 = vunpack.c.l.b16 %v2063
        %v2666 = vunpack.c.h.b16 %v2063
        %v2667 = vunpack.c.l.b16 %v2064
        %v2668 = vunpack.c.h.b16 %v2064
        %v2669 = vunpack.c.l.b16 %v2065
        %v2670 = vunpack.c.h.b16 %v2065
        %v2671 = vunpack.c.l.b16 %v2066
        %v2672 = vunpack.c.h.b16 %v2066
        %v2673 = vunpack.c.l.b16 %v2067
        %v2674 = vunpack.c.h.b16 %v2067
        %v2675 = vunpack.c.l.b16 %v2068
        %v2676 = vunpack.c.h.b16 %v2068
        %v2677 = vunpack.c.l.b16 %v2069
        %v2678 = vunpack.c.h.b16 %v2069
        %v2679 = vunpack.c.l.b16 %v2070
        %v2680 = vunpack.c.h.b16 %v2070
        %v2681 = vunpack.c.l.b16 %v2071
        %v2682 = vunpack.c.h.b16 %v2071
        %v2683 = vunpack.c.l.b16 %v2072
        %v2684 = vunpack.c.h.b16 %v2072
        %v2685 = vunpack.c.l.b16 %v2073
        %v2686 = vunpack.c.h.b16 %v2073
        %v2687 = vunpack.c.l.b16 %v2074
        %v2688 = vunpack.c.h.b16 %v2074
        %v2689 = vunpack.c.l.b16 %v2075
        %v2690 = vunpack.c.h.b16 %v2075
        %v2691 = vunpack.c.l.b16 %v2076
        %v2692 = vunpack.c.h.b16 %v2076
        %v2693 = vunpack.c.l.b16 %v2077
        %v2694 = vunpack.c.h.b16 %v2077
        %v2695 = vunpack.c.l.b16 %v2078
        %v2696 = vunpack.c.h.b16 %v2078
        %v2697 = vunpack.c.l.b16 %v2079
        %v2698 = vunpack.c.h.b16 %v2079
        %v2699 = vunpack.c.l.b16 %v2080
        %v2700 = vunpack.c.h.b16 %v2080
        %v2701 = vunpack.c.l.b16 %v2081
        %v2702 = vunpack.c.h.b16 %v2081
        %v2703 = vunpack.c.l.b16 %v2082
        %v2704 = vunpack.c.h.b16 %v2082
        %v2705 = vunpack.c.l.b16 %v2083
        %v2706 = vunpack.c.h.b16 %v2083
        %v2707 = vunpack.c.l.b16 %v2084
        %v2708 = vunpack.c.h.b16 %v2084
        %v2709 = vunpack.c.l.b16 %v2085
        %v2710 = vunpack.c.h.b16 %v2085
        %v2711 = vunpack.c.l.b16 %v2086
        %v2712 = vunpack.c.h.b16 %v2086
        %v2713 = vunpack.c.l.b16 %v2087
        %v2714 = vunpack.c.h.b16 %v2087
        %v2715 = vunpack.c.l.b16 %v2088
        %v2716 = vunpack.c.h.b16 %v2088
        %v2717 = vunpack.c.l.b16 %v2089
        %v2718 = vunpack.c.h.b16 %v2089
        %v2719 = vunpack.c.l.b16 %v2090
        %v2720 = vunpack.c.h.b16 %v2090
        %v2721 = vunpack.c.l.b16 %v2091
        %v2722 = vunpack.c.h.b16 %v2091
        %v2723 = vunpack.c.l.b16 %v2092
        %v2724 = vunpack.c.h.b16 %v2092
        %v2725 = vunpack.c.l.b16 %v2093
        %v2726 = vunpack.c.h.b16 %v2093
        %v2727 = vunpack.c.l.b16 %v2094
        %v2728 = vunpack.c.h.b16 %v2094
        %v2729 = vunpack.c.l.b16 %v2095
        %v2730 = vunpack.c.h.b16 %v2095
        %v2731 = vunpack.c.l.b16 %v2096
        %v2732 = vunpack.c.h.b16 %v2096
        %v2733 = vunpack.c.l.b16 %v2097
        %v2734 = vunpack.c.h.b16 %v2097
        %v2735 = vunpack.c.l.b16 %v2098
        %v2736 = vunpack.c.h.b16 %v2098
        %v2737 = vunpack.c.l.b16 %v2099
        %v2738 = vunpack.c.h.b16 %v2099
        %v2739 = vunpack.c.l.b16 %v2100
        %v2740 = vunpack.c.h.b16 %v2100
        %v2741 = vunpack.c.l.b16 %v2101
        %v2742 = vunpack.c.h.b16 %v2101
        %v2743 = vunpack.c.l.b16 %v2102
        %v2744 = vunpack.c.h.b16 %v2102
        %v2745 = vunpack.c.l.b16 %v2103
        %v2746 = vunpack.c.h.b16 %v2103
        %v2747 = vunpack.c.l.b16 %v2104
        %v2748 = vunpack.c.h.b16 %v2104
        %v2749 = vunpack.c.l.b16 %v2105
        %v2750 = vunpack.c.h.b16 %v2105
        %v2751 = vunpack.c.l.b16 %v2106
        %v2752 = vunpack.c.h.b16 %v2106
        %v2753 = vunpack.c.l.b16 %v2107
        %v2754 = vunpack.c.h.b16 %v2107
        %v2755 = vunpack.c.l.b16 %v2108
        %v2756 = vunpack.c.h.b16 %v2108
        %v2757 = vunpack.c.l.b16 %v2109
        %v2758 = vunpack.c.h.b16 %v2109
        %v2759 = vunpack.c.l.b16 %v2110
        %v2760 = vunpack.c.h.b16 %v2110
        %v2761 = vunpack.c.l.b16 %v2111
        %v2762 = vunpack.c.h.b16 %v2111
        %v2763 = vunpack.c.l.b16 %v2112
        %v2764 = vunpack.c.h.b16 %v2112
        %v2765 = vunpack.c.l.b16 %v2113
        %v2766 = vunpack.c.h.b16 %v2113
        %v2767 = vunpack.c.l.b16 %v2114
        %v2768 = vunpack.c.h.b16 %v2114
        %v2769 = vunpack.c.l.b16 %v2115
        %v2770 = vunpack.c.h.b16 %v2115
        %v2771 = vunpack.c.l.b16 %v2116
        %v2772 = vunpack.c.h.b16 %v2116
        %v2773 = vunpack.c.l.b16 %v2117
        %v2774 = vunpack.c.h.b16 %v2117
        %v2775 = vunpack.c.l.b16 %v2118
        %v2776 = vunpack.c.h.b16 %v2118
        %v2777 = vunpack.c.l.b16 %v2119
        %v2778 = vunpack.c.h.b16 %v2119
        %v2779 = vunpack.c.l.b16 %v2120
        %v2780 = vunpack.c.h.b16 %v2120
        %v2781 = vunpack.c.l.b16 %v2121
        %v2782 = vunpack.c.h.b16 %v2121
        %v2783 = vunpack.c.l.b16 %v2122
        %v2784 = vunpack.c.h.b16 %v2122
        %v2785 = vunpack.c.l.b16 %v2123
        %v2786 = vunpack.c.h.b16 %v2123
        %v2787 = vunpack.c.l.b16 %v2124
        %v2788 = vunpack.c.h.b16 %v2124
        %v2789 = vunpack.c.l.b16 %v2125
        %v2790 = vunpack.c.h.b16 %v2125
        %v2791 = vunpack.c.l.b16 %v2126
        %v2792 = vunpack.c.h.b16 %v2126
        %v2793 = vunpack.c.l.b16 %v2127
        %v2794 = vunpack.c.h.b16 %v2127
        %v2795 = vunpack.c.l.b16 %v2128
        %v2796 = vunpack.c.h.b16 %v2128
        %v2797 = vunpack.c.l.b16 %v2129
        %v2798 = vunpack.c.h.b16 %v2129
        %v2799 = vunpack.c.l.b16 %v2130
        %v2800 = vunpack.c.h.b16 %v2130
        %v2801 = vunpack.c.l.b16 %v2131
        %v2802 = vunpack.c.h.b16 %v2131
        %v2803 = vunpack.c.l.b16 %v2132
        %v2804 = vunpack.c.h.b16 %v2132
        %v2805 = vunpack.c.l.b16 %v2133
        %v2806 = vunpack.c.h.b16 %v2133
        %v2807 = vunpack.c.l.b16 %v2134
        %v2808 = vunpack.c.h.b16 %v2134
        %v2809 = vunpack.c.l.b16 %v2135
        %v2810 = vunpack.c.h.b16 %v2135
        %v2811 = vunpack.c.l.b16 %v2136
        %v2812 = vunpack.c.h.b16 %v2136
        %v2813 = vunpack.c.l.b16 %v2137
        %v2814 = vunpack.c.h.b16 %v2137
        %v2815 = vunpack.c.l.b16 %v2138
        %v2816 = vunpack.c.h.b16 %v2138
        %v2817 = vunpack.c.l.b16 %v2139
        %v2818 = vunpack.c.h.b16 %v2139
        %v2819 = vunpack.c.l.b16 %v2140
        %v2820 = vunpack.c.h.b16 %v2140
        %v2821 = vunpack.c.l.b16 %v2141
        %v2822 = vunpack.c.h.b16 %v2141
        %v2823 = vunpack.c.l.b16 %v2142
        %v2824 = vunpack.c.h.b16 %v2142
        %v2825 = vunpack.c.l.b16 %v2143
        %v2826 = vunpack.c.h.b16 %v2143
        %v2827 = vunpack.c.l.b16 %v2144
        %v2828 = vunpack.c.h.b16 %v2144
        %v2829 = vunpack.c.l.b16 %v2145
        %v2830 = vunpack.c.h.b16 %v2145
        %v2831 = vunpack.c.l.b16 %v2146
        %v2832 = vunpack.c.h.b16 %v2146
        %v2833 = vunpack.c.l.b16 %v2147
        %v2834 = vunpack.c.h.b16 %v2147
        %v2835 = vunpack.c.l.b16 %v2148
        %v2836 = vunpack.c.h.b16 %v2148
        %v2837 = vunpack.c.l.b16 %v2149
        %v2838 = vunpack.c.h.b16 %v2149
        %v2839 = vunpack.c.l.b16 %v2150
        %v2840 = vunpack.c.h.b16 %v2150
        %v2841 = vunpack.c.l.b16 %v2151
        %v2842 = vunpack.c.h.b16 %v2151
        %v2843 = vunpack.c.l.b16 %v2152
        %v2844 = vunpack.c.h.b16 %v2152
        %v2845 = vunpack.c.l.b16 %v2153
        %v2846 = vunpack.c.h.b16 %v2153
        %v2847 = vunpack.c.l.b16 %v2154
        %v2848 = vunpack.c.h.b16 %v2154
        %v2849 = vunpack.c.l.b16 %v2155
        %v2850 = vunpack.c.h.b16 %v2155
        %v2851 = vunpack.c.l.b16 %v2156
        %v2852 = vunpack.c.h.b16 %v2156
        %v2853 = vunpack.c.l.b16 %v2157
        %v2854 = vunpack.c.h.b16 %v2157
        %v2855 = vunpack.c.l.b16 %v2158
        %v2856 = vunpack.c.h.b16 %v2158
        %v2857 = vunpack.c.l.b16 %v2159
        %v2858 = vunpack.c.h.b16 %v2159
        %v2859 = vunpack.c.l.b16 %v2160
        %v2860 = vunpack.c.h.b16 %v2160
        %v2861 = vunpack.c.l.b16 %v2161
        %v2862 = vunpack.c.h.b16 %v2161
        %v2863 = vunpack.c.l.b16 %v2162
        %v2864 = vunpack.c.h.b16 %v2162
        %v2865 = vunpack.c.l.b16 %v2163
        %v2866 = vunpack.c.h.b16 %v2163
        %v2867 = vunpack.c.l.b16 %v2164
        %v2868 = vunpack.c.h.b16 %v2164
        %v2869 = vunpack.c.l.b16 %v2165
        %v2870 = vunpack.c.h.b16 %v2165
        %v2871 = vunpack.c.l.b16 %v2166
        %v2872 = vunpack.c.h.b16 %v2166
        %v2873 = vunpack.c.l.b16 %v2167
        %v2874 = vunpack.c.h.b16 %v2167
        %v2875 = vunpack.c.l.b16 %v2168
        %v2876 = vunpack.c.h.b16 %v2168
        %v2877 = vunpack.c.l.b16 %v2169
        %v2878 = vunpack.c.h.b16 %v2169
        %v2879 = vunpack.c.l.b16 %v2170
        %v2880 = vunpack.c.h.b16 %v2170
        %v2881 = vunpack.c.l.b16 %v2171
        %v2882 = vunpack.c.h.b16 %v2171
        %v2883 = vunpack.c.l.b16 %v2172
        %v2884 = vunpack.c.h.b16 %v2172
        %v2885 = vunpack.c.l.b16 %v2173
        %v2886 = vunpack.c.h.b16 %v2173
        %v2887 = vunpack.c.l.b16 %v2174
        %v2888 = vunpack.c.h.b16 %v2174
        %v2889 = vunpack.c.l.b16 %v2175
        %v2890 = vunpack.c.h.b16 %v2175
        %v2891 = vunpack.c.l.b16 %v2176
        %v2892 = vunpack.c.h.b16 %v2176
        %v2893 = vunpack.c.l.b16 %v2177
        %v2894 = vunpack.c.h.b16 %v2177
        %v2895 = vunpack.c.l.b16 %v2178
        %v2896 = vunpack.c.h.b16 %v2178
        %v2897 = vunpack.c.l.b16 %v2179
        %v2898 = vunpack.c.h.b16 %v2179
        %v2899 = vunpack.c.l.b16 %v2180
        %v2900 = vunpack.c.h.b16 %v2180
        %v2901 = vunpack.c.l.b16 %v2181
        %v2902 = vunpack.c.h.b16 %v2181
        %v2903 = vunpack.c.l.b16 %v2182
        %v2904 = vunpack.c.h.b16 %v2182
        %v2905 = vunpack.c.l.b16 %v2183
        %v2906 = vunpack.c.h.b16 %v2183
        %v2907 = vunpack.c.l.b16 %v2184
        %v2908 = vunpack.c.h.b16 %v2184
        %v2909 = vunpack.c.l.b16 %v2185
        %v2910 = vunpack.c.h.b16 %v2185
        %v2911 = vunpack.c.l.b16 %v2186
        %v2912 = vunpack.c.h.b16 %v2186
        %v2913 = vunpack.c.l.b16 %v2187
        %v2914 = vunpack.c.h.b16 %v2187
        %v2915 = vunpack.c.l.b16 %v2188
        %v2916 = vunpack.c.h.b16 %v2188
        %v2917 = vunpack.c.l.b16 %v2189
        %v2918 = vunpack.c.h.b16 %v2189
        %v2919 = vunpack.c.l.b16 %v2190
        %v2920 = vunpack.c.h.b16 %v2190
        %v2921 = vunpack.c.l.b16 %v2191
        %v2922 = vunpack.c.h.b16 %v2191
        %v2923 = vunpack.c.l.b16 %v2192
        %v2924 = vunpack.c.h.b16 %v2192
        %v2925 = vunpack.c.l.b16 %v2193
        %v2926 = vunpack.c.h.b16 %v2193
        %v2927 = vunpack.c.l.b16 %v2194
        %v2928 = vunpack.c.h.b16 %v2194
        %v2929 = vunpack.c.l.b16 %v2195
        %v2930 = vunpack.c.h.b16 %v2195
        %v2931 = vunpack.c.l.b16 %v2196
        %v2932 = vunpack.c.h.b16 %v2196
        %v2933 = vunpack.c.l.b16 %v2197
        %v2934 = vunpack.c.h.b16 %v2197
        %v2935 = vunpack.c.l.b16 %v2198
        %v2936 = vunpack.c.h.b16 %v2198
        %v2937 = vunpack.c.l.b16 %v2199
        %v2938 = vunpack.c.h.b16 %v2199
        %v2939 = vunpack.c.l.b16 %v2200
        %v2940 = vunpack.c.h.b16 %v2200
        %v2941 = vunpack.c.l.b16 %v2201
        %v2942 = vunpack.c.h.b16 %v2201
        %v2943 = vunpack.c.l.b16 %v2202
        %v2944 = vunpack.c.h.b16 %v2202
        %v2945 = vunpack.c.l.b16 %v2203
        %v2946 = vunpack.c.h.b16 %v2203
        %v2947 = vunpack.c.l.b16 %v2204
        %v2948 = vunpack.c.h.b16 %v2204
        %v2949 = vunpack.c.l.b16 %v2205
        %v2950 = vunpack.c.h.b16 %v2205
        %v2951 = vunpack.c.l.b16 %v2206
        %v2952 = vunpack.c.h.b16 %v2206
        %v2953 = vunpack.c.l.b16 %v2207
        %v2954 = vunpack.c.h.b16 %v2207
        %v2955 = vunpack.c.l.b16 %v2208
        %v2956 = vunpack.c.h.b16 %v2208
        %v2957 = vunpack.c.l.b16 %v2209
        %v2958 = vunpack.c.h.b16 %v2209
        %v2959 = vunpack.c.l.b16 %v2210
        %v2960 = vunpack.c.h.b16 %v2210
        %v2961 = vunpack.c.l.b16 %v2211
        %v2962 = vunpack.c.h.b16 %v2211
        %v2963 = vunpack.c.l.b16 %v2212
        %v2964 = vunpack.c.h.b16 %v2212
        %v2965 = vunpack.c.l.b16 %v2213
        %v2966 = vunpack.c.h.b16 %v2213
        %v2967 = vunpack.c.l.b16 %v2214
        %v2968 = vunpack.c.h.b16 %v2214
        %v2969 = vunpack.c.l.b16 %v2215
        %v2970 = vunpack.c.h.b16 %v2215
        %v2971 = vunpack.c.l.b16 %v2216
        %v2972 = vunpack.c.h.b16 %v2216
        %v2973 = vunpack.c.l.b16 %v2217
        %v2974 = vunpack.c.h.b16 %v2217
        %v2975 = vunpack.c.l.b16 %v2218
        %v2976 = vunpack.c.h.b16 %v2218
        %v2977 = vunpack.c.l.b16 %v2219
        %v2978 = vunpack.c.h.b16 %v2219
        %v2979 = vunpack.c.l.b16 %v2220
        %v2980 = vunpack.c.h.b16 %v2220
        %v2981 = vunpack.c.l.b16 %v2221
        %v2982 = vunpack.c.h.b16 %v2221
        %v2983 = vunpack.c.l.b16 %v2222
        %v2984 = vunpack.c.h.b16 %v2222
        %v2985 = vunpack.c.l.b16 %v2223
        %v2986 = vunpack.c.h.b16 %v2223
        %v2987 = vunpack.c.l.b16 %v2224
        %v2988 = vunpack.c.h.b16 %v2224
        %v2989 = vunpack.c.l.b16 %v2225
        %v2990 = vunpack.c.h.b16 %v2225
        %v2991 = vunpack.c.l.b16 %v2226
        %v2992 = vunpack.c.h.b16 %v2226
        %v2993 = vunpack.c.l.b16 %v2227
        %v2994 = vunpack.c.h.b16 %v2227
        %v2995 = vunpack.c.l.b16 %v2228
        %v2996 = vunpack.c.h.b16 %v2228
        %v2997 = vpack.c.b16 %v2493, %v2485
        %v2998 = vpack.c.b16 %v2494, %v2486
        %v2999 = vpack.c.b16 %v2495, %v2487
        %v3000 = vpack.c.b16 %v2496, %v2488
        %v3001 = vpack.c.b16 %v2497, %v2489
        %v3002 = vpack.c.b16 %v2498, %v2490
        %v3003 = vpack.c.b16 %v2499, %v2491
        %v3004 = vpack.c.b16 %v2500, %v2492
        %v3005 = vpack.c.b16 %v2509, %v2501
        %v3006 = vpack.c.b16 %v2510, %v2502
        %v3007 = vpack.c.b16 %v2511, %v2503
        %v3008 = vpack.c.b16 %v2512, %v2504
        %v3009 = vpack.c.b16 %v2513, %v2505
        %v3010 = vpack.c.b16 %v2514, %v2506
        %v3011 = vpack.c.b16 %v2515, %v2507
        %v3012 = vpack.c.b16 %v2516, %v2508
        %v3013 = vpack.c.b16 %v2525, %v2517
        %v3014 = vpack.c.b16 %v2526, %v2518
        %v3015 = vpack.c.b16 %v2527, %v2519
        %v3016 = vpack.c.b16 %v2528, %v2520
        %v3017 = vpack.c.b16 %v2529, %v2521
        %v3018 = vpack.c.b16 %v2530, %v2522
        %v3019 = vpack.c.b16 %v2531, %v2523
        %v3020 = vpack.c.b16 %v2532, %v2524
        %v3021 = vpack.c.b16 %v2541, %v2533
        %v3022 = vpack.c.b16 %v2542, %v2534
        %v3023 = vpack.c.b16 %v2543, %v2535
        %v3024 = vpack.c.b16 %v2544, %v2536
        %v3025 = vpack.c.b16 %v2545, %v2537
        %v3026 = vpack.c.b16 %v2546, %v2538
        %v3027 = vpack.c.b16 %v2547, %v2539
        %v3028 = vpack.c.b16 %v2548, %v2540
        %v3029 = vpack.c.b16 %v2557, %v2549
        %v3030 = vpack.c.b16 %v2558, %v2550
        %v3031 = vpack.c.b16 %v2559, %v2551
        %v3032 = vpack.c.b16 %v2560, %v2552
        %v3033 = vpack.c.b16 %v2561, %v2553
        %v3034 = vpack.c.b16 %v2562, %v2554
        %v3035 = vpack.c.b16 %v2563, %v2555
        %v3036 = vpack.c.b16 %v2564, %v2556
        %v3037 = vpack.c.b16 %v2573, %v2565
        %v3038 = vpack.c.b16 %v2574, %v2566
        %v3039 = vpack.c.b16 %v2575, %v2567
        %v3040 = vpack.c.b16 %v2576, %v2568
        %v3041 = vpack.c.b16 %v2577, %v2569
        %v3042 = vpack.c.b16 %v2578, %v2570
        %v3043 = vpack.c.b16 %v2579, %v2571
        %v3044 = vpack.c.b16 %v2580, %v2572
        %v3045 = vpack.c.b16 %v2589, %v2581
        %v3046 = vpack.c.b16 %v2590, %v2582
        %v3047 = vpack.c.b16 %v2591, %v2583
        %v3048 = vpack.c.b16 %v2592, %v2584
        %v3049 = vpack.c.b16 %v2593, %v2585
        %v3050 = vpack.c.b16 %v2594, %v2586
        %v3051 = vpack.c.b16 %v2595, %v2587
        %v3052 = vpack.c.b16 %v2596, %v2588
        %v3053 = vpack.c.b16 %v2605, %v2597
        %v3054 = vpack.c.b16 %v2606, %v2598
        %v3055 = vpack.c.b16 %v2607, %v2599
        %v3056 = vpack.c.b16 %v2608, %v2600
        %v3057 = vpack.c.b16 %v2609, %v2601
        %v3058 = vpack.c.b16 %v2610, %v2602
        %v3059 = vpack.c.b16 %v2611, %v2603
        %v3060 = vpack.c.b16 %v2612, %v2604
        %v3061 = vpack.c.b16 %v2621, %v2613
        %v3062 = vpack.c.b16 %v2622, %v2614
        %v3063 = vpack.c.b16 %v2623, %v2615
        %v3064 = vpack.c.b16 %v2624, %v2616
        %v3065 = vpack.c.b16 %v2625, %v2617
        %v3066 = vpack.c.b16 %v2626, %v2618
        %v3067 = vpack.c.b16 %v2627, %v2619
        %v3068 = vpack.c.b16 %v2628, %v2620
        %v3069 = vpack.c.b16 %v2637, %v2629
        %v3070 = vpack.c.b16 %v2638, %v2630
        %v3071 = vpack.c.b16 %v2639, %v2631
        %v3072 = vpack.c.b16 %v2640, %v2632
        %v3073 = vpack.c.b16 %v2641, %v2633
        %v3074 = vpack.c.b16 %v2642, %v2634
        %v3075 = vpack.c.b16 %v2643, %v2635
        %v3076 = vpack.c.b16 %v2644, %v2636
        %v3077 = vpack.c.b16 %v2653, %v2645
        %v3078 = vpack.c.b16 %v2654, %v2646
        %v3079 = vpack.c.b16 %v2655, %v2647
        %v3080 = vpack.c.b16 %v2656, %v2648
        %v3081 = vpack.c.b16 %v2657, %v2649
        %v3082 = vpack.c.b16 %v2658, %v2650
        %v3083 = vpack.c.b16 %v2659, %v2651
        %v3084 = vpack.c.b16 %v2660, %v2652
        %v3085 = vpack.c.b16 %v2669, %v2661
        %v3086 = vpack.c.b16 %v2670, %v2662
        %v3087 = vpack.c.b16 %v2671, %v2663
        %v3088 = vpack.c.b16 %v2672, %v2664
        %v3089 = vpack.c.b16 %v2673, %v2665
        %v3090 = vpack.c.b16 %v2674, %v2666
        %v3091 = vpack.c.b16 %v2675, %v2667
        %v3092 = vpack.c.b16 %v2676, %v2668
        %v3093 = vpack.c.b16 %v2685, %v2677
        %v3094 = vpack.c.b16 %v2686, %v2678
        %v3095 = vpack.c.b16 %v2687, %v2679
        %v3096 = vpack.c.b16 %v2688, %v2680
        %v3097 = vpack.c.b16 %v2689, %v2681
        %v3098 = vpack.c.b16 %v2690, %v2682
        %v3099 = vpack.c.b16 %v2691, %v2683
        %v3100 = vpack.c.b16 %v2692, %v2684
        %v3101 = vpack.c.b16 %v2701, %v2693
        %v3102 = vpack.c.b16 %v2702, %v2694
        %v3103 = vpack.c.b16 %v2703, %v2695
        %v3104 = vpack.c.b16 %v2704, %v2696
        %v3105 = vpack.c.b16 %v2705, %v2697
        %v3106 = vpack.c.b16 %v2706, %v2698
        %v3107 = vpack.c.b16 %v2707, %v2699
        %v3108 = vpack.c.b16 %v2708, %v2700
        %v3109 = vpack.c.b16 %v2717, %v2709
        %v3110 = vpack.c.b16 %v2718, %v2710
        %v3111 = vpack.c.b16 %v2719, %v2711
        %v3112 = vpack.c.b16 %v2720, %v2712
        %v3113 = vpack.c.b16 %v2721, %v2713
        %v3114 = vpack.c.b16 %v2722, %v2714
        %v3115 = vpack.c.b16 %v2723, %v2715
        %v3116 = vpack.c.b16 %v2724, %v2716
        %v3117 = vpack.c.b16 %v2733, %v2725
        %v3118 = vpack.c.b16 %v2734, %v2726
        %v3119 = vpack.c.b16 %v2735, %v2727
        %v3120 = vpack.c.b16 %v2736, %v2728
        %v3121 = vpack.c.b16 %v2737, %v2729
        %v3122 = vpack.c.b16 %v2738, %v2730
        %v3123 = vpack.c.b16 %v2739, %v2731
        %v3124 = vpack.c.b16 %v2740, %v2732
        %v3125 = vpack.c.b16 %v2749, %v2741
        %v3126 = vpack.c.b16 %v2750, %v2742
        %v3127 = vpack.c.b16 %v2751, %v2743
        %v3128 = vpack.c.b16 %v2752, %v2744
        %v3129 = vpack.c.b16 %v2753, %v2745
        %v3130 = vpack.c.b16 %v2754, %v2746
        %v3131 = vpack.c.b16 %v2755, %v2747
        %v3132 = vpack.c.b16 %v2756, %v2748
        %v3133 = vpack.c.b16 %v2765, %v2757
        %v3134 = vpack.c.b16 %v2766, %v2758
        %v3135 = vpack.c.b16 %v2767, %v2759
        %v3136 = vpack.c.b16 %v2768, %v2760
        %v3137 = vpack.c.b16 %v2769, %v2761
        %v3138 = vpack.c.b16 %v2770, %v2762
        %v3139 = vpack.c.b16 %v2771, %v2763
        %v3140 = vpack.c.b16 %v2772, %v2764
        %v3141 = vpack.c.b16 %v2781, %v2773
        %v3142 = vpack.c.b16 %v2782, %v2774
        %v3143 = vpack.c.b16 %v2783, %v2775
        %v3144 = vpack.c.b16 %v2784, %v2776
        %v3145 = vpack.c.b16 %v2785, %v2777
        %v3146 = vpack.c.b16 %v2786, %v2778
        %v3147 = vpack.c.b16 %v2787, %v2779
        %v3148 = vpack.c.b16 %v2788, %v2780
        %v3149 = vpack.c.b16 %v2797, %v2789
        %v3150 = vpack.c.b16 %v2798, %v2790
        %v3151 = vpack.c.b16 %v2799, %v2791
        %v3152 = vpack.c.b16 %v2800, %v2792
        %v3153 = vpack.c.b16 %v2801, %v2793
        %v3154 = vpack.c.b16 %v2802, %v2794
        %v3155 = vpack.c.b16 %v2803, %v2795
        %v3156 = vpack.c.b16 %v2804, %v2796
        %v3157 = vpack.c.b16 %v2813, %v2805
        %v3158 = vpack.c.b16 %v2814, %v2806
        %v3159 = vpack.c.b16 %v2815, %v2807
        %v3160 = vpack.c.b16 %v2816, %v2808
        %v3161 = vpack.c.b16 %v2817, %v2809
        %v3162 = vpack.c.b16 %v2818, %v2810
        %v3163 = vpack.c.b16 %v2819, %v2811
        %v3164 = vpack.c.b16 %v2820, %v2812
        %v3165 = vpack.c.b16 %v2829, %v2821
        %v3166 = vpack.c.b16 %v2830, %v2822
        %v3167 = vpack.c.b16 %v2831, %v2823
        %v3168 = vpack.c.b16 %v2832, %v2824
        %v3169 = vpack.c.b16 %v2833, %v2825
        %v3170 = vpack.c.b16 %v2834, %v2826
        %v3171 = vpack.c.b16 %v2835, %v2827
        %v3172 = vpack.c.b16 %v2836, %v2828
        %v3173 = vpack.c.b16 %v2845, %v2837
        %v3174 = vpack.c.b16 %v2846, %v2838
        %v3175 = vpack.c.b16 %v2847, %v2839
        %v3176 = vpack.c.b16 %v2848, %v2840
        %v3177 = vpack.c.b16 %v2849, %v2841
        %v3178 = vpack.c.b16 %v2850, %v2842
        %v3179 = vpack.c.b16 %v2851, %v2843
        %v3180 = vpack.c.b16 %v2852, %v2844
        %v3181 = vpack.c.b16 %v2861, %v2853
        %v3182 = vpack.c.b16 %v2862, %v2854
        %v3183 = vpack.c.b16 %v2863, %v2855
        %v3184 = vpack.c.b16 %v2864, %v2856
        %v3185 = vpack.c.b16 %v2865, %v2857
        %v3186 = vpack.c.b16 %v2866, %v2858
        %v3187 = vpack.c.b16 %v2867, %v2859
        %v3188 = vpack.c.b16 %v2868, %v2860
        %v3189 = vpack.c.b16 %v2877, %v2869
        %v3190 = vpack.c.b16 %v2878, %v2870
        %v3191 = vpack.c.b16 %v2879, %v2871
        %v3192 = vpack.c.b16 %v2880, %v2872
        %v3193 = vpack.c.b16 %v2881, %v2873
        %v3194 = vpack.c.b16 %v2882, %v2874
        %v3195 = vpack.c.b16 %v2883, %v2875
        %v3196 = vpack.c.b16 %v2884, %v2876
        %v3197 = vpack.c.b16 %v2893, %v2885
        %v3198 = vpack.c.b16 %v2894, %v2886
        %v3199 = vpack.c.b16 %v2895, %v2887
        %v3200 = vpack.c.b16 %v2896, %v2888
        %v3201 = vpack.c.b16 %v2897, %v2889
        %v3202 = vpack.c.b16 %v2898, %v2890
        %v3203 = vpack.c.b16 %v2899, %v2891
        %v3204 = vpack.c.b16 %v2900, %v2892
        %v3205 = vpack.c.b16 %v2909, %v2901
        %v3206 = vpack.c.b16 %v2910, %v2902
        %v3207 = vpack.c.b16 %v2911, %v2903
        %v3208 = vpack.c.b16 %v2912, %v2904
        %v3209 = vpack.c.b16 %v2913, %v2905
        %v3210 = vpack.c.b16 %v2914, %v2906
        %v3211 = vpack.c.b16 %v2915, %v2907
        %v3212 = vpack.c.b16 %v2916, %v2908
        %v3213 = vpack.c.b16 %v2925, %v2917
        %v3214 = vpack.c.b16 %v2926, %v2918
        %v3215 = vpack.c.b16 %v2927, %v2919
        %v3216 = vpack.c.b16 %v2928, %v2920
        %v3217 = vpack.c.b16 %v2929, %v2921
        %v3218 = vpack.c.b16 %v2930, %v2922
        %v3219 = vpack.c.b16 %v2931, %v2923
        %v3220 = vpack.c.b16 %v2932, %v2924
        %v3221 = vpack.c.b16 %v2941, %v2933
        %v3222 = vpack.c.b16 %v2942, %v2934
        %v3223 = vpack.c.b16 %v2943, %v2935
        %v3224 = vpack.c.b16 %v2944, %v2936
        %v3225 = vpack.c.b16 %v2945, %v2937
        %v3226 = vpack.c.b16 %v2946, %v2938
        %v3227 = vpack.c.b16 %v2947, %v2939
        %v3228 = vpack.c.b16 %v2948, %v2940
        %v3229 = vpack.c.b16 %v2957, %v2949
        %v3230 = vpack.c.b16 %v2958, %v2950
        %v3231 = vpack.c.b16 %v2959, %v2951
        %v3232 = vpack.c.b16 %v2960, %v2952
        %v3233 = vpack.c.b16 %v2961, %v2953
        %v3234 = vpack.c.b16 %v2962, %v2954
        %v3235 = vpack.c.b16 %v2963, %v2955
        %v3236 = vpack.c.b16 %v2964, %v2956
        %v3237 = vpack.c.b16 %v2973, %v2965
        %v3238 = vpack.c.b16 %v2974, %v2966
        %v3239 = vpack.c.b16 %v2975, %v2967
        %v3240 = vpack.c.b16 %v2976, %v2968
        %v3241 = vpack.c.b16 %v2977, %v2969
        %v3242 = vpack.c.b16 %v2978, %v2970
        %v3243 = vpack.c.b16 %v2979, %v2971
        %v3244 = vpack.c.b16 %v2980, %v2972
        %v3245 = vpack.c.b16 %v2989, %v2981
        %v3246 = vpack.c.b16 %v2990, %v2982
        %v3247 = vpack.c.b16 %v2991, %v2983
        %v3248 = vpack.c.b16 %v2992, %v2984
        %v3249 = vpack.c.b16 %v2993, %v2985
        %v3250 = vpack.c.b16 %v2994, %v2986
        %v3251 = vpack.c.b16 %v2995, %v2987
        %v3252 = vpack.c.b16 %v2996, %v2988
        %3509 = vmatprep.subr.bf16.mxu0 %v2998
        %3510 = vmatpush1.bf16.msra.mxu0 %v2997
        %3511 = vmatprep.subr.bf16.mxu0 %v3006
        %3512 = vmatpush1.bf16.msra.mxu0 %v3005
        %3513 = vmatprep.subr.bf16.mxu0 %v3014
        %3514 = vmatpush1.bf16.msra.mxu0 %v3013
        %3515 = vmatprep.subr.bf16.mxu0 %v3022
        %3516 = vmatpush1.bf16.msra.mxu0 %v3021
        %3517 = vmatprep.subr.bf16.mxu0 %v3030
        %3518 = vmatpush1.bf16.msra.mxu0 %v3029
        %3519 = vmatprep.subr.bf16.mxu0 %v3038
        %3520 = vmatpush1.bf16.msra.mxu0 %v3037
        %3521 = vmatprep.subr.bf16.mxu0 %v3046
        %3522 = vmatpush1.bf16.msra.mxu0 %v3045
        %3523 = vmatprep.subr.bf16.mxu0 %v3054
        %3524 = vmatpush1.bf16.msra.mxu0 %v3053
        %3525 = vmatprep.subr.bf16.mxu0 %v3062
        %3526 = vmatpush1.bf16.msra.mxu0 %v3061
        %3527 = vmatprep.subr.bf16.mxu0 %v3070
        %3528 = vmatpush1.bf16.msra.mxu0 %v3069
        %3529 = vmatprep.subr.bf16.mxu0 %v3078
        %3530 = vmatpush1.bf16.msra.mxu0 %v3077
        %3531 = vmatprep.subr.bf16.mxu0 %v3086
        %3532 = vmatpush1.bf16.msra.mxu0 %v3085
        %3533 = vmatprep.subr.bf16.mxu0 %v3094
        %3534 = vmatpush1.bf16.msra.mxu0 %v3093
        %3535 = vmatprep.subr.bf16.mxu0 %v3102
        %3536 = vmatpush1.bf16.msra.mxu0 %v3101
        %3537 = vmatprep.subr.bf16.mxu0 %v3110
        %3538 = vmatpush1.bf16.msra.mxu0 %v3109
        %3539 = vmatprep.subr.bf16.mxu0 %v3118
        %3540 = vmatpush1.bf16.msra.mxu0 %v3117
        %3541 = vmatprep.mubr.bf16.mxu0 %v1910
        %3542 = vmatmul.mubr.bf16.gmra.mrb[0].mxu0 %v1909
        %v3543 = vpop.f32.mrb[0].mxu0
        %v3544 = vadd.f32 0.0, %v3543
        %v3545 = vpop.f32.mrb[0].mxu0
        %v3546 = vadd.f32 0.0, %v3545
        %v3547 = vpop.f32.mrb[0].mxu0
        %v3548 = vadd.f32 0.0, %v3547
        %v3549 = vpop.f32.mrb[0].mxu0
        %v3550 = vadd.f32 0.0, %v3549
        %3551 = vmatprep.mubr.bf16.mxu0 %v1914
        %3552 = vmatmul.mubr.bf16.gmra.mrb[0].mxu0 %v1913
        %v3553 = vpop.f32.mrb[0].mxu0
        %v3554 = vadd.f32 0.0, %v3553
        %v3555 = vpop.f32.mrb[0].mxu0
        %v3556 = vadd.f32 0.0, %v3555
        %v3557 = vpop.f32.mrb[0].mxu0
        %v3558 = vadd.f32 0.0, %v3557
        %v3559 = vpop.f32.mrb[0].mxu0
        %v3560 = vadd.f32 0.0, %v3559
        %3561 = vmatprep.mubr.bf16.mxu0 %v1918
        %3562 = vmatmul.mubr.bf16.gmra.mrb[0].mxu0 %v1917
        %v3563 = vpop.f32.mrb[0].mxu0
        %v3564 = vadd.f32 0.0, %v3563
        %v3565 = vpop.f32.mrb[0].mxu0
        %v3566 = vadd.f32 0.0, %v3565
        %v3567 = vpop.f32.mrb[0].mxu0
        %v3568 = vadd.f32 0.0, %v3567
        %v3569 = vpop.f32.mrb[0].mxu0
        %v3570 = vadd.f32 0.0, %v3569
        %3571 = vmatprep.mubr.bf16.mxu0 %v1922
        %3572 = vmatmul.mubr.bf16.gmra.mrb[0].mxu0 %v1921
        %v3573 = vpop.f32.mrb[0].mxu0
        %v3574 = vadd.f32 0.0, %v3573
        %v3575 = vpop.f32.mrb[0].mxu0
        %v3576 = vadd.f32 0.0, %v3575
        %v3577 = vpop.f32.mrb[0].mxu0
        %v3578 = vadd.f32 0.0, %v3577
        %v3579 = vpop.f32.mrb[0].mxu0
        %v3580 = vadd.f32 0.0, %v3579
        %3581 = vmatprep.mubr.bf16.mxu0 %v1926
        %3582 = vmatmul.mubr.bf16.gmra.mrb[0].mxu0 %v1925
        %v3583 = vpop.f32.mrb[0].mxu0
        %v3584 = vadd.f32 0.0, %v3583
        %v3585 = vpop.f32.mrb[0].mxu0
        %v3586 = vadd.f32 0.0, %v3585
        %v3587 = vpop.f32.mrb[0].mxu0
        %v3588 = vadd.f32 0.0, %v3587
        %v3589 = vpop.f32.mrb[0].mxu0
        %v3590 = vadd.f32 0.0, %v3589
        %3591 = vmatprep.mubr.bf16.mxu0 %v1930
        %3592 = vmatmul.mubr.bf16.gmra.mrb[0].mxu0 %v1929
        %v3593 = vpop.f32.mrb[0].mxu0
        %v3594 = vadd.f32 0.0, %v3593
        %v3595 = vpop.f32.mrb[0].mxu0
        %v3596 = vadd.f32 0.0, %v3595
        %v3597 = vpop.f32.mrb[0].mxu0
        %v3598 = vadd.f32 0.0, %v3597
        %v3599 = vpop.f32.mrb[0].mxu0
        %v3600 = vadd.f32 0.0, %v3599
        %3601 = vmatprep.mubr.bf16.mxu0 %v1934
        %3602 = vmatmul.mubr.bf16.gmra.mrb[0].mxu0 %v1933
        %v3603 = vpop.f32.mrb[0].mxu0
        %v3604 = vadd.f32 0.0, %v3603
        %v3605 = vpop.f32.mrb[0].mxu0
        %v3606 = vadd.f32 0.0, %v3605
        %v3607 = vpop.f32.mrb[0].mxu0
        %v3608 = vadd.f32 0.0, %v3607
        %v3609 = vpop.f32.mrb[0].mxu0
        %v3610 = vadd.f32 0.0, %v3609
        %3611 = vmatprep.mubr.bf16.mxu0 %v1938
        %3612 = vmatmul.mubr.bf16.gmra.mrb[0].mxu0 %v1937
        %v3613 = vpop.f32.mrb[0].mxu0
        %v3614 = vadd.f32 0.0, %v3613
        %v3615 = vpop.f32.mrb[0].mxu0
        %v3616 = vadd.f32 0.0, %v3615
        %v3617 = vpop.f32.mrb[0].mxu0
        %v3618 = vadd.f32 0.0, %v3617
        %v3619 = vpop.f32.mrb[0].mxu0
        %v3620 = vadd.f32 0.0, %v3619
        %3621 = vmatprep.mubr.bf16.mxu0 %v1942
        %3622 = vmatmul.mubr.bf16.gmra.mrb[0].mxu0 %v1941
        %v3623 = vpop.f32.mrb[0].mxu0
        %v3624 = vadd.f32 0.0, %v3623
        %v3625 = vpop.f32.mrb[0].mxu0
        %v3626 = vadd.f32 0.0, %v3625
        %v3627 = vpop.f32.mrb[0].mxu0
        %v3628 = vadd.f32 0.0, %v3627
        %v3629 = vpop.f32.mrb[0].mxu0
        %v3630 = vadd.f32 0.0, %v3629
        %3631 = vmatprep.mubr.bf16.mxu0 %v1946
        %3632 = vmatmul.mubr.bf16.gmra.mrb[0].mxu0 %v1945
        %v3633 = vpop.f32.mrb[0].mxu0
        %v3634 = vadd.f32 0.0, %v3633
        %v3635 = vpop.f32.mrb[0].mxu0
        %v3636 = vadd.f32 0.0, %v3635
        %v3637 = vpop.f32.mrb[0].mxu0
        %v3638 = vadd.f32 0.0, %v3637
        %v3639 = vpop.f32.mrb[0].mxu0
        %v3640 = vadd.f32 0.0, %v3639
        %3641 = vmatprep.mubr.bf16.mxu0 %v1950
        %3642 = vmatmul.mubr.bf16.gmra.mrb[0].mxu0 %v1949
        %v3643 = vpop.f32.mrb[0].mxu0
        %v3644 = vadd.f32 0.0, %v3643
        %v3645 = vpop.f32.mrb[0].mxu0
        %v3646 = vadd.f32 0.0, %v3645
        %v3647 = vpop.f32.mrb[0].mxu0
        %v3648 = vadd.f32 0.0, %v3647
        %v3649 = vpop.f32.mrb[0].mxu0
        %v3650 = vadd.f32 0.0, %v3649
        %3651 = vmatprep.mubr.bf16.mxu0 %v1954
        %3652 = vmatmul.mubr.bf16.gmra.mrb[0].mxu0 %v1953
        %v3653 = vpop.f32.mrb[0].mxu0
        %v3654 = vadd.f32 0.0, %v3653
        %v3655 = vpop.f32.mrb[0].mxu0
        %v3656 = vadd.f32 0.0, %v3655
        %v3657 = vpop.f32.mrb[0].mxu0
        %v3658 = vadd.f32 0.0, %v3657
        %v3659 = vpop.f32.mrb[0].mxu0
        %v3660 = vadd.f32 0.0, %v3659
        %3661 = vmatprep.mubr.bf16.mxu0 %v1958
        %3662 = vmatmul.mubr.bf16.gmra.mrb[0].mxu0 %v1957
        %v3663 = vpop.f32.mrb[0].mxu0
        %v3664 = vadd.f32 0.0, %v3663
        %v3665 = vpop.f32.mrb[0].mxu0
        %v3666 = vadd.f32 0.0, %v3665
        %v3667 = vpop.f32.mrb[0].mxu0
        %v3668 = vadd.f32 0.0, %v3667
        %v3669 = vpop.f32.mrb[0].mxu0
        %v3670 = vadd.f32 0.0, %v3669
        %3671 = vmatprep.mubr.bf16.mxu0 %v1962
        %3672 = vmatmul.mubr.bf16.gmra.mrb[0].mxu0 %v1961
        %v3673 = vpop.f32.mrb[0].mxu0
        %v3674 = vadd.f32 0.0, %v3673
        %v3675 = vpop.f32.mrb[0].mxu0
        %v3676 = vadd.f32 0.0, %v3675
        %v3677 = vpop.f32.mrb[0].mxu0
        %v3678 = vadd.f32 0.0, %v3677
        %v3679 = vpop.f32.mrb[0].mxu0
        %v3680 = vadd.f32 0.0, %v3679
        %3681 = vmatprep.mubr.bf16.mxu0 %v1966
        %3682 = vmatmul.mubr.bf16.gmra.mrb[0].mxu0 %v1965
        %v3683 = vpop.f32.mrb[0].mxu0
        %v3684 = vadd.f32 0.0, %v3683
        %v3685 = vpop.f32.mrb[0].mxu0
        %v3686 = vadd.f32 0.0, %v3685
        %v3687 = vpop.f32.mrb[0].mxu0
        %v3688 = vadd.f32 0.0, %v3687
        %v3689 = vpop.f32.mrb[0].mxu0
        %v3690 = vadd.f32 0.0, %v3689
        %3691 = vmatprep.mubr.bf16.mxu0 %v1970
        %3692 = vmatmul.mubr.bf16.gmra.mrb[0].mxu0 %v1969
        %v3693 = vpop.f32.mrb[0].mxu0
        %v3694 = vadd.f32 0.0, %v3693
        %v3695 = vpop.f32.mrb[0].mxu0
        %v3696 = vadd.f32 0.0, %v3695
        %v3697 = vpop.f32.mrb[0].mxu0
        %v3698 = vadd.f32 0.0, %v3697
        %v3699 = vpop.f32.mrb[0].mxu0
        %v3700 = vadd.f32 0.0, %v3699
        %3701 = vdwg.mxu0
        %3702 = vmatprep.subr.bf16.mxu0 %v3126
        %3703 = vmatpush1.bf16.msra.mxu0 %v3125
        %3704 = vmatprep.subr.bf16.mxu0 %v3134
        %3705 = vmatpush1.bf16.msra.mxu0 %v3133
        %3706 = vmatprep.subr.bf16.mxu0 %v3142
        %3707 = vmatpush1.bf16.msra.mxu0 %v3141
        %3708 = vmatprep.subr.bf16.mxu0 %v3150
        %3709 = vmatpush1.bf16.msra.mxu0 %v3149
        %3710 = vmatprep.subr.bf16.mxu0 %v3158
        %3711 = vmatpush1.bf16.msra.mxu0 %v3157
        %3712 = vmatprep.subr.bf16.mxu0 %v3166
        %3713 = vmatpush1.bf16.msra.mxu0 %v3165
        %3714 = vmatprep.subr.bf16.mxu0 %v3174
        %3715 = vmatpush1.bf16.msra.mxu0 %v3173
        %3716 = vmatprep.subr.bf16.mxu0 %v3182
        %3717 = vmatpush1.bf16.msra.mxu0 %v3181
        %3718 = vmatprep.subr.bf16.mxu0 %v3190
        %3719 = vmatpush1.bf16.msra.mxu0 %v3189
        %3720 = vmatprep.subr.bf16.mxu0 %v3198
        %3721 = vmatpush1.bf16.msra.mxu0 %v3197
        %3722 = vmatprep.subr.bf16.mxu0 %v3206
        %3723 = vmatpush1.bf16.msra.mxu0 %v3205
        %3724 = vmatprep.subr.bf16.mxu0 %v3214
        %3725 = vmatpush1.bf16.msra.mxu0 %v3213
        %3726 = vmatprep.subr.bf16.mxu0 %v3222
        %3727 = vmatpush1.bf16.msra.mxu0 %v3221
        %3728 = vmatprep.subr.bf16.mxu0 %v3230
        %3729 = vmatpush1.bf16.msra.mxu0 %v3229
        %3730 = vmatprep.subr.bf16.mxu0 %v3238
        %3731 = vmatpush1.bf16.msra.mxu0 %v3237
        %3732 = vmatprep.subr.bf16.mxu0 %v3246
        %3733 = vmatpush1.bf16.msra.mxu0 %v3245
        %3734 = vmatprep.mubr.bf16.mxu0 %v1912
        %3735 = vmatmul.mubr.bf16.gmra.mrb[0].mxu0 %v1911
        %v3736 = vpop.f32.mrb[0].mxu0
        %v3737 = vadd.f32 %v3544, %v3736
        %v3738 = vpop.f32.mrb[0].mxu0
        %v3739 = vadd.f32 %v3546, %v3738
        %v3740 = vpop.f32.mrb[0].mxu0
        %v3741 = vadd.f32 %v3548, %v3740
        %v3742 = vpop.f32.mrb[0].mxu0
        %v3743 = vadd.f32 %v3550, %v3742
        %3744 = vmatprep.mubr.bf16.mxu0 %v1916
        %3745 = vmatmul.mubr.bf16.gmra.mrb[0].mxu0 %v1915
        %v3746 = vpop.f32.mrb[0].mxu0
        %v3747 = vadd.f32 %v3554, %v3746
        %v3748 = vpop.f32.mrb[0].mxu0
        %v3749 = vadd.f32 %v3556, %v3748
        %v3750 = vpop.f32.mrb[0].mxu0
        %v3751 = vadd.f32 %v3558, %v3750
        %v3752 = vpop.f32.mrb[0].mxu0
        %v3753 = vadd.f32 %v3560, %v3752
        %3754 = vmatprep.mubr.bf16.mxu0 %v1920
        %3755 = vmatmul.mubr.bf16.gmra.mrb[0].mxu0 %v1919
        %v3756 = vpop.f32.mrb[0].mxu0
        %v3757 = vadd.f32 %v3564, %v3756
        %v3758 = vpop.f32.mrb[0].mxu0
        %v3759 = vadd.f32 %v3566, %v3758
        %v3760 = vpop.f32.mrb[0].mxu0
        %v3761 = vadd.f32 %v3568, %v3760
        %v3762 = vpop.f32.mrb[0].mxu0
        %v3763 = vadd.f32 %v3570, %v3762
        %3764 = vmatprep.mubr.bf16.mxu0 %v1924
        %3765 = vmatmul.mubr.bf16.gmra.mrb[0].mxu0 %v1923
        %v3766 = vpop.f32.mrb[0].mxu0
        %v3767 = vadd.f32 %v3574, %v3766
        %v3768 = vpop.f32.mrb[0].mxu0
        %v3769 = vadd.f32 %v3576, %v3768
        %v3770 = vpop.f32.mrb[0].mxu0
        %v3771 = vadd.f32 %v3578, %v3770
        %v3772 = vpop.f32.mrb[0].mxu0
        %v3773 = vadd.f32 %v3580, %v3772
        %3774 = vmatprep.mubr.bf16.mxu0 %v1928
        %3775 = vmatmul.mubr.bf16.gmra.mrb[0].mxu0 %v1927
        %v3776 = vpop.f32.mrb[0].mxu0
        %v3777 = vadd.f32 %v3584, %v3776
        %v3778 = vpop.f32.mrb[0].mxu0
        %v3779 = vadd.f32 %v3586, %v3778
        %v3780 = vpop.f32.mrb[0].mxu0
        %v3781 = vadd.f32 %v3588, %v3780
        %v3782 = vpop.f32.mrb[0].mxu0
        %v3783 = vadd.f32 %v3590, %v3782
        %3784 = vmatprep.mubr.bf16.mxu0 %v1932
        %3785 = vmatmul.mubr.bf16.gmra.mrb[0].mxu0 %v1931
        %v3786 = vpop.f32.mrb[0].mxu0
        %v3787 = vadd.f32 %v3594, %v3786
        %v3788 = vpop.f32.mrb[0].mxu0
        %v3789 = vadd.f32 %v3596, %v3788
        %v3790 = vpop.f32.mrb[0].mxu0
        %v3791 = vadd.f32 %v3598, %v3790
        %v3792 = vpop.f32.mrb[0].mxu0
        %v3793 = vadd.f32 %v3600, %v3792
        %3794 = vmatprep.mubr.bf16.mxu0 %v1936
        %3795 = vmatmul.mubr.bf16.gmra.mrb[0].mxu0 %v1935
        %v3796 = vpop.f32.mrb[0].mxu0
        %v3797 = vadd.f32 %v3604, %v3796
        %v3798 = vpop.f32.mrb[0].mxu0
        %v3799 = vadd.f32 %v3606, %v3798
        %v3800 = vpop.f32.mrb[0].mxu0
        %v3801 = vadd.f32 %v3608, %v3800
        %v3802 = vpop.f32.mrb[0].mxu0
        %v3803 = vadd.f32 %v3610, %v3802
        %3804 = vmatprep.mubr.bf16.mxu0 %v1940
        %3805 = vmatmul.mubr.bf16.gmra.mrb[0].mxu0 %v1939
        %v3806 = vpop.f32.mrb[0].mxu0
        %v3807 = vadd.f32 %v3614, %v3806
        %v3808 = vpop.f32.mrb[0].mxu0
        %v3809 = vadd.f32 %v3616, %v3808
        %v3810 = vpop.f32.mrb[0].mxu0
        %v3811 = vadd.f32 %v3618, %v3810
        %v3812 = vpop.f32.mrb[0].mxu0
        %v3813 = vadd.f32 %v3620, %v3812
        %3814 = vmatprep.mubr.bf16.mxu0 %v1944
        %3815 = vmatmul.mubr.bf16.gmra.mrb[0].mxu0 %v1943
        %v3816 = vpop.f32.mrb[0].mxu0
        %v3817 = vadd.f32 %v3624, %v3816
        %v3818 = vpop.f32.mrb[0].mxu0
        %v3819 = vadd.f32 %v3626, %v3818
        %v3820 = vpop.f32.mrb[0].mxu0
        %v3821 = vadd.f32 %v3628, %v3820
        %v3822 = vpop.f32.mrb[0].mxu0
        %v3823 = vadd.f32 %v3630, %v3822
        %3824 = vmatprep.mubr.bf16.mxu0 %v1948
        %3825 = vmatmul.mubr.bf16.gmra.mrb[0].mxu0 %v1947
        %v3826 = vpop.f32.mrb[0].mxu0
        %v3827 = vadd.f32 %v3634, %v3826
        %v3828 = vpop.f32.mrb[0].mxu0
        %v3829 = vadd.f32 %v3636, %v3828
        %v3830 = vpop.f32.mrb[0].mxu0
        %v3831 = vadd.f32 %v3638, %v3830
        %v3832 = vpop.f32.mrb[0].mxu0
        %v3833 = vadd.f32 %v3640, %v3832
        %3834 = vmatprep.mubr.bf16.mxu0 %v1952
        %3835 = vmatmul.mubr.bf16.gmra.mrb[0].mxu0 %v1951
        %v3836 = vpop.f32.mrb[0].mxu0
        %v3837 = vadd.f32 %v3644, %v3836
        %v3838 = vpop.f32.mrb[0].mxu0
        %v3839 = vadd.f32 %v3646, %v3838
        %v3840 = vpop.f32.mrb[0].mxu0
        %v3841 = vadd.f32 %v3648, %v3840
        %v3842 = vpop.f32.mrb[0].mxu0
        %v3843 = vadd.f32 %v3650, %v3842
        %3844 = vmatprep.mubr.bf16.mxu0 %v1956
        %3845 = vmatmul.mubr.bf16.gmra.mrb[0].mxu0 %v1955
        %v3846 = vpop.f32.mrb[0].mxu0
        %v3847 = vadd.f32 %v3654, %v3846
        %v3848 = vpop.f32.mrb[0].mxu0
        %v3849 = vadd.f32 %v3656, %v3848
        %v3850 = vpop.f32.mrb[0].mxu0
        %v3851 = vadd.f32 %v3658, %v3850
        %v3852 = vpop.f32.mrb[0].mxu0
        %v3853 = vadd.f32 %v3660, %v3852
        %3854 = vmatprep.mubr.bf16.mxu0 %v1960
        %3855 = vmatmul.mubr.bf16.gmra.mrb[0].mxu0 %v1959
        %v3856 = vpop.f32.mrb[0].mxu0
        %v3857 = vadd.f32 %v3664, %v3856
        %v3858 = vpop.f32.mrb[0].mxu0
        %v3859 = vadd.f32 %v3666, %v3858
        %v3860 = vpop.f32.mrb[0].mxu0
        %v3861 = vadd.f32 %v3668, %v3860
        %v3862 = vpop.f32.mrb[0].mxu0
        %v3863 = vadd.f32 %v3670, %v3862
        %3864 = vmatprep.mubr.bf16.mxu0 %v1964
        %3865 = vmatmul.mubr.bf16.gmra.mrb[0].mxu0 %v1963
        %v3866 = vpop.f32.mrb[0].mxu0
        %v3867 = vadd.f32 %v3674, %v3866
        %v3868 = vpop.f32.mrb[0].mxu0
        %v3869 = vadd.f32 %v3676, %v3868
        %v3870 = vpop.f32.mrb[0].mxu0
        %v3871 = vadd.f32 %v3678, %v3870
        %v3872 = vpop.f32.mrb[0].mxu0
        %v3873 = vadd.f32 %v3680, %v3872
        %3874 = vmatprep.mubr.bf16.mxu0 %v1968
        %3875 = vmatmul.mubr.bf16.gmra.mrb[0].mxu0 %v1967
        %v3876 = vpop.f32.mrb[0].mxu0
        %v3877 = vadd.f32 %v3684, %v3876
        %v3878 = vpop.f32.mrb[0].mxu0
        %v3879 = vadd.f32 %v3686, %v3878
        %v3880 = vpop.f32.mrb[0].mxu0
        %v3881 = vadd.f32 %v3688, %v3880
        %v3882 = vpop.f32.mrb[0].mxu0
        %v3883 = vadd.f32 %v3690, %v3882
        %3884 = vmatprep.mubr.bf16.mxu0 %v1972
        %3885 = vmatmul.mubr.bf16.gmra.mrb[0].mxu0 %v1971
        %v3886 = vpop.f32.mrb[0].mxu0
        %v3887 = vadd.f32 %v3694, %v3886
        %v3888 = vpop.f32.mrb[0].mxu0
        %v3889 = vadd.f32 %v3696, %v3888
        %v3890 = vpop.f32.mrb[0].mxu0
        %v3891 = vadd.f32 %v3698, %v3890
        %v3892 = vpop.f32.mrb[0].mxu0
        %v3893 = vadd.f32 %v3700, %v3892
        %3894 = vdwg.mxu0
        %3895 = vmatprep.subr.bf16.mxu0 %v3000
        %3896 = vmatpush1.bf16.msra.mxu0 %v2999
        %3897 = vmatprep.subr.bf16.mxu0 %v3008
        %3898 = vmatpush1.bf16.msra.mxu0 %v3007
        %3899 = vmatprep.subr.bf16.mxu0 %v3016
        %3900 = vmatpush1.bf16.msra.mxu0 %v3015
        %3901 = vmatprep.subr.bf16.mxu0 %v3024
        %3902 = vmatpush1.bf16.msra.mxu0 %v3023
        %3903 = vmatprep.subr.bf16.mxu0 %v3032
        %3904 = vmatpush1.bf16.msra.mxu0 %v3031
        %3905 = vmatprep.subr.bf16.mxu0 %v3040
        %3906 = vmatpush1.bf16.msra.mxu0 %v3039
        %3907 = vmatprep.subr.bf16.mxu0 %v3048
        %3908 = vmatpush1.bf16.msra.mxu0 %v3047
        %3909 = vmatprep.subr.bf16.mxu0 %v3056
        %3910 = vmatpush1.bf16.msra.mxu0 %v3055
        %3911 = vmatprep.subr.bf16.mxu0 %v3064
        %3912 = vmatpush1.bf16.msra.mxu0 %v3063
        %3913 = vmatprep.subr.bf16.mxu0 %v3072
        %3914 = vmatpush1.bf16.msra.mxu0 %v3071
        %3915 = vmatprep.subr.bf16.mxu0 %v3080
        %3916 = vmatpush1.bf16.msra.mxu0 %v3079
        %3917 = vmatprep.subr.bf16.mxu0 %v3088
        %3918 = vmatpush1.bf16.msra.mxu0 %v3087
        %3919 = vmatprep.subr.bf16.mxu0 %v3096
        %3920 = vmatpush1.bf16.msra.mxu0 %v3095
        %3921 = vmatprep.subr.bf16.mxu0 %v3104
        %3922 = vmatpush1.bf16.msra.mxu0 %v3103
        %3923 = vmatprep.subr.bf16.mxu0 %v3112
        %3924 = vmatpush1.bf16.msra.mxu0 %v3111
        %3925 = vmatprep.subr.bf16.mxu0 %v3120
        %3926 = vmatpush1.bf16.msra.mxu0 %v3119
        %3927 = vmatprep.mubr.bf16.mxu0 %v1910
        %3928 = vmatmul.mubr.bf16.gmra.mrb[0].mxu0 %v1909
        %v3929 = vpop.f32.mrb[0].mxu0
        %v3930 = vadd.f32 0.0, %v3929
        %v3931 = vpop.f32.mrb[0].mxu0
        %v3932 = vadd.f32 0.0, %v3931
        %v3933 = vpop.f32.mrb[0].mxu0
        %v3934 = vadd.f32 0.0, %v3933
        %v3935 = vpop.f32.mrb[0].mxu0
        %v3936 = vadd.f32 0.0, %v3935
        %3937 = vmatprep.mubr.bf16.mxu0 %v1914
        %3938 = vmatmul.mubr.bf16.gmra.mrb[0].mxu0 %v1913
        %v3939 = vpop.f32.mrb[0].mxu0
        %v3940 = vadd.f32 0.0, %v3939
        %v3941 = vpop.f32.mrb[0].mxu0
        %v3942 = vadd.f32 0.0, %v3941
        %v3943 = vpop.f32.mrb[0].mxu0
        %v3944 = vadd.f32 0.0, %v3943
        %v3945 = vpop.f32.mrb[0].mxu0
        %v3946 = vadd.f32 0.0, %v3945
        %3947 = vmatprep.mubr.bf16.mxu0 %v1918
        %3948 = vmatmul.mubr.bf16.gmra.mrb[0].mxu0 %v1917
        %v3949 = vpop.f32.mrb[0].mxu0
        %v3950 = vadd.f32 0.0, %v3949
        %v3951 = vpop.f32.mrb[0].mxu0
        %v3952 = vadd.f32 0.0, %v3951
        %v3953 = vpop.f32.mrb[0].mxu0
        %v3954 = vadd.f32 0.0, %v3953
        %v3955 = vpop.f32.mrb[0].mxu0
        %v3956 = vadd.f32 0.0, %v3955
        %3957 = vmatprep.mubr.bf16.mxu0 %v1922
        %3958 = vmatmul.mubr.bf16.gmra.mrb[0].mxu0 %v1921
        %v3959 = vpop.f32.mrb[0].mxu0
        %v3960 = vadd.f32 0.0, %v3959
        %v3961 = vpop.f32.mrb[0].mxu0
        %v3962 = vadd.f32 0.0, %v3961
        %v3963 = vpop.f32.mrb[0].mxu0
        %v3964 = vadd.f32 0.0, %v3963
        %v3965 = vpop.f32.mrb[0].mxu0
        %v3966 = vadd.f32 0.0, %v3965
        %3967 = vmatprep.mubr.bf16.mxu0 %v1926
        %3968 = vmatmul.mubr.bf16.gmra.mrb[0].mxu0 %v1925
        %v3969 = vpop.f32.mrb[0].mxu0
        %v3970 = vadd.f32 0.0, %v3969
        %v3971 = vpop.f32.mrb[0].mxu0
        %v3972 = vadd.f32 0.0, %v3971
        %v3973 = vpop.f32.mrb[0].mxu0
        %v3974 = vadd.f32 0.0, %v3973
        %v3975 = vpop.f32.mrb[0].mxu0
        %v3976 = vadd.f32 0.0, %v3975
        %3977 = vmatprep.mubr.bf16.mxu0 %v1930
        %3978 = vmatmul.mubr.bf16.gmra.mrb[0].mxu0 %v1929
        %v3979 = vpop.f32.mrb[0].mxu0
        %v3980 = vadd.f32 0.0, %v3979
        %v3981 = vpop.f32.mrb[0].mxu0
        %v3982 = vadd.f32 0.0, %v3981
        %v3983 = vpop.f32.mrb[0].mxu0
        %v3984 = vadd.f32 0.0, %v3983
        %v3985 = vpop.f32.mrb[0].mxu0
        %v3986 = vadd.f32 0.0, %v3985
        %3987 = vmatprep.mubr.bf16.mxu0 %v1934
        %3988 = vmatmul.mubr.bf16.gmra.mrb[0].mxu0 %v1933
        %v3989 = vpop.f32.mrb[0].mxu0
        %v3990 = vadd.f32 0.0, %v3989
        %v3991 = vpop.f32.mrb[0].mxu0
        %v3992 = vadd.f32 0.0, %v3991
        %v3993 = vpop.f32.mrb[0].mxu0
        %v3994 = vadd.f32 0.0, %v3993
        %v3995 = vpop.f32.mrb[0].mxu0
        %v3996 = vadd.f32 0.0, %v3995
        %3997 = vmatprep.mubr.bf16.mxu0 %v1938
        %3998 = vmatmul.mubr.bf16.gmra.mrb[0].mxu0 %v1937
        %v3999 = vpop.f32.mrb[0].mxu0
        %v4000 = vadd.f32 0.0, %v3999
        %v4001 = vpop.f32.mrb[0].mxu0
        %v4002 = vadd.f32 0.0, %v4001
        %v4003 = vpop.f32.mrb[0].mxu0
        %v4004 = vadd.f32 0.0, %v4003
        %v4005 = vpop.f32.mrb[0].mxu0
        %v4006 = vadd.f32 0.0, %v4005
        %4007 = vmatprep.mubr.bf16.mxu0 %v1942
        %4008 = vmatmul.mubr.bf16.gmra.mrb[0].mxu0 %v1941
        %v4009 = vpop.f32.mrb[0].mxu0
        %v4010 = vadd.f32 0.0, %v4009
        %v4011 = vpop.f32.mrb[0].mxu0
        %v4012 = vadd.f32 0.0, %v4011
        %v4013 = vpop.f32.mrb[0].mxu0
        %v4014 = vadd.f32 0.0, %v4013
        %v4015 = vpop.f32.mrb[0].mxu0
        %v4016 = vadd.f32 0.0, %v4015
        %4017 = vmatprep.mubr.bf16.mxu0 %v1946
        %4018 = vmatmul.mubr.bf16.gmra.mrb[0].mxu0 %v1945
        %v4019 = vpop.f32.mrb[0].mxu0
        %v4020 = vadd.f32 0.0, %v4019
        %v4021 = vpop.f32.mrb[0].mxu0
        %v4022 = vadd.f32 0.0, %v4021
        %v4023 = vpop.f32.mrb[0].mxu0
        %v4024 = vadd.f32 0.0, %v4023
        %v4025 = vpop.f32.mrb[0].mxu0
        %v4026 = vadd.f32 0.0, %v4025
        %4027 = vmatprep.mubr.bf16.mxu0 %v1950
        %4028 = vmatmul.mubr.bf16.gmra.mrb[0].mxu0 %v1949
        %v4029 = vpop.f32.mrb[0].mxu0
        %v4030 = vadd.f32 0.0, %v4029
        %v4031 = vpop.f32.mrb[0].mxu0
        %v4032 = vadd.f32 0.0, %v4031
        %v4033 = vpop.f32.mrb[0].mxu0
        %v4034 = vadd.f32 0.0, %v4033
        %v4035 = vpop.f32.mrb[0].mxu0
        %v4036 = vadd.f32 0.0, %v4035
        %4037 = vmatprep.mubr.bf16.mxu0 %v1954
        %4038 = vmatmul.mubr.bf16.gmra.mrb[0].mxu0 %v1953
        %v4039 = vpop.f32.mrb[0].mxu0
        %v4040 = vadd.f32 0.0, %v4039
        %v4041 = vpop.f32.mrb[0].mxu0
        %v4042 = vadd.f32 0.0, %v4041
        %v4043 = vpop.f32.mrb[0].mxu0
        %v4044 = vadd.f32 0.0, %v4043
        %v4045 = vpop.f32.mrb[0].mxu0
        %v4046 = vadd.f32 0.0, %v4045
        %4047 = vmatprep.mubr.bf16.mxu0 %v1958
        %4048 = vmatmul.mubr.bf16.gmra.mrb[0].mxu0 %v1957
        %v4049 = vpop.f32.mrb[0].mxu0
        %v4050 = vadd.f32 0.0, %v4049
        %v4051 = vpop.f32.mrb[0].mxu0
        %v4052 = vadd.f32 0.0, %v4051
        %v4053 = vpop.f32.mrb[0].mxu0
        %v4054 = vadd.f32 0.0, %v4053
        %v4055 = vpop.f32.mrb[0].mxu0
        %v4056 = vadd.f32 0.0, %v4055
        %4057 = vmatprep.mubr.bf16.mxu0 %v1962
        %4058 = vmatmul.mubr.bf16.gmra.mrb[0].mxu0 %v1961
        %v4059 = vpop.f32.mrb[0].mxu0
        %v4060 = vadd.f32 0.0, %v4059
        %v4061 = vpop.f32.mrb[0].mxu0
        %v4062 = vadd.f32 0.0, %v4061
        %v4063 = vpop.f32.mrb[0].mxu0
        %v4064 = vadd.f32 0.0, %v4063
        %v4065 = vpop.f32.mrb[0].mxu0
        %v4066 = vadd.f32 0.0, %v4065
        %4067 = vmatprep.mubr.bf16.mxu0 %v1966
        %4068 = vmatmul.mubr.bf16.gmra.mrb[0].mxu0 %v1965
        %v4069 = vpop.f32.mrb[0].mxu0
        %v4070 = vadd.f32 0.0, %v4069
        %v4071 = vpop.f32.mrb[0].mxu0
        %v4072 = vadd.f32 0.0, %v4071
        %v4073 = vpop.f32.mrb[0].mxu0
        %v4074 = vadd.f32 0.0, %v4073
        %v4075 = vpop.f32.mrb[0].mxu0
        %v4076 = vadd.f32 0.0, %v4075
        %4077 = vmatprep.mubr.bf16.mxu0 %v1970
        %4078 = vmatmul.mubr.bf16.gmra.mrb[0].mxu0 %v1969
        %v4079 = vpop.f32.mrb[0].mxu0
        %v4080 = vadd.f32 0.0, %v4079
        %v4081 = vpop.f32.mrb[0].mxu0
        %v4082 = vadd.f32 0.0, %v4081
        %v4083 = vpop.f32.mrb[0].mxu0
        %v4084 = vadd.f32 0.0, %v4083
        %v4085 = vpop.f32.mrb[0].mxu0
        %v4086 = vadd.f32 0.0, %v4085
        %4087 = vdwg.mxu0
        %4088 = vmatprep.subr.bf16.mxu0 %v3128
        %4089 = vmatpush1.bf16.msra.mxu0 %v3127
        %4090 = vmatprep.subr.bf16.mxu0 %v3136
        %4091 = vmatpush1.bf16.msra.mxu0 %v3135
        %4092 = vmatprep.subr.bf16.mxu0 %v3144
        %4093 = vmatpush1.bf16.msra.mxu0 %v3143
        %4094 = vmatprep.subr.bf16.mxu0 %v3152
        %4095 = vmatpush1.bf16.msra.mxu0 %v3151
        %4096 = vmatprep.subr.bf16.mxu0 %v3160
        %4097 = vmatpush1.bf16.msra.mxu0 %v3159
        %4098 = vmatprep.subr.bf16.mxu0 %v3168
        %4099 = vmatpush1.bf16.msra.mxu0 %v3167
        %4100 = vmatprep.subr.bf16.mxu0 %v3176
        %4101 = vmatpush1.bf16.msra.mxu0 %v3175
        %4102 = vmatprep.subr.bf16.mxu0 %v3184
        %4103 = vmatpush1.bf16.msra.mxu0 %v3183
        %4104 = vmatprep.subr.bf16.mxu0 %v3192
        %4105 = vmatpush1.bf16.msra.mxu0 %v3191
        %4106 = vmatprep.subr.bf16.mxu0 %v3200
        %4107 = vmatpush1.bf16.msra.mxu0 %v3199
        %4108 = vmatprep.subr.bf16.mxu0 %v3208
        %4109 = vmatpush1.bf16.msra.mxu0 %v3207
        %4110 = vmatprep.subr.bf16.mxu0 %v3216
        %4111 = vmatpush1.bf16.msra.mxu0 %v3215
        %4112 = vmatprep.subr.bf16.mxu0 %v3224
        %4113 = vmatpush1.bf16.msra.mxu0 %v3223
        %4114 = vmatprep.subr.bf16.mxu0 %v3232
        %4115 = vmatpush1.bf16.msra.mxu0 %v3231
        %4116 = vmatprep.subr.bf16.mxu0 %v3240
        %4117 = vmatpush1.bf16.msra.mxu0 %v3239
        %4118 = vmatprep.subr.bf16.mxu0 %v3248
        %4119 = vmatpush1.bf16.msra.mxu0 %v3247
        %4120 = vmatprep.mubr.bf16.mxu0 %v1912
        %4121 = vmatmul.mubr.bf16.gmra.mrb[0].mxu0 %v1911
        %v4122 = vpop.f32.mrb[0].mxu0
        %v4123 = vadd.f32 %v3930, %v4122
        %v4124 = vpop.f32.mrb[0].mxu0
        %v4125 = vadd.f32 %v3932, %v4124
        %v4126 = vpop.f32.mrb[0].mxu0
        %v4127 = vadd.f32 %v3934, %v4126
        %v4128 = vpop.f32.mrb[0].mxu0
        %v4129 = vadd.f32 %v3936, %v4128
        %4130 = vmatprep.mubr.bf16.mxu0 %v1916
        %4131 = vmatmul.mubr.bf16.gmra.mrb[0].mxu0 %v1915
        %v4132 = vpop.f32.mrb[0].mxu0
        %v4133 = vadd.f32 %v3940, %v4132
        %v4134 = vpop.f32.mrb[0].mxu0
        %v4135 = vadd.f32 %v3942, %v4134
        %v4136 = vpop.f32.mrb[0].mxu0
        %v4137 = vadd.f32 %v3944, %v4136
        %v4138 = vpop.f32.mrb[0].mxu0
        %v4139 = vadd.f32 %v3946, %v4138
        %4140 = vmatprep.mubr.bf16.mxu0 %v1920
        %4141 = vmatmul.mubr.bf16.gmra.mrb[0].mxu0 %v1919
        %v4142 = vpop.f32.mrb[0].mxu0
        %v4143 = vadd.f32 %v3950, %v4142
        %v4144 = vpop.f32.mrb[0].mxu0
        %v4145 = vadd.f32 %v3952, %v4144
        %v4146 = vpop.f32.mrb[0].mxu0
        %v4147 = vadd.f32 %v3954, %v4146
        %v4148 = vpop.f32.mrb[0].mxu0
        %v4149 = vadd.f32 %v3956, %v4148
        %4150 = vmatprep.mubr.bf16.mxu0 %v1924
        %4151 = vmatmul.mubr.bf16.gmra.mrb[0].mxu0 %v1923
        %v4152 = vpop.f32.mrb[0].mxu0
        %v4153 = vadd.f32 %v3960, %v4152
        %v4154 = vpop.f32.mrb[0].mxu0
        %v4155 = vadd.f32 %v3962, %v4154
        %v4156 = vpop.f32.mrb[0].mxu0
        %v4157 = vadd.f32 %v3964, %v4156
        %v4158 = vpop.f32.mrb[0].mxu0
        %v4159 = vadd.f32 %v3966, %v4158
        %4160 = vmatprep.mubr.bf16.mxu0 %v1928
        %4161 = vmatmul.mubr.bf16.gmra.mrb[0].mxu0 %v1927
        %v4162 = vpop.f32.mrb[0].mxu0
        %v4163 = vadd.f32 %v3970, %v4162
        %v4164 = vpop.f32.mrb[0].mxu0
        %v4165 = vadd.f32 %v3972, %v4164
        %v4166 = vpop.f32.mrb[0].mxu0
        %v4167 = vadd.f32 %v3974, %v4166
        %v4168 = vpop.f32.mrb[0].mxu0
        %v4169 = vadd.f32 %v3976, %v4168
        %4170 = vmatprep.mubr.bf16.mxu0 %v1932
        %4171 = vmatmul.mubr.bf16.gmra.mrb[0].mxu0 %v1931
        %v4172 = vpop.f32.mrb[0].mxu0
        %v4173 = vadd.f32 %v3980, %v4172
        %v4174 = vpop.f32.mrb[0].mxu0
        %v4175 = vadd.f32 %v3982, %v4174
        %v4176 = vpop.f32.mrb[0].mxu0
        %v4177 = vadd.f32 %v3984, %v4176
        %v4178 = vpop.f32.mrb[0].mxu0
        %v4179 = vadd.f32 %v3986, %v4178
        %4180 = vmatprep.mubr.bf16.mxu0 %v1936
        %4181 = vmatmul.mubr.bf16.gmra.mrb[0].mxu0 %v1935
        %v4182 = vpop.f32.mrb[0].mxu0
        %v4183 = vadd.f32 %v3990, %v4182
        %v4184 = vpop.f32.mrb[0].mxu0
        %v4185 = vadd.f32 %v3992, %v4184
        %v4186 = vpop.f32.mrb[0].mxu0
        %v4187 = vadd.f32 %v3994, %v4186
        %v4188 = vpop.f32.mrb[0].mxu0
        %v4189 = vadd.f32 %v3996, %v4188
        %4190 = vmatprep.mubr.bf16.mxu0 %v1940
        %4191 = vmatmul.mubr.bf16.gmra.mrb[0].mxu0 %v1939
        %v4192 = vpop.f32.mrb[0].mxu0
        %v4193 = vadd.f32 %v4000, %v4192
        %v4194 = vpop.f32.mrb[0].mxu0
        %v4195 = vadd.f32 %v4002, %v4194
        %v4196 = vpop.f32.mrb[0].mxu0
        %v4197 = vadd.f32 %v4004, %v4196
        %v4198 = vpop.f32.mrb[0].mxu0
        %v4199 = vadd.f32 %v4006, %v4198
        %4200 = vmatprep.mubr.bf16.mxu0 %v1944
        %4201 = vmatmul.mubr.bf16.gmra.mrb[0].mxu0 %v1943
        %v4202 = vpop.f32.mrb[0].mxu0
        %v4203 = vadd.f32 %v4010, %v4202
        %v4204 = vpop.f32.mrb[0].mxu0
        %v4205 = vadd.f32 %v4012, %v4204
        %v4206 = vpop.f32.mrb[0].mxu0
        %v4207 = vadd.f32 %v4014, %v4206
        %v4208 = vpop.f32.mrb[0].mxu0
        %v4209 = vadd.f32 %v4016, %v4208
        %4210 = vmatprep.mubr.bf16.mxu0 %v1948
        %4211 = vmatmul.mubr.bf16.gmra.mrb[0].mxu0 %v1947
        %v4212 = vpop.f32.mrb[0].mxu0
        %v4213 = vadd.f32 %v4020, %v4212
        %v4214 = vpop.f32.mrb[0].mxu0
        %v4215 = vadd.f32 %v4022, %v4214
        %v4216 = vpop.f32.mrb[0].mxu0
        %v4217 = vadd.f32 %v4024, %v4216
        %v4218 = vpop.f32.mrb[0].mxu0
        %v4219 = vadd.f32 %v4026, %v4218
        %4220 = vmatprep.mubr.bf16.mxu0 %v1952
        %4221 = vmatmul.mubr.bf16.gmra.mrb[0].mxu0 %v1951
        %v4222 = vpop.f32.mrb[0].mxu0
        %v4223 = vadd.f32 %v4030, %v4222
        %v4224 = vpop.f32.mrb[0].mxu0
        %v4225 = vadd.f32 %v4032, %v4224
        %v4226 = vpop.f32.mrb[0].mxu0
        %v4227 = vadd.f32 %v4034, %v4226
        %v4228 = vpop.f32.mrb[0].mxu0
        %v4229 = vadd.f32 %v4036, %v4228
        %4230 = vmatprep.mubr.bf16.mxu0 %v1956
        %4231 = vmatmul.mubr.bf16.gmra.mrb[0].mxu0 %v1955
        %v4232 = vpop.f32.mrb[0].mxu0
        %v4233 = vadd.f32 %v4040, %v4232
        %v4234 = vpop.f32.mrb[0].mxu0
        %v4235 = vadd.f32 %v4042, %v4234
        %v4236 = vpop.f32.mrb[0].mxu0
        %v4237 = vadd.f32 %v4044, %v4236
        %v4238 = vpop.f32.mrb[0].mxu0
        %v4239 = vadd.f32 %v4046, %v4238
        %4240 = vmatprep.mubr.bf16.mxu0 %v1960
        %4241 = vmatmul.mubr.bf16.gmra.mrb[0].mxu0 %v1959
        %v4242 = vpop.f32.mrb[0].mxu0
        %v4243 = vadd.f32 %v4050, %v4242
        %v4244 = vpop.f32.mrb[0].mxu0
        %v4245 = vadd.f32 %v4052, %v4244
        %v4246 = vpop.f32.mrb[0].mxu0
        %v4247 = vadd.f32 %v4054, %v4246
        %v4248 = vpop.f32.mrb[0].mxu0
        %v4249 = vadd.f32 %v4056, %v4248
        %4250 = vmatprep.mubr.bf16.mxu0 %v1964
        %4251 = vmatmul.mubr.bf16.gmra.mrb[0].mxu0 %v1963
        %v4252 = vpop.f32.mrb[0].mxu0
        %v4253 = vadd.f32 %v4060, %v4252
        %v4254 = vpop.f32.mrb[0].mxu0
        %v4255 = vadd.f32 %v4062, %v4254
        %v4256 = vpop.f32.mrb[0].mxu0
        %v4257 = vadd.f32 %v4064, %v4256
        %v4258 = vpop.f32.mrb[0].mxu0
        %v4259 = vadd.f32 %v4066, %v4258
        %4260 = vmatprep.mubr.bf16.mxu0 %v1968
        %4261 = vmatmul.mubr.bf16.gmra.mrb[0].mxu0 %v1967
        %v4262 = vpop.f32.mrb[0].mxu0
        %v4263 = vadd.f32 %v4070, %v4262
        %v4264 = vpop.f32.mrb[0].mxu0
        %v4265 = vadd.f32 %v4072, %v4264
        %v4266 = vpop.f32.mrb[0].mxu0
        %v4267 = vadd.f32 %v4074, %v4266
        %v4268 = vpop.f32.mrb[0].mxu0
        %v4269 = vadd.f32 %v4076, %v4268
        %4270 = vmatprep.mubr.bf16.mxu0 %v1972
        %4271 = vmatmul.mubr.bf16.gmra.mrb[0].mxu0 %v1971
        %v4272 = vpop.f32.mrb[0].mxu0
        %v4273 = vadd.f32 %v4080, %v4272
        %v4274 = vpop.f32.mrb[0].mxu0
        %v4275 = vadd.f32 %v4082, %v4274
        %v4276 = vpop.f32.mrb[0].mxu0
        %v4277 = vadd.f32 %v4084, %v4276
        %v4278 = vpop.f32.mrb[0].mxu0
        %v4279 = vadd.f32 %v4086, %v4278
        %4280 = vdwg.mxu0
        %4281 = vmatprep.subr.bf16.mxu0 %v3002
        %4282 = vmatpush1.bf16.msra.mxu0 %v3001
        %4283 = vmatprep.subr.bf16.mxu0 %v3010
        %4284 = vmatpush1.bf16.msra.mxu0 %v3009
        %4285 = vmatprep.subr.bf16.mxu0 %v3018
        %4286 = vmatpush1.bf16.msra.mxu0 %v3017
        %4287 = vmatprep.subr.bf16.mxu0 %v3026
        %4288 = vmatpush1.bf16.msra.mxu0 %v3025
        %4289 = vmatprep.subr.bf16.mxu0 %v3034
        %4290 = vmatpush1.bf16.msra.mxu0 %v3033
        %4291 = vmatprep.subr.bf16.mxu0 %v3042
        %4292 = vmatpush1.bf16.msra.mxu0 %v3041
        %4293 = vmatprep.subr.bf16.mxu0 %v3050
        %4294 = vmatpush1.bf16.msra.mxu0 %v3049
        %4295 = vmatprep.subr.bf16.mxu0 %v3058
        %4296 = vmatpush1.bf16.msra.mxu0 %v3057
        %4297 = vmatprep.subr.bf16.mxu0 %v3066
        %4298 = vmatpush1.bf16.msra.mxu0 %v3065
        %4299 = vmatprep.subr.bf16.mxu0 %v3074
        %4300 = vmatpush1.bf16.msra.mxu0 %v3073
        %4301 = vmatprep.subr.bf16.mxu0 %v3082
        %4302 = vmatpush1.bf16.msra.mxu0 %v3081
        %4303 = vmatprep.subr.bf16.mxu0 %v3090
        %4304 = vmatpush1.bf16.msra.mxu0 %v3089
        %4305 = vmatprep.subr.bf16.mxu0 %v3098
        %4306 = vmatpush1.bf16.msra.mxu0 %v3097
        %4307 = vmatprep.subr.bf16.mxu0 %v3106
        %4308 = vmatpush1.bf16.msra.mxu0 %v3105
        %4309 = vmatprep.subr.bf16.mxu0 %v3114
        %4310 = vmatpush1.bf16.msra.mxu0 %v3113
        %4311 = vmatprep.subr.bf16.mxu0 %v3122
        %4312 = vmatpush1.bf16.msra.mxu0 %v3121
        %4313 = vmatprep.mubr.bf16.mxu0 %v1910
        %4314 = vmatmul.mubr.bf16.gmra.mrb[0].mxu0 %v1909
        %v4315 = vpop.f32.mrb[0].mxu0
        %v4316 = vadd.f32 0.0, %v4315
        %v4317 = vpop.f32.mrb[0].mxu0
        %v4318 = vadd.f32 0.0, %v4317
        %v4319 = vpop.f32.mrb[0].mxu0
        %v4320 = vadd.f32 0.0, %v4319
        %v4321 = vpop.f32.mrb[0].mxu0
        %v4322 = vadd.f32 0.0, %v4321
        %4323 = vmatprep.mubr.bf16.mxu0 %v1914
        %4324 = vmatmul.mubr.bf16.gmra.mrb[0].mxu0 %v1913
        %v4325 = vpop.f32.mrb[0].mxu0
        %v4326 = vadd.f32 0.0, %v4325
        %v4327 = vpop.f32.mrb[0].mxu0
        %v4328 = vadd.f32 0.0, %v4327
        %v4329 = vpop.f32.mrb[0].mxu0
        %v4330 = vadd.f32 0.0, %v4329
        %v4331 = vpop.f32.mrb[0].mxu0
        %v4332 = vadd.f32 0.0, %v4331
        %4333 = vmatprep.mubr.bf16.mxu0 %v1918
        %4334 = vmatmul.mubr.bf16.gmra.mrb[0].mxu0 %v1917
        %v4335 = vpop.f32.mrb[0].mxu0
        %v4336 = vadd.f32 0.0, %v4335
        %v4337 = vpop.f32.mrb[0].mxu0
        %v4338 = vadd.f32 0.0, %v4337
        %v4339 = vpop.f32.mrb[0].mxu0
        %v4340 = vadd.f32 0.0, %v4339
        %v4341 = vpop.f32.mrb[0].mxu0
        %v4342 = vadd.f32 0.0, %v4341
        %4343 = vmatprep.mubr.bf16.mxu0 %v1922
        %4344 = vmatmul.mubr.bf16.gmra.mrb[0].mxu0 %v1921
        %v4345 = vpop.f32.mrb[0].mxu0
        %v4346 = vadd.f32 0.0, %v4345
        %v4347 = vpop.f32.mrb[0].mxu0
        %v4348 = vadd.f32 0.0, %v4347
        %v4349 = vpop.f32.mrb[0].mxu0
        %v4350 = vadd.f32 0.0, %v4349
        %v4351 = vpop.f32.mrb[0].mxu0
        %v4352 = vadd.f32 0.0, %v4351
        %4353 = vmatprep.mubr.bf16.mxu0 %v1926
        %4354 = vmatmul.mubr.bf16.gmra.mrb[0].mxu0 %v1925
        %v4355 = vpop.f32.mrb[0].mxu0
        %v4356 = vadd.f32 0.0, %v4355
        %v4357 = vpop.f32.mrb[0].mxu0
        %v4358 = vadd.f32 0.0, %v4357
        %v4359 = vpop.f32.mrb[0].mxu0
        %v4360 = vadd.f32 0.0, %v4359
        %v4361 = vpop.f32.mrb[0].mxu0
        %v4362 = vadd.f32 0.0, %v4361
        %4363 = vmatprep.mubr.bf16.mxu0 %v1930
        %4364 = vmatmul.mubr.bf16.gmra.mrb[0].mxu0 %v1929
        %v4365 = vpop.f32.mrb[0].mxu0
        %v4366 = vadd.f32 0.0, %v4365
        %v4367 = vpop.f32.mrb[0].mxu0
        %v4368 = vadd.f32 0.0, %v4367
        %v4369 = vpop.f32.mrb[0].mxu0
        %v4370 = vadd.f32 0.0, %v4369
        %v4371 = vpop.f32.mrb[0].mxu0
        %v4372 = vadd.f32 0.0, %v4371
        %4373 = vmatprep.mubr.bf16.mxu0 %v1934
        %4374 = vmatmul.mubr.bf16.gmra.mrb[0].mxu0 %v1933
        %v4375 = vpop.f32.mrb[0].mxu0
        %v4376 = vadd.f32 0.0, %v4375
        %v4377 = vpop.f32.mrb[0].mxu0
        %v4378 = vadd.f32 0.0, %v4377
        %v4379 = vpop.f32.mrb[0].mxu0
        %v4380 = vadd.f32 0.0, %v4379
        %v4381 = vpop.f32.mrb[0].mxu0
        %v4382 = vadd.f32 0.0, %v4381
        %4383 = vmatprep.mubr.bf16.mxu0 %v1938
        %4384 = vmatmul.mubr.bf16.gmra.mrb[0].mxu0 %v1937
        %v4385 = vpop.f32.mrb[0].mxu0
        %v4386 = vadd.f32 0.0, %v4385
        %v4387 = vpop.f32.mrb[0].mxu0
        %v4388 = vadd.f32 0.0, %v4387
        %v4389 = vpop.f32.mrb[0].mxu0
        %v4390 = vadd.f32 0.0, %v4389
        %v4391 = vpop.f32.mrb[0].mxu0
        %v4392 = vadd.f32 0.0, %v4391
        %4393 = vmatprep.mubr.bf16.mxu0 %v1942
        %4394 = vmatmul.mubr.bf16.gmra.mrb[0].mxu0 %v1941
        %v4395 = vpop.f32.mrb[0].mxu0
        %v4396 = vadd.f32 0.0, %v4395
        %v4397 = vpop.f32.mrb[0].mxu0
        %v4398 = vadd.f32 0.0, %v4397
        %v4399 = vpop.f32.mrb[0].mxu0
        %v4400 = vadd.f32 0.0, %v4399
        %v4401 = vpop.f32.mrb[0].mxu0
        %v4402 = vadd.f32 0.0, %v4401
        %4403 = vmatprep.mubr.bf16.mxu0 %v1946
        %4404 = vmatmul.mubr.bf16.gmra.mrb[0].mxu0 %v1945
        %v4405 = vpop.f32.mrb[0].mxu0
        %v4406 = vadd.f32 0.0, %v4405
        %v4407 = vpop.f32.mrb[0].mxu0
        %v4408 = vadd.f32 0.0, %v4407
        %v4409 = vpop.f32.mrb[0].mxu0
        %v4410 = vadd.f32 0.0, %v4409
        %v4411 = vpop.f32.mrb[0].mxu0
        %v4412 = vadd.f32 0.0, %v4411
        %4413 = vmatprep.mubr.bf16.mxu0 %v1950
        %4414 = vmatmul.mubr.bf16.gmra.mrb[0].mxu0 %v1949
        %v4415 = vpop.f32.mrb[0].mxu0
        %v4416 = vadd.f32 0.0, %v4415
        %v4417 = vpop.f32.mrb[0].mxu0
        %v4418 = vadd.f32 0.0, %v4417
        %v4419 = vpop.f32.mrb[0].mxu0
        %v4420 = vadd.f32 0.0, %v4419
        %v4421 = vpop.f32.mrb[0].mxu0
        %v4422 = vadd.f32 0.0, %v4421
        %4423 = vmatprep.mubr.bf16.mxu0 %v1954
        %4424 = vmatmul.mubr.bf16.gmra.mrb[0].mxu0 %v1953
        %v4425 = vpop.f32.mrb[0].mxu0
        %v4426 = vadd.f32 0.0, %v4425
        %v4427 = vpop.f32.mrb[0].mxu0
        %v4428 = vadd.f32 0.0, %v4427
        %v4429 = vpop.f32.mrb[0].mxu0
        %v4430 = vadd.f32 0.0, %v4429
        %v4431 = vpop.f32.mrb[0].mxu0
        %v4432 = vadd.f32 0.0, %v4431
        %4433 = vmatprep.mubr.bf16.mxu0 %v1958
        %4434 = vmatmul.mubr.bf16.gmra.mrb[0].mxu0 %v1957
        %v4435 = vpop.f32.mrb[0].mxu0
        %v4436 = vadd.f32 0.0, %v4435
        %v4437 = vpop.f32.mrb[0].mxu0
        %v4438 = vadd.f32 0.0, %v4437
        %v4439 = vpop.f32.mrb[0].mxu0
        %v4440 = vadd.f32 0.0, %v4439
        %v4441 = vpop.f32.mrb[0].mxu0
        %v4442 = vadd.f32 0.0, %v4441
        %4443 = vmatprep.mubr.bf16.mxu0 %v1962
        %4444 = vmatmul.mubr.bf16.gmra.mrb[0].mxu0 %v1961
        %v4445 = vpop.f32.mrb[0].mxu0
        %v4446 = vadd.f32 0.0, %v4445
        %v4447 = vpop.f32.mrb[0].mxu0
        %v4448 = vadd.f32 0.0, %v4447
        %v4449 = vpop.f32.mrb[0].mxu0
        %v4450 = vadd.f32 0.0, %v4449
        %v4451 = vpop.f32.mrb[0].mxu0
        %v4452 = vadd.f32 0.0, %v4451
        %4453 = vmatprep.mubr.bf16.mxu0 %v1966
        %4454 = vmatmul.mubr.bf16.gmra.mrb[0].mxu0 %v1965
        %v4455 = vpop.f32.mrb[0].mxu0
        %v4456 = vadd.f32 0.0, %v4455
        %v4457 = vpop.f32.mrb[0].mxu0
        %v4458 = vadd.f32 0.0, %v4457
        %v4459 = vpop.f32.mrb[0].mxu0
        %v4460 = vadd.f32 0.0, %v4459
        %v4461 = vpop.f32.mrb[0].mxu0
        %v4462 = vadd.f32 0.0, %v4461
        %4463 = vmatprep.mubr.bf16.mxu0 %v1970
        %4464 = vmatmul.mubr.bf16.gmra.mrb[0].mxu0 %v1969
        %v4465 = vpop.f32.mrb[0].mxu0
        %v4466 = vadd.f32 0.0, %v4465
        %v4467 = vpop.f32.mrb[0].mxu0
        %v4468 = vadd.f32 0.0, %v4467
        %v4469 = vpop.f32.mrb[0].mxu0
        %v4470 = vadd.f32 0.0, %v4469
        %v4471 = vpop.f32.mrb[0].mxu0
        %v4472 = vadd.f32 0.0, %v4471
        %4473 = vdwg.mxu0
        %4474 = vmatprep.subr.bf16.mxu0 %v3130
        %4475 = vmatpush1.bf16.msra.mxu0 %v3129
        %4476 = vmatprep.subr.bf16.mxu0 %v3138
        %4477 = vmatpush1.bf16.msra.mxu0 %v3137
        %4478 = vmatprep.subr.bf16.mxu0 %v3146
        %4479 = vmatpush1.bf16.msra.mxu0 %v3145
        %4480 = vmatprep.subr.bf16.mxu0 %v3154
        %4481 = vmatpush1.bf16.msra.mxu0 %v3153
        %4482 = vmatprep.subr.bf16.mxu0 %v3162
        %4483 = vmatpush1.bf16.msra.mxu0 %v3161
        %4484 = vmatprep.subr.bf16.mxu0 %v3170
        %4485 = vmatpush1.bf16.msra.mxu0 %v3169
        %4486 = vmatprep.subr.bf16.mxu0 %v3178
        %4487 = vmatpush1.bf16.msra.mxu0 %v3177
        %4488 = vmatprep.subr.bf16.mxu0 %v3186
        %4489 = vmatpush1.bf16.msra.mxu0 %v3185
        %4490 = vmatprep.subr.bf16.mxu0 %v3194
        %4491 = vmatpush1.bf16.msra.mxu0 %v3193
        %4492 = vmatprep.subr.bf16.mxu0 %v3202
        %4493 = vmatpush1.bf16.msra.mxu0 %v3201
        %4494 = vmatprep.subr.bf16.mxu0 %v3210
        %4495 = vmatpush1.bf16.msra.mxu0 %v3209
        %4496 = vmatprep.subr.bf16.mxu0 %v3218
        %4497 = vmatpush1.bf16.msra.mxu0 %v3217
        %4498 = vmatprep.subr.bf16.mxu0 %v3226
        %4499 = vmatpush1.bf16.msra.mxu0 %v3225
        %4500 = vmatprep.subr.bf16.mxu0 %v3234
        %4501 = vmatpush1.bf16.msra.mxu0 %v3233
        %4502 = vmatprep.subr.bf16.mxu0 %v3242
        %4503 = vmatpush1.bf16.msra.mxu0 %v3241
        %4504 = vmatprep.subr.bf16.mxu0 %v3250
        %4505 = vmatpush1.bf16.msra.mxu0 %v3249
        %4506 = vmatprep.mubr.bf16.mxu0 %v1912
        %4507 = vmatmul.mubr.bf16.gmra.mrb[0].mxu0 %v1911
        %v4508 = vpop.f32.mrb[0].mxu0
        %v4509 = vadd.f32 %v4316, %v4508
        %v4510 = vpop.f32.mrb[0].mxu0
        %v4511 = vadd.f32 %v4318, %v4510
        %v4512 = vpop.f32.mrb[0].mxu0
        %v4513 = vadd.f32 %v4320, %v4512
        %v4514 = vpop.f32.mrb[0].mxu0
        %v4515 = vadd.f32 %v4322, %v4514
        %4516 = vmatprep.mubr.bf16.mxu0 %v1916
        %4517 = vmatmul.mubr.bf16.gmra.mrb[0].mxu0 %v1915
        %v4518 = vpop.f32.mrb[0].mxu0
        %v4519 = vadd.f32 %v4326, %v4518
        %v4520 = vpop.f32.mrb[0].mxu0
        %v4521 = vadd.f32 %v4328, %v4520
        %v4522 = vpop.f32.mrb[0].mxu0
        %v4523 = vadd.f32 %v4330, %v4522
        %v4524 = vpop.f32.mrb[0].mxu0
        %v4525 = vadd.f32 %v4332, %v4524
        %4526 = vmatprep.mubr.bf16.mxu0 %v1920
        %4527 = vmatmul.mubr.bf16.gmra.mrb[0].mxu0 %v1919
        %v4528 = vpop.f32.mrb[0].mxu0
        %v4529 = vadd.f32 %v4336, %v4528
        %v4530 = vpop.f32.mrb[0].mxu0
        %v4531 = vadd.f32 %v4338, %v4530
        %v4532 = vpop.f32.mrb[0].mxu0
        %v4533 = vadd.f32 %v4340, %v4532
        %v4534 = vpop.f32.mrb[0].mxu0
        %v4535 = vadd.f32 %v4342, %v4534
        %4536 = vmatprep.mubr.bf16.mxu0 %v1924
        %4537 = vmatmul.mubr.bf16.gmra.mrb[0].mxu0 %v1923
        %v4538 = vpop.f32.mrb[0].mxu0
        %v4539 = vadd.f32 %v4346, %v4538
        %v4540 = vpop.f32.mrb[0].mxu0
        %v4541 = vadd.f32 %v4348, %v4540
        %v4542 = vpop.f32.mrb[0].mxu0
        %v4543 = vadd.f32 %v4350, %v4542
        %v4544 = vpop.f32.mrb[0].mxu0
        %v4545 = vadd.f32 %v4352, %v4544
        %4546 = vmatprep.mubr.bf16.mxu0 %v1928
        %4547 = vmatmul.mubr.bf16.gmra.mrb[0].mxu0 %v1927
        %v4548 = vpop.f32.mrb[0].mxu0
        %v4549 = vadd.f32 %v4356, %v4548
        %v4550 = vpop.f32.mrb[0].mxu0
        %v4551 = vadd.f32 %v4358, %v4550
        %v4552 = vpop.f32.mrb[0].mxu0
        %v4553 = vadd.f32 %v4360, %v4552
        %v4554 = vpop.f32.mrb[0].mxu0
        %v4555 = vadd.f32 %v4362, %v4554
        %4556 = vmatprep.mubr.bf16.mxu0 %v1932
        %4557 = vmatmul.mubr.bf16.gmra.mrb[0].mxu0 %v1931
        %v4558 = vpop.f32.mrb[0].mxu0
        %v4559 = vadd.f32 %v4366, %v4558
        %v4560 = vpop.f32.mrb[0].mxu0
        %v4561 = vadd.f32 %v4368, %v4560
        %v4562 = vpop.f32.mrb[0].mxu0
        %v4563 = vadd.f32 %v4370, %v4562
        %v4564 = vpop.f32.mrb[0].mxu0
        %v4565 = vadd.f32 %v4372, %v4564
        %4566 = vmatprep.mubr.bf16.mxu0 %v1936
        %4567 = vmatmul.mubr.bf16.gmra.mrb[0].mxu0 %v1935
        %v4568 = vpop.f32.mrb[0].mxu0
        %v4569 = vadd.f32 %v4376, %v4568
        %v4570 = vpop.f32.mrb[0].mxu0
        %v4571 = vadd.f32 %v4378, %v4570
        %v4572 = vpop.f32.mrb[0].mxu0
        %v4573 = vadd.f32 %v4380, %v4572
        %v4574 = vpop.f32.mrb[0].mxu0
        %v4575 = vadd.f32 %v4382, %v4574
        %4576 = vmatprep.mubr.bf16.mxu0 %v1940
        %4577 = vmatmul.mubr.bf16.gmra.mrb[0].mxu0 %v1939
        %v4578 = vpop.f32.mrb[0].mxu0
        %v4579 = vadd.f32 %v4386, %v4578
        %v4580 = vpop.f32.mrb[0].mxu0
        %v4581 = vadd.f32 %v4388, %v4580
        %v4582 = vpop.f32.mrb[0].mxu0
        %v4583 = vadd.f32 %v4390, %v4582
        %v4584 = vpop.f32.mrb[0].mxu0
        %v4585 = vadd.f32 %v4392, %v4584
        %4586 = vmatprep.mubr.bf16.mxu0 %v1944
        %4587 = vmatmul.mubr.bf16.gmra.mrb[0].mxu0 %v1943
        %v4588 = vpop.f32.mrb[0].mxu0
        %v4589 = vadd.f32 %v4396, %v4588
        %v4590 = vpop.f32.mrb[0].mxu0
        %v4591 = vadd.f32 %v4398, %v4590
        %v4592 = vpop.f32.mrb[0].mxu0
        %v4593 = vadd.f32 %v4400, %v4592
        %v4594 = vpop.f32.mrb[0].mxu0
        %v4595 = vadd.f32 %v4402, %v4594
        %4596 = vmatprep.mubr.bf16.mxu0 %v1948
        %4597 = vmatmul.mubr.bf16.gmra.mrb[0].mxu0 %v1947
        %v4598 = vpop.f32.mrb[0].mxu0
        %v4599 = vadd.f32 %v4406, %v4598
        %v4600 = vpop.f32.mrb[0].mxu0
        %v4601 = vadd.f32 %v4408, %v4600
        %v4602 = vpop.f32.mrb[0].mxu0
        %v4603 = vadd.f32 %v4410, %v4602
        %v4604 = vpop.f32.mrb[0].mxu0
        %v4605 = vadd.f32 %v4412, %v4604
        %4606 = vmatprep.mubr.bf16.mxu0 %v1952
        %4607 = vmatmul.mubr.bf16.gmra.mrb[0].mxu0 %v1951
        %v4608 = vpop.f32.mrb[0].mxu0
        %v4609 = vadd.f32 %v4416, %v4608
        %v4610 = vpop.f32.mrb[0].mxu0
        %v4611 = vadd.f32 %v4418, %v4610
        %v4612 = vpop.f32.mrb[0].mxu0
        %v4613 = vadd.f32 %v4420, %v4612
        %v4614 = vpop.f32.mrb[0].mxu0
        %v4615 = vadd.f32 %v4422, %v4614
        %4616 = vmatprep.mubr.bf16.mxu0 %v1956
        %4617 = vmatmul.mubr.bf16.gmra.mrb[0].mxu0 %v1955
        %v4618 = vpop.f32.mrb[0].mxu0
        %v4619 = vadd.f32 %v4426, %v4618
        %v4620 = vpop.f32.mrb[0].mxu0
        %v4621 = vadd.f32 %v4428, %v4620
        %v4622 = vpop.f32.mrb[0].mxu0
        %v4623 = vadd.f32 %v4430, %v4622
        %v4624 = vpop.f32.mrb[0].mxu0
        %v4625 = vadd.f32 %v4432, %v4624
        %4626 = vmatprep.mubr.bf16.mxu0 %v1960
        %4627 = vmatmul.mubr.bf16.gmra.mrb[0].mxu0 %v1959
        %v4628 = vpop.f32.mrb[0].mxu0
        %v4629 = vadd.f32 %v4436, %v4628
        %v4630 = vpop.f32.mrb[0].mxu0
        %v4631 = vadd.f32 %v4438, %v4630
        %v4632 = vpop.f32.mrb[0].mxu0
        %v4633 = vadd.f32 %v4440, %v4632
        %v4634 = vpop.f32.mrb[0].mxu0
        %v4635 = vadd.f32 %v4442, %v4634
        %4636 = vmatprep.mubr.bf16.mxu0 %v1964
        %4637 = vmatmul.mubr.bf16.gmra.mrb[0].mxu0 %v1963
        %v4638 = vpop.f32.mrb[0].mxu0
        %v4639 = vadd.f32 %v4446, %v4638
        %v4640 = vpop.f32.mrb[0].mxu0
        %v4641 = vadd.f32 %v4448, %v4640
        %v4642 = vpop.f32.mrb[0].mxu0
        %v4643 = vadd.f32 %v4450, %v4642
        %v4644 = vpop.f32.mrb[0].mxu0
        %v4645 = vadd.f32 %v4452, %v4644
        %4646 = vmatprep.mubr.bf16.mxu0 %v1968
        %4647 = vmatmul.mubr.bf16.gmra.mrb[0].mxu0 %v1967
        %v4648 = vpop.f32.mrb[0].mxu0
        %v4649 = vadd.f32 %v4456, %v4648
        %v4650 = vpop.f32.mrb[0].mxu0
        %v4651 = vadd.f32 %v4458, %v4650
        %v4652 = vpop.f32.mrb[0].mxu0
        %v4653 = vadd.f32 %v4460, %v4652
        %v4654 = vpop.f32.mrb[0].mxu0
        %v4655 = vadd.f32 %v4462, %v4654
        %4656 = vmatprep.mubr.bf16.mxu0 %v1972
        %4657 = vmatmul.mubr.bf16.gmra.mrb[0].mxu0 %v1971
        %v4658 = vpop.f32.mrb[0].mxu0
        %v4659 = vadd.f32 %v4466, %v4658
        %v4660 = vpop.f32.mrb[0].mxu0
        %v4661 = vadd.f32 %v4468, %v4660
        %v4662 = vpop.f32.mrb[0].mxu0
        %v4663 = vadd.f32 %v4470, %v4662
        %v4664 = vpop.f32.mrb[0].mxu0
        %v4665 = vadd.f32 %v4472, %v4664
        %4666 = vdwg.mxu0
        %4667 = vmatprep.subr.bf16.mxu0 %v3004
        %4668 = vmatpush1.bf16.msra.mxu0 %v3003
        %4669 = vmatprep.subr.bf16.mxu0 %v3012
        %4670 = vmatpush1.bf16.msra.mxu0 %v3011
        %4671 = vmatprep.subr.bf16.mxu0 %v3020
        %4672 = vmatpush1.bf16.msra.mxu0 %v3019
        %4673 = vmatprep.subr.bf16.mxu0 %v3028
        %4674 = vmatpush1.bf16.msra.mxu0 %v3027
        %4675 = vmatprep.subr.bf16.mxu0 %v3036
        %4676 = vmatpush1.bf16.msra.mxu0 %v3035
        %4677 = vmatprep.subr.bf16.mxu0 %v3044
        %4678 = vmatpush1.bf16.msra.mxu0 %v3043
        %4679 = vmatprep.subr.bf16.mxu0 %v3052
        %4680 = vmatpush1.bf16.msra.mxu0 %v3051
        %4681 = vmatprep.subr.bf16.mxu0 %v3060
        %4682 = vmatpush1.bf16.msra.mxu0 %v3059
        %4683 = vmatprep.subr.bf16.mxu0 %v3068
        %4684 = vmatpush1.bf16.msra.mxu0 %v3067
        %4685 = vmatprep.subr.bf16.mxu0 %v3076
        %4686 = vmatpush1.bf16.msra.mxu0 %v3075
        %4687 = vmatprep.subr.bf16.mxu0 %v3084
        %4688 = vmatpush1.bf16.msra.mxu0 %v3083
        %4689 = vmatprep.subr.bf16.mxu0 %v3092
        %4690 = vmatpush1.bf16.msra.mxu0 %v3091
        %4691 = vmatprep.subr.bf16.mxu0 %v3100
        %4692 = vmatpush1.bf16.msra.mxu0 %v3099
        %4693 = vmatprep.subr.bf16.mxu0 %v3108
        %4694 = vmatpush1.bf16.msra.mxu0 %v3107
        %4695 = vmatprep.subr.bf16.mxu0 %v3116
        %4696 = vmatpush1.bf16.msra.mxu0 %v3115
        %4697 = vmatprep.subr.bf16.mxu0 %v3124
        %4698 = vmatpush1.bf16.msra.mxu0 %v3123
        %4699 = vmatprep.mubr.bf16.mxu0 %v1910
        %4700 = vmatmul.mubr.bf16.gmra.mrb[0].mxu0 %v1909
        %v4701 = vpop.f32.mrb[0].mxu0
        %v4702 = vadd.f32 0.0, %v4701
        %v4703 = vpop.f32.mrb[0].mxu0
        %v4704 = vadd.f32 0.0, %v4703
        %v4705 = vpop.f32.mrb[0].mxu0
        %v4706 = vadd.f32 0.0, %v4705
        %v4707 = vpop.f32.mrb[0].mxu0
        %v4708 = vadd.f32 0.0, %v4707
        %4709 = vmatprep.mubr.bf16.mxu0 %v1914
        %4710 = vmatmul.mubr.bf16.gmra.mrb[0].mxu0 %v1913
        %v4711 = vpop.f32.mrb[0].mxu0
        %v4712 = vadd.f32 0.0, %v4711
        %v4713 = vpop.f32.mrb[0].mxu0
        %v4714 = vadd.f32 0.0, %v4713
        %v4715 = vpop.f32.mrb[0].mxu0
        %v4716 = vadd.f32 0.0, %v4715
        %v4717 = vpop.f32.mrb[0].mxu0
        %v4718 = vadd.f32 0.0, %v4717
        %4719 = vmatprep.mubr.bf16.mxu0 %v1918
        %4720 = vmatmul.mubr.bf16.gmra.mrb[0].mxu0 %v1917
        %v4721 = vpop.f32.mrb[0].mxu0
        %v4722 = vadd.f32 0.0, %v4721
        %v4723 = vpop.f32.mrb[0].mxu0
        %v4724 = vadd.f32 0.0, %v4723
        %v4725 = vpop.f32.mrb[0].mxu0
        %v4726 = vadd.f32 0.0, %v4725
        %v4727 = vpop.f32.mrb[0].mxu0
        %v4728 = vadd.f32 0.0, %v4727
        %4729 = vmatprep.mubr.bf16.mxu0 %v1922
        %4730 = vmatmul.mubr.bf16.gmra.mrb[0].mxu0 %v1921
        %v4731 = vpop.f32.mrb[0].mxu0
        %v4732 = vadd.f32 0.0, %v4731
        %v4733 = vpop.f32.mrb[0].mxu0
        %v4734 = vadd.f32 0.0, %v4733
        %v4735 = vpop.f32.mrb[0].mxu0
        %v4736 = vadd.f32 0.0, %v4735
        %v4737 = vpop.f32.mrb[0].mxu0
        %v4738 = vadd.f32 0.0, %v4737
        %4739 = vmatprep.mubr.bf16.mxu0 %v1926
        %4740 = vmatmul.mubr.bf16.gmra.mrb[0].mxu0 %v1925
        %v4741 = vpop.f32.mrb[0].mxu0
        %v4742 = vadd.f32 0.0, %v4741
        %v4743 = vpop.f32.mrb[0].mxu0
        %v4744 = vadd.f32 0.0, %v4743
        %v4745 = vpop.f32.mrb[0].mxu0
        %v4746 = vadd.f32 0.0, %v4745
        %v4747 = vpop.f32.mrb[0].mxu0
        %v4748 = vadd.f32 0.0, %v4747
        %4749 = vmatprep.mubr.bf16.mxu0 %v1930
        %4750 = vmatmul.mubr.bf16.gmra.mrb[0].mxu0 %v1929
        %v4751 = vpop.f32.mrb[0].mxu0
        %v4752 = vadd.f32 0.0, %v4751
        %v4753 = vpop.f32.mrb[0].mxu0
        %v4754 = vadd.f32 0.0, %v4753
        %v4755 = vpop.f32.mrb[0].mxu0
        %v4756 = vadd.f32 0.0, %v4755
        %v4757 = vpop.f32.mrb[0].mxu0
        %v4758 = vadd.f32 0.0, %v4757
        %4759 = vmatprep.mubr.bf16.mxu0 %v1934
        %4760 = vmatmul.mubr.bf16.gmra.mrb[0].mxu0 %v1933
        %v4761 = vpop.f32.mrb[0].mxu0
        %v4762 = vadd.f32 0.0, %v4761
        %v4763 = vpop.f32.mrb[0].mxu0
        %v4764 = vadd.f32 0.0, %v4763
        %v4765 = vpop.f32.mrb[0].mxu0
        %v4766 = vadd.f32 0.0, %v4765
        %v4767 = vpop.f32.mrb[0].mxu0
        %v4768 = vadd.f32 0.0, %v4767
        %4769 = vmatprep.mubr.bf16.mxu0 %v1938
        %4770 = vmatmul.mubr.bf16.gmra.mrb[0].mxu0 %v1937
        %v4771 = vpop.f32.mrb[0].mxu0
        %v4772 = vadd.f32 0.0, %v4771
        %v4773 = vpop.f32.mrb[0].mxu0
        %v4774 = vadd.f32 0.0, %v4773
        %v4775 = vpop.f32.mrb[0].mxu0
        %v4776 = vadd.f32 0.0, %v4775
        %v4777 = vpop.f32.mrb[0].mxu0
        %v4778 = vadd.f32 0.0, %v4777
        %4779 = vmatprep.mubr.bf16.mxu0 %v1942
        %4780 = vmatmul.mubr.bf16.gmra.mrb[0].mxu0 %v1941
        %v4781 = vpop.f32.mrb[0].mxu0
        %v4782 = vadd.f32 0.0, %v4781
        %v4783 = vpop.f32.mrb[0].mxu0
        %v4784 = vadd.f32 0.0, %v4783
        %v4785 = vpop.f32.mrb[0].mxu0
        %v4786 = vadd.f32 0.0, %v4785
        %v4787 = vpop.f32.mrb[0].mxu0
        %v4788 = vadd.f32 0.0, %v4787
        %4789 = vmatprep.mubr.bf16.mxu0 %v1946
        %4790 = vmatmul.mubr.bf16.gmra.mrb[0].mxu0 %v1945
        %v4791 = vpop.f32.mrb[0].mxu0
        %v4792 = vadd.f32 0.0, %v4791
        %v4793 = vpop.f32.mrb[0].mxu0
        %v4794 = vadd.f32 0.0, %v4793
        %v4795 = vpop.f32.mrb[0].mxu0
        %v4796 = vadd.f32 0.0, %v4795
        %v4797 = vpop.f32.mrb[0].mxu0
        %v4798 = vadd.f32 0.0, %v4797
        %4799 = vmatprep.mubr.bf16.mxu0 %v1950
        %4800 = vmatmul.mubr.bf16.gmra.mrb[0].mxu0 %v1949
        %v4801 = vpop.f32.mrb[0].mxu0
        %v4802 = vadd.f32 0.0, %v4801
        %v4803 = vpop.f32.mrb[0].mxu0
        %v4804 = vadd.f32 0.0, %v4803
        %v4805 = vpop.f32.mrb[0].mxu0
        %v4806 = vadd.f32 0.0, %v4805
        %v4807 = vpop.f32.mrb[0].mxu0
        %v4808 = vadd.f32 0.0, %v4807
        %4809 = vmatprep.mubr.bf16.mxu0 %v1954
        %4810 = vmatmul.mubr.bf16.gmra.mrb[0].mxu0 %v1953
        %v4811 = vpop.f32.mrb[0].mxu0
        %v4812 = vadd.f32 0.0, %v4811
        %v4813 = vpop.f32.mrb[0].mxu0
        %v4814 = vadd.f32 0.0, %v4813
        %v4815 = vpop.f32.mrb[0].mxu0
        %v4816 = vadd.f32 0.0, %v4815
        %v4817 = vpop.f32.mrb[0].mxu0
        %v4818 = vadd.f32 0.0, %v4817
        %4819 = vmatprep.mubr.bf16.mxu0 %v1958
        %4820 = vmatmul.mubr.bf16.gmra.mrb[0].mxu0 %v1957
        %v4821 = vpop.f32.mrb[0].mxu0
        %v4822 = vadd.f32 0.0, %v4821
        %v4823 = vpop.f32.mrb[0].mxu0
        %v4824 = vadd.f32 0.0, %v4823
        %v4825 = vpop.f32.mrb[0].mxu0
        %v4826 = vadd.f32 0.0, %v4825
        %v4827 = vpop.f32.mrb[0].mxu0
        %v4828 = vadd.f32 0.0, %v4827
        %4829 = vmatprep.mubr.bf16.mxu0 %v1962
        %4830 = vmatmul.mubr.bf16.gmra.mrb[0].mxu0 %v1961
        %v4831 = vpop.f32.mrb[0].mxu0
        %v4832 = vadd.f32 0.0, %v4831
        %v4833 = vpop.f32.mrb[0].mxu0
        %v4834 = vadd.f32 0.0, %v4833
        %v4835 = vpop.f32.mrb[0].mxu0
        %v4836 = vadd.f32 0.0, %v4835
        %v4837 = vpop.f32.mrb[0].mxu0
        %v4838 = vadd.f32 0.0, %v4837
        %4839 = vmatprep.mubr.bf16.mxu0 %v1966
        %4840 = vmatmul.mubr.bf16.gmra.mrb[0].mxu0 %v1965
        %v4841 = vpop.f32.mrb[0].mxu0
        %v4842 = vadd.f32 0.0, %v4841
        %v4843 = vpop.f32.mrb[0].mxu0
        %v4844 = vadd.f32 0.0, %v4843
        %v4845 = vpop.f32.mrb[0].mxu0
        %v4846 = vadd.f32 0.0, %v4845
        %v4847 = vpop.f32.mrb[0].mxu0
        %v4848 = vadd.f32 0.0, %v4847
        %4849 = vmatprep.mubr.bf16.mxu0 %v1970
        %4850 = vmatmul.mubr.bf16.gmra.mrb[0].mxu0 %v1969
        %v4851 = vpop.f32.mrb[0].mxu0
        %v4852 = vadd.f32 0.0, %v4851
        %v4853 = vpop.f32.mrb[0].mxu0
        %v4854 = vadd.f32 0.0, %v4853
        %v4855 = vpop.f32.mrb[0].mxu0
        %v4856 = vadd.f32 0.0, %v4855
        %v4857 = vpop.f32.mrb[0].mxu0
        %v4858 = vadd.f32 0.0, %v4857
        %4859 = vdwg.mxu0
        %4860 = vmatprep.subr.bf16.mxu0 %v3132
        %4861 = vmatpush1.bf16.msra.mxu0 %v3131
        %4862 = vmatprep.subr.bf16.mxu0 %v3140
        %4863 = vmatpush1.bf16.msra.mxu0 %v3139
        %4864 = vmatprep.subr.bf16.mxu0 %v3148
        %4865 = vmatpush1.bf16.msra.mxu0 %v3147
        %4866 = vmatprep.subr.bf16.mxu0 %v3156
        %4867 = vmatpush1.bf16.msra.mxu0 %v3155
        %4868 = vmatprep.subr.bf16.mxu0 %v3164
        %4869 = vmatpush1.bf16.msra.mxu0 %v3163
        %4870 = vmatprep.subr.bf16.mxu0 %v3172
        %4871 = vmatpush1.bf16.msra.mxu0 %v3171
        %4872 = vmatprep.subr.bf16.mxu0 %v3180
        %4873 = vmatpush1.bf16.msra.mxu0 %v3179
        %4874 = vmatprep.subr.bf16.mxu0 %v3188
        %4875 = vmatpush1.bf16.msra.mxu0 %v3187
        %4876 = vmatprep.subr.bf16.mxu0 %v3196
        %4877 = vmatpush1.bf16.msra.mxu0 %v3195
        %4878 = vmatprep.subr.bf16.mxu0 %v3204
        %4879 = vmatpush1.bf16.msra.mxu0 %v3203
        %4880 = vmatprep.subr.bf16.mxu0 %v3212
        %4881 = vmatpush1.bf16.msra.mxu0 %v3211
        %4882 = vmatprep.subr.bf16.mxu0 %v3220
        %4883 = vmatpush1.bf16.msra.mxu0 %v3219
        %4884 = vmatprep.subr.bf16.mxu0 %v3228
        %4885 = vmatpush1.bf16.msra.mxu0 %v3227
        %4886 = vmatprep.subr.bf16.mxu0 %v3236
        %4887 = vmatpush1.bf16.msra.mxu0 %v3235
        %4888 = vmatprep.subr.bf16.mxu0 %v3244
        %4889 = vmatpush1.bf16.msra.mxu0 %v3243
        %4890 = vmatprep.subr.bf16.mxu0 %v3252
        %4891 = vmatpush1.bf16.msra.mxu0 %v3251
        %4892 = vmatprep.mubr.bf16.mxu0 %v1912
        %4893 = vmatmul.mubr.bf16.gmra.mrb[0].mxu0 %v1911
        %v4894 = vpop.f32.mrb[0].mxu0
        %v4895 = vadd.f32 %v4702, %v4894
        %v4896 = vpop.f32.mrb[0].mxu0
        %v4897 = vadd.f32 %v4704, %v4896
        %v4898 = vpop.f32.mrb[0].mxu0
        %v4899 = vadd.f32 %v4706, %v4898
        %v4900 = vpop.f32.mrb[0].mxu0
        %v4901 = vadd.f32 %v4708, %v4900
        %4902 = vmatprep.mubr.bf16.mxu0 %v1916
        %4903 = vmatmul.mubr.bf16.gmra.mrb[0].mxu0 %v1915
        %v4904 = vpop.f32.mrb[0].mxu0
        %v4905 = vadd.f32 %v4712, %v4904
        %v4906 = vpop.f32.mrb[0].mxu0
        %v4907 = vadd.f32 %v4714, %v4906
        %v4908 = vpop.f32.mrb[0].mxu0
        %v4909 = vadd.f32 %v4716, %v4908
        %v4910 = vpop.f32.mrb[0].mxu0
        %v4911 = vadd.f32 %v4718, %v4910
        %4912 = vmatprep.mubr.bf16.mxu0 %v1920
        %4913 = vmatmul.mubr.bf16.gmra.mrb[0].mxu0 %v1919
        %v4914 = vpop.f32.mrb[0].mxu0
        %v4915 = vadd.f32 %v4722, %v4914
        %v4916 = vpop.f32.mrb[0].mxu0
        %v4917 = vadd.f32 %v4724, %v4916
        %v4918 = vpop.f32.mrb[0].mxu0
        %v4919 = vadd.f32 %v4726, %v4918
        %v4920 = vpop.f32.mrb[0].mxu0
        %v4921 = vadd.f32 %v4728, %v4920
        %4922 = vmatprep.mubr.bf16.mxu0 %v1924
        %4923 = vmatmul.mubr.bf16.gmra.mrb[0].mxu0 %v1923
        %v4924 = vpop.f32.mrb[0].mxu0
        %v4925 = vadd.f32 %v4732, %v4924
        %v4926 = vpop.f32.mrb[0].mxu0
        %v4927 = vadd.f32 %v4734, %v4926
        %v4928 = vpop.f32.mrb[0].mxu0
        %v4929 = vadd.f32 %v4736, %v4928
        %v4930 = vpop.f32.mrb[0].mxu0
        %v4931 = vadd.f32 %v4738, %v4930
        %4932 = vmatprep.mubr.bf16.mxu0 %v1928
        %4933 = vmatmul.mubr.bf16.gmra.mrb[0].mxu0 %v1927
        %v4934 = vpop.f32.mrb[0].mxu0
        %v4935 = vadd.f32 %v4742, %v4934
        %v4936 = vpop.f32.mrb[0].mxu0
        %v4937 = vadd.f32 %v4744, %v4936
        %v4938 = vpop.f32.mrb[0].mxu0
        %v4939 = vadd.f32 %v4746, %v4938
        %v4940 = vpop.f32.mrb[0].mxu0
        %v4941 = vadd.f32 %v4748, %v4940
        %4942 = vmatprep.mubr.bf16.mxu0 %v1932
        %4943 = vmatmul.mubr.bf16.gmra.mrb[0].mxu0 %v1931
        %v4944 = vpop.f32.mrb[0].mxu0
        %v4945 = vadd.f32 %v4752, %v4944
        %v4946 = vpop.f32.mrb[0].mxu0
        %v4947 = vadd.f32 %v4754, %v4946
        %v4948 = vpop.f32.mrb[0].mxu0
        %v4949 = vadd.f32 %v4756, %v4948
        %v4950 = vpop.f32.mrb[0].mxu0
        %v4951 = vadd.f32 %v4758, %v4950
        %4952 = vmatprep.mubr.bf16.mxu0 %v1936
        %4953 = vmatmul.mubr.bf16.gmra.mrb[0].mxu0 %v1935
        %v4954 = vpop.f32.mrb[0].mxu0
        %v4955 = vadd.f32 %v4762, %v4954
        %v4956 = vpop.f32.mrb[0].mxu0
        %v4957 = vadd.f32 %v4764, %v4956
        %v4958 = vpop.f32.mrb[0].mxu0
        %v4959 = vadd.f32 %v4766, %v4958
        %v4960 = vpop.f32.mrb[0].mxu0
        %v4961 = vadd.f32 %v4768, %v4960
        %4962 = vmatprep.mubr.bf16.mxu0 %v1940
        %4963 = vmatmul.mubr.bf16.gmra.mrb[0].mxu0 %v1939
        %v4964 = vpop.f32.mrb[0].mxu0
        %v4965 = vadd.f32 %v4772, %v4964
        %v4966 = vpop.f32.mrb[0].mxu0
        %v4967 = vadd.f32 %v4774, %v4966
        %v4968 = vpop.f32.mrb[0].mxu0
        %v4969 = vadd.f32 %v4776, %v4968
        %v4970 = vpop.f32.mrb[0].mxu0
        %v4971 = vadd.f32 %v4778, %v4970
        %4972 = vmatprep.mubr.bf16.mxu0 %v1944
        %4973 = vmatmul.mubr.bf16.gmra.mrb[0].mxu0 %v1943
        %v4974 = vpop.f32.mrb[0].mxu0
        %v4975 = vadd.f32 %v4782, %v4974
        %v4976 = vpop.f32.mrb[0].mxu0
        %v4977 = vadd.f32 %v4784, %v4976
        %v4978 = vpop.f32.mrb[0].mxu0
        %v4979 = vadd.f32 %v4786, %v4978
        %v4980 = vpop.f32.mrb[0].mxu0
        %v4981 = vadd.f32 %v4788, %v4980
        %4982 = vmatprep.mubr.bf16.mxu0 %v1948
        %4983 = vmatmul.mubr.bf16.gmra.mrb[0].mxu0 %v1947
        %v4984 = vpop.f32.mrb[0].mxu0
        %v4985 = vadd.f32 %v4792, %v4984
        %v4986 = vpop.f32.mrb[0].mxu0
        %v4987 = vadd.f32 %v4794, %v4986
        %v4988 = vpop.f32.mrb[0].mxu0
        %v4989 = vadd.f32 %v4796, %v4988
        %v4990 = vpop.f32.mrb[0].mxu0
        %v4991 = vadd.f32 %v4798, %v4990
        %4992 = vmatprep.mubr.bf16.mxu0 %v1952
        %4993 = vmatmul.mubr.bf16.gmra.mrb[0].mxu0 %v1951
        %v4994 = vpop.f32.mrb[0].mxu0
        %v4995 = vadd.f32 %v4802, %v4994
        %v4996 = vpop.f32.mrb[0].mxu0
        %v4997 = vadd.f32 %v4804, %v4996
        %v4998 = vpop.f32.mrb[0].mxu0
        %v4999 = vadd.f32 %v4806, %v4998
        %v5000 = vpop.f32.mrb[0].mxu0
        %v5001 = vadd.f32 %v4808, %v5000
        %5002 = vmatprep.mubr.bf16.mxu0 %v1956
        %5003 = vmatmul.mubr.bf16.gmra.mrb[0].mxu0 %v1955
        %v5004 = vpop.f32.mrb[0].mxu0
        %v5005 = vadd.f32 %v4812, %v5004
        %v5006 = vpop.f32.mrb[0].mxu0
        %v5007 = vadd.f32 %v4814, %v5006
        %v5008 = vpop.f32.mrb[0].mxu0
        %v5009 = vadd.f32 %v4816, %v5008
        %v5010 = vpop.f32.mrb[0].mxu0
        %v5011 = vadd.f32 %v4818, %v5010
        %5012 = vmatprep.mubr.bf16.mxu0 %v1960
        %5013 = vmatmul.mubr.bf16.gmra.mrb[0].mxu0 %v1959
        %v5014 = vpop.f32.mrb[0].mxu0
        %v5015 = vadd.f32 %v4822, %v5014
        %v5016 = vpop.f32.mrb[0].mxu0
        %v5017 = vadd.f32 %v4824, %v5016
        %v5018 = vpop.f32.mrb[0].mxu0
        %v5019 = vadd.f32 %v4826, %v5018
        %v5020 = vpop.f32.mrb[0].mxu0
        %v5021 = vadd.f32 %v4828, %v5020
        %5022 = vmatprep.mubr.bf16.mxu0 %v1964
        %5023 = vmatmul.mubr.bf16.gmra.mrb[0].mxu0 %v1963
        %v5024 = vpop.f32.mrb[0].mxu0
        %v5025 = vadd.f32 %v4832, %v5024
        %v5026 = vpop.f32.mrb[0].mxu0
        %v5027 = vadd.f32 %v4834, %v5026
        %v5028 = vpop.f32.mrb[0].mxu0
        %v5029 = vadd.f32 %v4836, %v5028
        %v5030 = vpop.f32.mrb[0].mxu0
        %v5031 = vadd.f32 %v4838, %v5030
        %5032 = vmatprep.mubr.bf16.mxu0 %v1968
        %5033 = vmatmul.mubr.bf16.gmra.mrb[0].mxu0 %v1967
        %v5034 = vpop.f32.mrb[0].mxu0
        %v5035 = vadd.f32 %v4842, %v5034
        %v5036 = vpop.f32.mrb[0].mxu0
        %v5037 = vadd.f32 %v4844, %v5036
        %v5038 = vpop.f32.mrb[0].mxu0
        %v5039 = vadd.f32 %v4846, %v5038
        %v5040 = vpop.f32.mrb[0].mxu0
        %v5041 = vadd.f32 %v4848, %v5040
        %5042 = vmatprep.mubr.bf16.mxu0 %v1972
        %5043 = vmatmul.mubr.bf16.gmra.mrb[0].mxu0 %v1971
        %v5044 = vpop.f32.mrb[0].mxu0
        %v5045 = vadd.f32 %v4852, %v5044
        %v5046 = vpop.f32.mrb[0].mxu0
        %v5047 = vadd.f32 %v4854, %v5046
        %v5048 = vpop.f32.mrb[0].mxu0
        %v5049 = vadd.f32 %v4856, %v5048
        %v5050 = vpop.f32.mrb[0].mxu0
        %v5051 = vadd.f32 %v4858, %v5050
        %5052 = vdwg.mxu0
        %5053 = vst [vmem:[%s239] sm:$0xff] %v3737
        %5054 = vst [vmem:[%s239 + $0x8] sm:$0xff] %v3739
        %5055 = vst [vmem:[%s239 + $0x10] sm:$0xff] %v4123
        %5056 = vst [vmem:[%s239 + $0x18] sm:$0xff] %v4125
        %5057 = vst [vmem:[%s239 + $0x20] sm:$0xff] %v4509
        %5058 = vst [vmem:[%s239 + $0x28] sm:$0xff] %v4511
        %5059 = vst [vmem:[%s239 + $0x30] sm:$0xff] %v4895
        %5060 = vst [vmem:[%s239 + $0x38] sm:$0xff] %v4897
        %5061 = vst [vmem:[%s239 + $0x40] sm:$0xff] %v3741
        %5062 = vst [vmem:[%s239 + $0x48] sm:$0xff] %v3743
        %5063 = vst [vmem:[%s239 + $0x50] sm:$0xff] %v4127
        %5064 = vst [vmem:[%s239 + $0x58] sm:$0xff] %v4129
        %5065 = vst [vmem:[%s239 + $0x60] sm:$0xff] %v4513
        %5066 = vst [vmem:[%s239 + $0x68] sm:$0xff] %v4515
        %5067 = vst [vmem:[%s239 + $0x70] sm:$0xff] %v4899
        %5068 = vst [vmem:[%s239 + $0x78] sm:$0xff] %v4901
        %5069 = vst [vmem:[%s239 + $0x80] sm:$0xff] %v3747
        %5070 = vst [vmem:[%s239 + $0x88] sm:$0xff] %v3749
        %5071 = vst [vmem:[%s239 + $0x90] sm:$0xff] %v4133
        %5072 = vst [vmem:[%s239 + $0x98] sm:$0xff] %v4135
        %5073 = vst [vmem:[%s239 + $0xa0] sm:$0xff] %v4519
        %5074 = vst [vmem:[%s239 + $0xa8] sm:$0xff] %v4521
        %5075 = vst [vmem:[%s239 + $0xb0] sm:$0xff] %v4905
        %5076 = vst [vmem:[%s239 + $0xb8] sm:$0xff] %v4907
        %5077 = vst [vmem:[%s239 + $0xc0] sm:$0xff] %v3751
        %5078 = vst [vmem:[%s239 + $0xc8] sm:$0xff] %v3753
        %5079 = vst [vmem:[%s239 + $0xd0] sm:$0xff] %v4137
        %5080 = vst [vmem:[%s239 + $0xd8] sm:$0xff] %v4139
        %5081 = vst [vmem:[%s239 + $0xe0] sm:$0xff] %v4523
        %5082 = vst [vmem:[%s239 + $0xe8] sm:$0xff] %v4525
        %5083 = vst [vmem:[%s239 + $0xf0] sm:$0xff] %v4909
        %5084 = vst [vmem:[%s239 + $0xf8] sm:$0xff] %v4911
        %5085 = vst [vmem:[%s239 + $0x100] sm:$0xff] %v3757
        %5086 = vst [vmem:[%s239 + $0x108] sm:$0xff] %v3759
        %5087 = vst [vmem:[%s239 + $0x110] sm:$0xff] %v4143
        %5088 = vst [vmem:[%s239 + $0x118] sm:$0xff] %v4145
        %5089 = vst [vmem:[%s239 + $0x120] sm:$0xff] %v4529
        %5090 = vst [vmem:[%s239 + $0x128] sm:$0xff] %v4531
        %5091 = vst [vmem:[%s239 + $0x130] sm:$0xff] %v4915
        %5092 = vst [vmem:[%s239 + $0x138] sm:$0xff] %v4917
        %5093 = vst [vmem:[%s239 + $0x140] sm:$0xff] %v3761
        %5094 = vst [vmem:[%s239 + $0x148] sm:$0xff] %v3763
        %5095 = vst [vmem:[%s239 + $0x150] sm:$0xff] %v4147
        %5096 = vst [vmem:[%s239 + $0x158] sm:$0xff] %v4149
        %5097 = vst [vmem:[%s239 + $0x160] sm:$0xff] %v4533
        %5098 = vst [vmem:[%s239 + $0x168] sm:$0xff] %v4535
        %5099 = vst [vmem:[%s239 + $0x170] sm:$0xff] %v4919
        %5100 = vst [vmem:[%s239 + $0x178] sm:$0xff] %v4921
        %5101 = vst [vmem:[%s239 + $0x180] sm:$0xff] %v3767
        %5102 = vst [vmem:[%s239 + $0x188] sm:$0xff] %v3769
        %5103 = vst [vmem:[%s239 + $0x190] sm:$0xff] %v4153
        %5104 = vst [vmem:[%s239 + $0x198] sm:$0xff] %v4155
        %5105 = vst [vmem:[%s239 + $0x1a0] sm:$0xff] %v4539
        %5106 = vst [vmem:[%s239 + $0x1a8] sm:$0xff] %v4541
        %5107 = vst [vmem:[%s239 + $0x1b0] sm:$0xff] %v4925
        %5108 = vst [vmem:[%s239 + $0x1b8] sm:$0xff] %v4927
        %5109 = vst [vmem:[%s239 + $0x1c0] sm:$0xff] %v3771
        %5110 = vst [vmem:[%s239 + $0x1c8] sm:$0xff] %v3773
        %5111 = vst [vmem:[%s239 + $0x1d0] sm:$0xff] %v4157
        %5112 = vst [vmem:[%s239 + $0x1d8] sm:$0xff] %v4159
        %5113 = vst [vmem:[%s239 + $0x1e0] sm:$0xff] %v4543
        %5114 = vst [vmem:[%s239 + $0x1e8] sm:$0xff] %v4545
        %5115 = vst [vmem:[%s239 + $0x1f0] sm:$0xff] %v4929
        %5116 = vst [vmem:[%s239 + $0x1f8] sm:$0xff] %v4931
        %5117 = vst [vmem:[%s239 + $0x200] sm:$0xff] %v3777
        %5118 = vst [vmem:[%s239 + $0x208] sm:$0xff] %v3779
        %5119 = vst [vmem:[%s239 + $0x210] sm:$0xff] %v4163
        %5120 = vst [vmem:[%s239 + $0x218] sm:$0xff] %v4165
        %5121 = vst [vmem:[%s239 + $0x220] sm:$0xff] %v4549
        %5122 = vst [vmem:[%s239 + $0x228] sm:$0xff] %v4551
        %5123 = vst [vmem:[%s239 + $0x230] sm:$0xff] %v4935
        %5124 = vst [vmem:[%s239 + $0x238] sm:$0xff] %v4937
        %5125 = vst [vmem:[%s239 + $0x240] sm:$0xff] %v3781
        %5126 = vst [vmem:[%s239 + $0x248] sm:$0xff] %v3783
        %5127 = vst [vmem:[%s239 + $0x250] sm:$0xff] %v4167
        %5128 = vst [vmem:[%s239 + $0x258] sm:$0xff] %v4169
        %5129 = vst [vmem:[%s239 + $0x260] sm:$0xff] %v4553
        %5130 = vst [vmem:[%s239 + $0x268] sm:$0xff] %v4555
        %5131 = vst [vmem:[%s239 + $0x270] sm:$0xff] %v4939
        %5132 = vst [vmem:[%s239 + $0x278] sm:$0xff] %v4941
        %5133 = vst [vmem:[%s239 + $0x280] sm:$0xff] %v3787
        %5134 = vst [vmem:[%s239 + $0x288] sm:$0xff] %v3789
        %5135 = vst [vmem:[%s239 + $0x290] sm:$0xff] %v4173
        %5136 = vst [vmem:[%s239 + $0x298] sm:$0xff] %v4175
        %5137 = vst [vmem:[%s239 + $0x2a0] sm:$0xff] %v4559
        %5138 = vst [vmem:[%s239 + $0x2a8] sm:$0xff] %v4561
        %5139 = vst [vmem:[%s239 + $0x2b0] sm:$0xff] %v4945
        %5140 = vst [vmem:[%s239 + $0x2b8] sm:$0xff] %v4947
        %5141 = vst [vmem:[%s239 + $0x2c0] sm:$0xff] %v3791
        %5142 = vst [vmem:[%s239 + $0x2c8] sm:$0xff] %v3793
        %5143 = vst [vmem:[%s239 + $0x2d0] sm:$0xff] %v4177
        %5144 = vst [vmem:[%s239 + $0x2d8] sm:$0xff] %v4179
        %5145 = vst [vmem:[%s239 + $0x2e0] sm:$0xff] %v4563
        %5146 = vst [vmem:[%s239 + $0x2e8] sm:$0xff] %v4565
        %5147 = vst [vmem:[%s239 + $0x2f0] sm:$0xff] %v4949
        %5148 = vst [vmem:[%s239 + $0x2f8] sm:$0xff] %v4951
        %5149 = vst [vmem:[%s239 + $0x300] sm:$0xff] %v3797
        %5150 = vst [vmem:[%s239 + $0x308] sm:$0xff] %v3799
        %5151 = vst [vmem:[%s239 + $0x310] sm:$0xff] %v4183
        %5152 = vst [vmem:[%s239 + $0x318] sm:$0xff] %v4185
        %5153 = vst [vmem:[%s239 + $0x320] sm:$0xff] %v4569
        %5154 = vst [vmem:[%s239 + $0x328] sm:$0xff] %v4571
        %5155 = vst [vmem:[%s239 + $0x330] sm:$0xff] %v4955
        %5156 = vst [vmem:[%s239 + $0x338] sm:$0xff] %v4957
        %5157 = vst [vmem:[%s239 + $0x340] sm:$0xff] %v3801
        %5158 = vst [vmem:[%s239 + $0x348] sm:$0xff] %v3803
        %5159 = vst [vmem:[%s239 + $0x350] sm:$0xff] %v4187
        %5160 = vst [vmem:[%s239 + $0x358] sm:$0xff] %v4189
        %5161 = vst [vmem:[%s239 + $0x360] sm:$0xff] %v4573
        %5162 = vst [vmem:[%s239 + $0x368] sm:$0xff] %v4575
        %5163 = vst [vmem:[%s239 + $0x370] sm:$0xff] %v4959
        %5164 = vst [vmem:[%s239 + $0x378] sm:$0xff] %v4961
        %5165 = vst [vmem:[%s239 + $0x380] sm:$0xff] %v3807
        %5166 = vst [vmem:[%s239 + $0x388] sm:$0xff] %v3809
        %5167 = vst [vmem:[%s239 + $0x390] sm:$0xff] %v4193
        %5168 = vst [vmem:[%s239 + $0x398] sm:$0xff] %v4195
        %5169 = vst [vmem:[%s239 + $0x3a0] sm:$0xff] %v4579
        %5170 = vst [vmem:[%s239 + $0x3a8] sm:$0xff] %v4581
        %5171 = vst [vmem:[%s239 + $0x3b0] sm:$0xff] %v4965
        %5172 = vst [vmem:[%s239 + $0x3b8] sm:$0xff] %v4967
        %5173 = vst [vmem:[%s239 + $0x3c0] sm:$0xff] %v3811
        %5174 = vst [vmem:[%s239 + $0x3c8] sm:$0xff] %v3813
        %5175 = vst [vmem:[%s239 + $0x3d0] sm:$0xff] %v4197
        %5176 = vst [vmem:[%s239 + $0x3d8] sm:$0xff] %v4199
        %5177 = vst [vmem:[%s239 + $0x3e0] sm:$0xff] %v4583
        %5178 = vst [vmem:[%s239 + $0x3e8] sm:$0xff] %v4585
        %5179 = vst [vmem:[%s239 + $0x3f0] sm:$0xff] %v4969
        %5180 = vst [vmem:[%s239 + $0x3f8] sm:$0xff] %v4971
        %5181 = vst [vmem:[%s239 + $0x400] sm:$0xff] %v3817
        %5182 = vst [vmem:[%s239 + $0x408] sm:$0xff] %v3819
        %5183 = vst [vmem:[%s239 + $0x410] sm:$0xff] %v4203
        %5184 = vst [vmem:[%s239 + $0x418] sm:$0xff] %v4205
        %5185 = vst [vmem:[%s239 + $0x420] sm:$0xff] %v4589
        %5186 = vst [vmem:[%s239 + $0x428] sm:$0xff] %v4591
        %5187 = vst [vmem:[%s239 + $0x430] sm:$0xff] %v4975
        %5188 = vst [vmem:[%s239 + $0x438] sm:$0xff] %v4977
        %5189 = vst [vmem:[%s239 + $0x440] sm:$0xff] %v3821
        %5190 = vst [vmem:[%s239 + $0x448] sm:$0xff] %v3823
        %5191 = vst [vmem:[%s239 + $0x450] sm:$0xff] %v4207
        %5192 = vst [vmem:[%s239 + $0x458] sm:$0xff] %v4209
        %5193 = vst [vmem:[%s239 + $0x460] sm:$0xff] %v4593
        %5194 = vst [vmem:[%s239 + $0x468] sm:$0xff] %v4595
        %5195 = vst [vmem:[%s239 + $0x470] sm:$0xff] %v4979
        %5196 = vst [vmem:[%s239 + $0x478] sm:$0xff] %v4981
        %5197 = vst [vmem:[%s239 + $0x480] sm:$0xff] %v3827
        %5198 = vst [vmem:[%s239 + $0x488] sm:$0xff] %v3829
        %5199 = vst [vmem:[%s239 + $0x490] sm:$0xff] %v4213
        %5200 = vst [vmem:[%s239 + $0x498] sm:$0xff] %v4215
        %5201 = vst [vmem:[%s239 + $0x4a0] sm:$0xff] %v4599
        %5202 = vst [vmem:[%s239 + $0x4a8] sm:$0xff] %v4601
        %5203 = vst [vmem:[%s239 + $0x4b0] sm:$0xff] %v4985
        %5204 = vst [vmem:[%s239 + $0x4b8] sm:$0xff] %v4987
        %5205 = vst [vmem:[%s239 + $0x4c0] sm:$0xff] %v3831
        %5206 = vst [vmem:[%s239 + $0x4c8] sm:$0xff] %v3833
        %5207 = vst [vmem:[%s239 + $0x4d0] sm:$0xff] %v4217
        %5208 = vst [vmem:[%s239 + $0x4d8] sm:$0xff] %v4219
        %5209 = vst [vmem:[%s239 + $0x4e0] sm:$0xff] %v4603
        %5210 = vst [vmem:[%s239 + $0x4e8] sm:$0xff] %v4605
        %5211 = vst [vmem:[%s239 + $0x4f0] sm:$0xff] %v4989
        %5212 = vst [vmem:[%s239 + $0x4f8] sm:$0xff] %v4991
        %5213 = vst [vmem:[%s239 + $0x500] sm:$0xff] %v3837
        %5214 = vst [vmem:[%s239 + $0x508] sm:$0xff] %v3839
        %5215 = vst [vmem:[%s239 + $0x510] sm:$0xff] %v4223
        %5216 = vst [vmem:[%s239 + $0x518] sm:$0xff] %v4225
        %5217 = vst [vmem:[%s239 + $0x520] sm:$0xff] %v4609
        %5218 = vst [vmem:[%s239 + $0x528] sm:$0xff] %v4611
        %5219 = vst [vmem:[%s239 + $0x530] sm:$0xff] %v4995
        %5220 = vst [vmem:[%s239 + $0x538] sm:$0xff] %v4997
        %5221 = vst [vmem:[%s239 + $0x540] sm:$0xff] %v3841
        %5222 = vst [vmem:[%s239 + $0x548] sm:$0xff] %v3843
        %5223 = vst [vmem:[%s239 + $0x550] sm:$0xff] %v4227
        %5224 = vst [vmem:[%s239 + $0x558] sm:$0xff] %v4229
        %5225 = vst [vmem:[%s239 + $0x560] sm:$0xff] %v4613
        %5226 = vst [vmem:[%s239 + $0x568] sm:$0xff] %v4615
        %5227 = vst [vmem:[%s239 + $0x570] sm:$0xff] %v4999
        %5228 = vst [vmem:[%s239 + $0x578] sm:$0xff] %v5001
        %5229 = vst [vmem:[%s239 + $0x580] sm:$0xff] %v3847
        %5230 = vst [vmem:[%s239 + $0x588] sm:$0xff] %v3849
        %5231 = vst [vmem:[%s239 + $0x590] sm:$0xff] %v4233
        %5232 = vst [vmem:[%s239 + $0x598] sm:$0xff] %v4235
        %5233 = vst [vmem:[%s239 + $0x5a0] sm:$0xff] %v4619
        %5234 = vst [vmem:[%s239 + $0x5a8] sm:$0xff] %v4621
        %5235 = vst [vmem:[%s239 + $0x5b0] sm:$0xff] %v5005
        %5236 = vst [vmem:[%s239 + $0x5b8] sm:$0xff] %v5007
        %5237 = vst [vmem:[%s239 + $0x5c0] sm:$0xff] %v3851
        %5238 = vst [vmem:[%s239 + $0x5c8] sm:$0xff] %v3853
        %5239 = vst [vmem:[%s239 + $0x5d0] sm:$0xff] %v4237
        %5240 = vst [vmem:[%s239 + $0x5d8] sm:$0xff] %v4239
        %5241 = vst [vmem:[%s239 + $0x5e0] sm:$0xff] %v4623
        %5242 = vst [vmem:[%s239 + $0x5e8] sm:$0xff] %v4625
        %5243 = vst [vmem:[%s239 + $0x5f0] sm:$0xff] %v5009
        %5244 = vst [vmem:[%s239 + $0x5f8] sm:$0xff] %v5011
        %5245 = vst [vmem:[%s239 + $0x600] sm:$0xff] %v3857
        %5246 = vst [vmem:[%s239 + $0x608] sm:$0xff] %v3859
        %5247 = vst [vmem:[%s239 + $0x610] sm:$0xff] %v4243
        %5248 = vst [vmem:[%s239 + $0x618] sm:$0xff] %v4245
        %5249 = vst [vmem:[%s239 + $0x620] sm:$0xff] %v4629
        %5250 = vst [vmem:[%s239 + $0x628] sm:$0xff] %v4631
        %5251 = vst [vmem:[%s239 + $0x630] sm:$0xff] %v5015
        %5252 = vst [vmem:[%s239 + $0x638] sm:$0xff] %v5017
        %5253 = vst [vmem:[%s239 + $0x640] sm:$0xff] %v3861
        %5254 = vst [vmem:[%s239 + $0x648] sm:$0xff] %v3863
        %5255 = vst [vmem:[%s239 + $0x650] sm:$0xff] %v4247
        %5256 = vst [vmem:[%s239 + $0x658] sm:$0xff] %v4249
        %5257 = vst [vmem:[%s239 + $0x660] sm:$0xff] %v4633
        %5258 = vst [vmem:[%s239 + $0x668] sm:$0xff] %v4635
        %5259 = vst [vmem:[%s239 + $0x670] sm:$0xff] %v5019
        %5260 = vst [vmem:[%s239 + $0x678] sm:$0xff] %v5021
        %5261 = vst [vmem:[%s239 + $0x680] sm:$0xff] %v3867
        %5262 = vst [vmem:[%s239 + $0x688] sm:$0xff] %v3869
        %5263 = vst [vmem:[%s239 + $0x690] sm:$0xff] %v4253
        %5264 = vst [vmem:[%s239 + $0x698] sm:$0xff] %v4255
        %5265 = vst [vmem:[%s239 + $0x6a0] sm:$0xff] %v4639
        %5266 = vst [vmem:[%s239 + $0x6a8] sm:$0xff] %v4641
        %5267 = vst [vmem:[%s239 + $0x6b0] sm:$0xff] %v5025
        %5268 = vst [vmem:[%s239 + $0x6b8] sm:$0xff] %v5027
        %5269 = vst [vmem:[%s239 + $0x6c0] sm:$0xff] %v3871
        %5270 = vst [vmem:[%s239 + $0x6c8] sm:$0xff] %v3873
        %5271 = vst [vmem:[%s239 + $0x6d0] sm:$0xff] %v4257
        %5272 = vst [vmem:[%s239 + $0x6d8] sm:$0xff] %v4259
        %5273 = vst [vmem:[%s239 + $0x6e0] sm:$0xff] %v4643
        %5274 = vst [vmem:[%s239 + $0x6e8] sm:$0xff] %v4645
        %5275 = vst [vmem:[%s239 + $0x6f0] sm:$0xff] %v5029
        %5276 = vst [vmem:[%s239 + $0x6f8] sm:$0xff] %v5031
        %5277 = vst [vmem:[%s239 + $0x700] sm:$0xff] %v3877
        %5278 = vst [vmem:[%s239 + $0x708] sm:$0xff] %v3879
        %5279 = vst [vmem:[%s239 + $0x710] sm:$0xff] %v4263
        %5280 = vst [vmem:[%s239 + $0x718] sm:$0xff] %v4265
        %5281 = vst [vmem:[%s239 + $0x720] sm:$0xff] %v4649
        %5282 = vst [vmem:[%s239 + $0x728] sm:$0xff] %v4651
        %5283 = vst [vmem:[%s239 + $0x730] sm:$0xff] %v5035
        %5284 = vst [vmem:[%s239 + $0x738] sm:$0xff] %v5037
        %5285 = vst [vmem:[%s239 + $0x740] sm:$0xff] %v3881
        %5286 = vst [vmem:[%s239 + $0x748] sm:$0xff] %v3883
        %5287 = vst [vmem:[%s239 + $0x750] sm:$0xff] %v4267
        %5288 = vst [vmem:[%s239 + $0x758] sm:$0xff] %v4269
        %5289 = vst [vmem:[%s239 + $0x760] sm:$0xff] %v4653
        %5290 = vst [vmem:[%s239 + $0x768] sm:$0xff] %v4655
        %5291 = vst [vmem:[%s239 + $0x770] sm:$0xff] %v5039
        %5292 = vst [vmem:[%s239 + $0x778] sm:$0xff] %v5041
        %5293 = vst [vmem:[%s239 + $0x780] sm:$0xff] %v3887
        %5294 = vst [vmem:[%s239 + $0x788] sm:$0xff] %v3889
        %5295 = vst [vmem:[%s239 + $0x790] sm:$0xff] %v4273
        %5296 = vst [vmem:[%s239 + $0x798] sm:$0xff] %v4275
        %5297 = vst [vmem:[%s239 + $0x7a0] sm:$0xff] %v4659
        %5298 = vst [vmem:[%s239 + $0x7a8] sm:$0xff] %v4661
        %5299 = vst [vmem:[%s239 + $0x7b0] sm:$0xff] %v5045
        %5300 = vst [vmem:[%s239 + $0x7b8] sm:$0xff] %v5047
        %5301 = vst [vmem:[%s239 + $0x7c0] sm:$0xff] %v3891
        %5302 = vst [vmem:[%s239 + $0x7c8] sm:$0xff] %v3893
        %5303 = vst [vmem:[%s239 + $0x7d0] sm:$0xff] %v4277
        %5304 = vst [vmem:[%s239 + $0x7d8] sm:$0xff] %v4279
        %5305 = vst [vmem:[%s239 + $0x7e0] sm:$0xff] %v4663
        %5306 = vst [vmem:[%s239 + $0x7e8] sm:$0xff] %v4665
        %5307 = vst [vmem:[%s239 + $0x7f0] sm:$0xff] %v5049
        %5308 = vst [vmem:[%s239 + $0x7f8] sm:$0xff] %v5051
        %s5309 = smul.u32 32, %s22
        %p5310 = scmp.lt.s32.totalorder %s21, 1
        %s5311 = scalar_select %p5310, %s21, 1
        %p5312 = scmp.lt.s32.totalorder %s5309, 127
        %s5313 = scalar_select %p5312, %s5309, 127
        %s5314 = smul.addr %s5313, 8
        %s5315 = smul.addr %s5311, 1024
        %s5316 = sadd.s32 %s5314, %s5315
        %s5317 = smul.addr %s5316, 8
        %s5318 = scalar_lea.vmem %s3, %s5317
        // Predicated region
        $region37: #{preprocess_forward.1} parent=31 // pred_check
          %p5319 = pneg %p122
        $region38: #{preprocess_forward.1} parent=31 // pred_check_branch
          %5321 = sbr.rel (%p5319) target = $region40
        $region39: #{preprocess_forward.1} parent=31 // pred_region
          %s5322 = smul.u32 32, %s22
        $region40: #{preprocess_forward.1} parent=31 // pred_fallthru
          _
      $region32: #{preprocess_forward.1} parent=5 // pred_fallthru
        _
      %p5323 = scmp.le.s32.totalorder 2, %s12
      // Predicated region
      $region41: #{preprocess_forward.1} parent=5 // pred_check
        %p5324 = pneg %p5323
      $region42: #{preprocess_forward.1} parent=5 // pred_check_branch
        %5326 = sbr.rel (%p5324) target = $region44
      $region43: #{preprocess_forward.1} parent=5 // pred_region
        %s5327 = ssub.s32 %s12, 2
        // Predicated region
        $region45: #{preprocess_forward.1} parent=43 // pred_check
          %p5328 = pneg %p128
        $region46: #{preprocess_forward.1} parent=43 // pred_check_branch
          %5330 = sbr.rel (%p5328) target = $region48
        $region47: #{preprocess_forward.1} parent=43 // pred_region
          %s5331 = smul.u32 32, %s24
          %p5332 = scmp.lt.s32.totalorder %s23, 1
          %s5333 = scalar_select %p5332, %s23, 1
          %p5334 = scmp.lt.s32.totalorder %s5331, 127
          %s5335 = scalar_select %p5334, %s5331, 127
          %s5336 = smul.addr %s5335, 8
          %s5337 = smul.addr %s5333, 1024
          %s5338 = sadd.s32 %s5336, %s5337
          %s5339 = smul.addr %s5338, 8
          %s5340 = scalar_lea.vmem %s3, %s5339
        $region48: #{preprocess_forward.1} parent=43 // pred_fallthru
          _
      $region44: #{preprocess_forward.1} parent=5 // pred_fallthru
        _
    $region6: #{preprocess_forward.1} parent=1 // loop_footer
      %s16 = sadd.s32 1, %s12
    $region7: #{preprocess_forward.1} parent=1 // loop_footer_branch
      %11 = sbr.rel target = $region3
    $region8: #{preprocess_forward.1} parent=1 // loop_exit
      _
    %5341 = vsyncpa [#allocation4], 1
    %s5342 = scalar_lea.sflag [#allocation4], 1
    %5343 = vsyncpa %s5342, 1

</llo_original>
